<compile_context>
chip_gen: v7x
topology: tpu7x:2x2x1
jax: 0.10.0
libtpu: 0.0.40
codegen_flags: <defaults>
</compile_context>

<pallas_src>
import functools

import jax
import jax.numpy as jnp
from jax import lax
from jax.experimental import pallas as pl
from jax.experimental.pallas import tpu as pltpu

INPUT_DIM = 3 * 64 * 64   # 12288
HIDDEN = 5
OUT = 6
LANE = 128                # lane width for the padded output


def mlp_kernel(x_ref, w1_ref, b1_ref, w2_ref, b2_ref, out_ref):
    """Fused forward for one batch tile: relu(x @ W1.T + b1) @ W2 + b2."""
    # W1 is (H, D): contract x's lane dim with W1's lane dim (trans_b form),
    # so the big operand stays dense in VMEM (no 5 -> 128 lane padding).
    h = lax.dot_general(
        x_ref[...], w1_ref[...],
        dimension_numbers=(((1,), (1,)), ((), ())),
        preferred_element_type=jnp.float32)                      # (tb, H)
    h = jnp.maximum(h + b1_ref[...], 0.0)
    out = jnp.dot(h, w2_ref[...], preferred_element_type=jnp.float32)  # (tb, O_pad)
    out_ref[...] = (out + b2_ref[...]).astype(out_ref.dtype)


@functools.lru_cache(maxsize=None)
def _vmem_budget():
    """(vmem_limit_bytes, max_batch_tile_rows) tuned per TPU generation."""
    try:
        cap = int(getattr(pltpu.get_tpu_info(), "vmem_capacity_bytes", 64 << 20))
    except Exception:
        cap = 64 << 20  # conservative: v7x per-TC VMEM
    if cap >= (100 << 20):          # v5e / v6e: 128 MiB physical VMEM
        return 96 << 20, 512
    return 48 << 20, 256            # v7x: 64 MiB physical, leave headroom


def _pick_batch_tile(batch, cap_rows):
    """Largest multiple-of-8 divisor of `batch` that is <= min(batch//2, cap_rows)
    (=> at least 2 grid steps so both v7x TensorCores get work).  Falls back to
    the whole batch (one grid step, always a legal full-extent block)."""
    best = None
    top = min(batch // 2, cap_rows)
    d = 8
    while d <= top:
        if batch % d == 0:
            best = d
        d += 8
    return best if best is not None else batch


@jax.jit
def mlp_forward(x, w1, b1, w2, b2):
    B, D = x.shape
    H = w1.shape[0]
    O = w2.shape[1]

    vmem_limit, cap_rows = _vmem_budget()
    tb = _pick_batch_tile(B, cap_rows)
    grid = (B // tb,)

    # Lane-dense output: zero-pad the tiny N dim (6 -> 128) so the final store
    # is an unmasked full-lane vst; extra columns compute to exactly 0.
    o_pad = ((O + LANE - 1) // LANE) * LANE
    if o_pad != O:
        w2 = jnp.pad(w2, ((0, 0), (0, o_pad - O)))
        b2 = jnp.pad(b2, ((0, 0), (0, o_pad - O)))

    cost = pl.CostEstimate(
        flops=2 * B * D * H + 2 * B * H * o_pad,
        transcendentals=0,
        bytes_accessed=(B * D + H * D + H + H * o_pad + o_pad + B * o_pad) * 4,
    )

    out = pl.pallas_call(
        mlp_kernel,
        out_shape=jax.ShapeDtypeStruct((B, o_pad), jnp.float32),
        grid_spec=pltpu.PrefetchScalarGridSpec(
            num_scalar_prefetch=0,
            grid=grid,
            in_specs=[
                pl.BlockSpec((tb, D), lambda i: (i, 0)),     # x: one batch tile, streamed
                pl.BlockSpec((H, D), lambda i: (0, 0)),      # W1 (H, D): dense, ~384 KiB resident
                pl.BlockSpec((1, H), lambda i: (0, 0)),      # b1 resident
                pl.BlockSpec((H, o_pad), lambda i: (0, 0)),  # W2 (padded) resident
                pl.BlockSpec((1, o_pad), lambda i: (0, 0)),  # b2 (padded) resident
            ],
            out_specs=pl.BlockSpec((tb, o_pad), lambda i: (i, 0)),
        ),
        compiler_params=pltpu.CompilerParams(
            dimension_semantics=("parallel",),   # batch tiles shard across v7x's 2 TCs
            vmem_limit_bytes=vmem_limit,
        ),
        cost_estimate=cost,
    )(x, w1, b1, w2, b2)

    return out[:, :O]


def init_params(key, input_dim=INPUT_DIM, hidden=HIDDEN, out=OUT):
    """Deterministic init mimicking torch.nn.Linear (uniform +-1/sqrt(fan_in)),
    in the kernel-friendly layouts documented above."""
    k1, k2, k3, k4 = jax.random.split(key, 4)
    lim1 = 1.0 / jnp.sqrt(jnp.float32(input_dim))
    lim2 = 1.0 / jnp.sqrt(jnp.float32(hidden))
    w1 = jax.random.uniform(k1, (hidden, input_dim), jnp.float32, -lim1, lim1)  # == torch weight (out,in)
    b1 = jax.random.uniform(k2, (1, hidden), jnp.float32, -lim1, lim1)
    w2 = jax.random.uniform(k3, (hidden, out), jnp.float32, -lim2, lim2)        # == torch weight.T
    b2 = jax.random.uniform(k4, (1, out), jnp.float32, -lim2, lim2)
    return w1, b1, w2, b2


if __name__ == "__main__":
    key = jax.random.PRNGKey(0)
    k_params, k_x = jax.random.split(key)

    # B=16 -> two 8-row batch tiles, exercising the multi-step "parallel" grid.
    B = 16
    x = jax.random.normal(k_x, (B, INPUT_DIM), dtype=jnp.float32)
    w1, b1, w2, b2 = init_params(k_params)

    out = jax.block_until_ready(mlp_forward(x, w1, b1, w2, b2))

    # Pure-JAX reference of the same math (torch forward semantics).
    ref = jnp.maximum(x @ w1.T + b1, 0.0) @ w2 + b2
    assert out.shape == (B, OUT)
    assert jnp.allclose(out, ref, atol=1e-3, rtol=1e-3), "mismatch vs reference"

    print("KERNEL_OK")
</pallas_src>

<mosaic_0001>
module attributes {stable_mosaic.version = 11 : i64} {
  func.func @mlp_kernel(%arg0: i32, %arg1: memref<8x12288xf32, #tpu.memory_space<vmem>>, %arg2: memref<5x12288xf32, #tpu.memory_space<vmem>>, %arg3: memref<1x5xf32, #tpu.memory_space<vmem>>, %arg4: memref<5x128xf32, #tpu.memory_space<vmem>>, %arg5: memref<1x128xf32, #tpu.memory_space<vmem>>, %arg6: memref<8x128xf32, #tpu.memory_space<vmem>>) attributes {dimension_semantics = [#tpu.dimension_semantics<parallel>], iteration_bounds = array<i64: 2>, scalar_prefetch = 0 : i64, scratch_operands = 0 : i64, tpu.core_type = #tpu.core_type<tc>, window_params = [{transform_indices = @transform_0, window_bounds = array<i64: 8, 12288>}, {pipeline_mode = #tpu.pipeline_mode<synchronous>, transform_indices = @transform_1, window_bounds = array<i64: 5, 12288>}, {pipeline_mode = #tpu.pipeline_mode<synchronous>, transform_indices = @transform_2, window_bounds = array<i64: 1, 5>}, {pipeline_mode = #tpu.pipeline_mode<synchronous>, transform_indices = @transform_3, window_bounds = array<i64: 5, 128>}, {pipeline_mode = #tpu.pipeline_mode<synchronous>, transform_indices = @transform_4, window_bounds = array<i64: 1, 128>}, {transform_indices = @transform_5, window_bounds = array<i64: 8, 128>}]} {
    %c0 = arith.constant 0 : index
    %c0_0 = arith.constant 0 : index
    %0 = vector.load %arg1[%c0, %c0_0] : memref<8x12288xf32, #tpu.memory_space<vmem>>, vector<8x12288xf32>
    %c0_1 = arith.constant 0 : index
    %c0_2 = arith.constant 0 : index
    %1 = vector.load %arg2[%c0_1, %c0_2] : memref<5x12288xf32, #tpu.memory_space<vmem>>, vector<5x12288xf32>
    %cst = arith.constant dense<0.000000e+00> : vector<8x5xf32>
    %2 = tpu.matmul %0, %1, %cst {dimension_numbers = #tpu.dot_dimension_numbers<[1], [1], [0], [0], [0, 0, 1, 0], [], []>} : vector<8x12288xf32>, vector<5x12288xf32>, vector<8x5xf32> -> vector<8x5xf32>
    %c0_3 = arith.constant 0 : index
    %c0_4 = arith.constant 0 : index
    %3 = vector.load %arg3[%c0_3, %c0_4] : memref<1x5xf32, #tpu.memory_space<vmem>>, vector<1x5xf32>
    %4 = vector.broadcast %3 : vector<1x5xf32> to vector<8x5xf32>
    %5 = arith.addf %2, %4 : vector<8x5xf32>
    %cst_5 = arith.constant 0.000000e+00 : f32
    %6 = vector.broadcast %cst_5 : f32 to vector<8x5xf32>
    %7 = arith.maximumf %5, %6 : vector<8x5xf32>
    %c0_6 = arith.constant 0 : index
    %c0_7 = arith.constant 0 : index
    %8 = vector.load %arg4[%c0_6, %c0_7] : memref<5x128xf32, #tpu.memory_space<vmem>>, vector<5x128xf32>
    %cst_8 = arith.constant dense<0.000000e+00> : vector<8x128xf32>
    %9 = tpu.matmul %7, %8, %cst_8 {dimension_numbers = #tpu.dot_dimension_numbers<[1], [0], [0], [1], [0, 0, 1, 1], [], []>} : vector<8x5xf32>, vector<5x128xf32>, vector<8x128xf32> -> vector<8x128xf32>
    %c0_9 = arith.constant 0 : index
    %c0_10 = arith.constant 0 : index
    %10 = vector.load %arg5[%c0_9, %c0_10] : memref<1x128xf32, #tpu.memory_space<vmem>>, vector<1x128xf32>
    %11 = vector.broadcast %10 : vector<1x128xf32> to vector<8x128xf32>
    %12 = arith.addf %9, %11 : vector<8x128xf32>
    %c0_11 = arith.constant 0 : index
    %c0_12 = arith.constant 0 : index
    %13 = vector.load %arg6[%c0_11, %c0_12] : memref<8x128xf32, #tpu.memory_space<vmem>>, vector<8x128xf32>
    tpu.vector_store %arg6[%c0_11, %c0_12], %12 {strides = array<i32>} : memref<8x128xf32, #tpu.memory_space<vmem>>, vector<8x128xf32>,
    return
  }
  func.func @transform_0(%arg0: i32) -> (i32, i32) {
    %c0_i32 = arith.constant 0 : i32
    %c0_i32_0 = arith.constant 0 : i32
    return %arg0, %c0_i32 : i32, i32
  }
  func.func @transform_1(%arg0: i32) -> (i32, i32) {
    %c0_i32 = arith.constant 0 : i32
    %c0_i32_0 = arith.constant 0 : i32
    %c0_i32_1 = arith.constant 0 : i32
    return %c0_i32, %c0_i32_0 : i32, i32
  }
  func.func @transform_2(%arg0: i32) -> (i32, i32) {
    %c0_i32 = arith.constant 0 : i32
    %c0_i32_0 = arith.constant 0 : i32
    %c0_i32_1 = arith.constant 0 : i32
    return %c0_i32, %c0_i32_0 : i32, i32
  }
  func.func @transform_3(%arg0: i32) -> (i32, i32) {
    %c0_i32 = arith.constant 0 : i32
    %c0_i32_0 = arith.constant 0 : i32
    %c0_i32_1 = arith.constant 0 : i32
    return %c0_i32, %c0_i32_0 : i32, i32
  }
  func.func @transform_4(%arg0: i32) -> (i32, i32) {
    %c0_i32 = arith.constant 0 : i32
    %c0_i32_0 = arith.constant 0 : i32
    %c0_i32_1 = arith.constant 0 : i32
    return %c0_i32, %c0_i32_0 : i32, i32
  }
  func.func @transform_5(%arg0: i32) -> (i32, i32) {
    %c0_i32 = arith.constant 0 : i32
    %c0_i32_0 = arith.constant 0 : i32
    return %arg0, %c0_i32 : i32, i32
  }
}

</mosaic_0001>

<llo_original>
// kernel: mlp_forward.1
$region0: #{mlp_forward.1}
  #allocation0 [shape = 'u32[]', space=smem, size = 0x4, offset = 0x4, fixed_abs, tag = 'smem constant byte address 0x4 - core index']
  #allocation1 [shape = 'u32[144,128]{1,0:T(1,128)}', space=vmem, size = 0x12000, scoped, tag = 'internal scratch']
  %s0 = inlined_call_operand.hbm [shape: f32[16,12288], index: 0, kind: input, shape index: {}]
  %s1 = inlined_call_operand.hbm [shape: f32[5,12288], index: 1, kind: input, shape index: {}]
  %s2 = inlined_call_operand.vmem [shape: f32[1,5], index: 2, kind: input, shape index: {}]
  %s3 = inlined_call_operand.vmem [shape: f32[5,128], index: 3, kind: input, shape index: {}]
  %s4 = inlined_call_operand.vmem [shape: f32[1,128], index: 4, kind: input, shape index: {}]
  %s5 = inlined_call_operand.vmem [shape: f32[16,128], index: 5, kind: output, shape index: {}]
  %s6 = sld [smem:[#allocation0]]
  $region61: #{mlp_forward.1} parent=0
    _
  %s8 = ssub.s32 1, %s6
  %s9 = scalar_select 0, %s8, %s6
  $region1: #{mlp_forward.1} parent=0
    #allocation2 [shape = 'u8[786432]{0}', space=vmem, size = 0xc0000, scoped, tag = 'input window, operand 0']
    #allocation3 [shape = 's32[2]{0}', space=sflag, size = 0x8, scoped, tag = 'scoped memory for mlp_forward.1']
    #allocation4 [shape = 'u8[393216]{0}', space=vmem, size = 0x60000, scoped, tag = 'input window, operand 1, single buffered']
    #allocation5 [shape = 's32[1]{0}', space=sflag, size = 0x4, scoped, tag = 'scoped memory for mlp_forward.1']
    %10 = vsyncpa [#allocation3], 0
    %s11 = scalar_lea.sflag [#allocation3], 1
    %12 = vsyncpa %s11, 0
    %13 = vsyncpa [#allocation5], 0
    loop: start=0, step=1, limit=4
    $region2: #{mlp_forward.1} parent=1 // loop_pre_header
      _
    $region3: #{mlp_forward.1} parent=1 // loop_header
      %s15 = sphi 0, %s19
      %p16 = scmp.ge.s32.totalorder %s15, 4
      %s25 = sphi 0, %s27
      %s28 = sphi 0, %s25
      %s29 = sphi 0, %s28
      %s45 = sphi 0, %s29
      %s49 = sphi 0, %s49
      %s51 = sphi 0, %s49
      %s52 = sphi 0, %s51
      %s66 = sphi 0, %s52
      %s70 = sphi 0, %s70
      %s72 = sphi 0, %s70
      %s73 = sphi 0, %s72
      %s87 = sphi 0, %s73
      %s91 = sphi 0, %s91
      %s93 = sphi 0, %s91
      %s94 = sphi 0, %s93
      %s108 = sphi 0, %s94
      %s112 = sphi 0, %s112
      %s114 = sphi 0, %s112
      %s115 = sphi 0, %s114
      %s129 = sphi 0, %s115
      %s135 = sphi 0, %s137
      %s138 = sphi 0, %s135
      %s139 = sphi 0, %s138
      %s155 = sphi 0, %s139
    $region4: #{mlp_forward.1} parent=1 // loop_header_branch
      %18 = sbr.rel (%p16) target = $region8
    $region5: #{mlp_forward.1} parent=1 // loop_body
      %s20 = ssub.s32 %s15, 1
      %s21 = ssub.s32 %s15, 2
      %s22 = sadd.s32 %s15, 1
      %s23 = ssub.s32 %s15, %s22
      %p24 = scmp.eq.s32.totalorder %s23, 0
      %s26 = sadd.s32 %s25, 1
      %s27 = scalar_select %p24, %s25, %s26
      %p30 = pneg %p24
      %p31 = scmp.eq.s32.totalorder %s15, 1
      %p32 = por %p30, %p31
      %p33 = scmp.ne.s32.totalorder %s25, %s28
      %p34 = scmp.eq.s32.totalorder %s15, 0
      %p35 = por %p33, %p34
      %p36 = scmp.ne.s32.totalorder %s25, %s28
      %p37 = scmp.eq.s32.totalorder %s20, 1
      %p38 = por %p36, %p37
      %p39 = scmp.ne.s32.totalorder %s28, %s29
      %p40 = scmp.eq.s32.totalorder %s20, 0
      %p41 = por %p39, %p40
      %p42 = scmp.ne.s32.totalorder %s28, %s29
      %p43 = scmp.eq.s32.totalorder %s21, 1
      %p44 = por %p42, %p43
      %p46 = scmp.ne.s32.totalorder %s29, %s45
      %p47 = scmp.eq.s32.totalorder %s21, 0
      %p48 = por %p46, %p47
      %s50 = sadd.s32 %s49, 1
      %p53 = scmp.eq.s32.totalorder %s15, 1
      %p54 = scmp.ne.s32.totalorder %s49, %s51
      %p55 = scmp.eq.s32.totalorder %s15, 0
      %p56 = por %p54, %p55
      %p57 = scmp.ne.s32.totalorder %s49, %s51
      %p58 = scmp.eq.s32.totalorder %s20, 1
      %p59 = por %p57, %p58
      %p60 = scmp.ne.s32.totalorder %s51, %s52
      %p61 = scmp.eq.s32.totalorder %s20, 0
      %p62 = por %p60, %p61
      %p63 = scmp.ne.s32.totalorder %s51, %s52
      %p64 = scmp.eq.s32.totalorder %s21, 1
      %p65 = por %p63, %p64
      %p67 = scmp.ne.s32.totalorder %s52, %s66
      %p68 = scmp.eq.s32.totalorder %s21, 0
      %p69 = por %p67, %p68
      %s71 = sadd.s32 %s70, 1
      %p74 = scmp.eq.s32.totalorder %s15, 1
      %p75 = scmp.ne.s32.totalorder %s70, %s72
      %p76 = scmp.eq.s32.totalorder %s15, 0
      %p77 = por %p75, %p76
      %p78 = scmp.ne.s32.totalorder %s70, %s72
      %p79 = scmp.eq.s32.totalorder %s20, 1
      %p80 = por %p78, %p79
      %p81 = scmp.ne.s32.totalorder %s72, %s73
      %p82 = scmp.eq.s32.totalorder %s20, 0
      %p83 = por %p81, %p82
      %p84 = scmp.ne.s32.totalorder %s72, %s73
      %p85 = scmp.eq.s32.totalorder %s21, 1
      %p86 = por %p84, %p85
      %p88 = scmp.ne.s32.totalorder %s73, %s87
      %p89 = scmp.eq.s32.totalorder %s21, 0
      %p90 = por %p88, %p89
      %s92 = sadd.s32 %s91, 1
      %p95 = scmp.eq.s32.totalorder %s15, 1
      %p96 = scmp.ne.s32.totalorder %s91, %s93
      %p97 = scmp.eq.s32.totalorder %s15, 0
      %p98 = por %p96, %p97
      %p99 = scmp.ne.s32.totalorder %s91, %s93
      %p100 = scmp.eq.s32.totalorder %s20, 1
      %p101 = por %p99, %p100
      %p102 = scmp.ne.s32.totalorder %s93, %s94
      %p103 = scmp.eq.s32.totalorder %s20, 0
      %p104 = por %p102, %p103
      %p105 = scmp.ne.s32.totalorder %s93, %s94
      %p106 = scmp.eq.s32.totalorder %s21, 1
      %p107 = por %p105, %p106
      %p109 = scmp.ne.s32.totalorder %s94, %s108
      %p110 = scmp.eq.s32.totalorder %s21, 0
      %p111 = por %p109, %p110
      %s113 = sadd.s32 %s112, 1
      %p116 = scmp.eq.s32.totalorder %s15, 1
      %p117 = scmp.ne.s32.totalorder %s112, %s114
      %p118 = scmp.eq.s32.totalorder %s15, 0
      %p119 = por %p117, %p118
      %p120 = scmp.ne.s32.totalorder %s112, %s114
      %p121 = scmp.eq.s32.totalorder %s20, 1
      %p122 = por %p120, %p121
      %p123 = scmp.ne.s32.totalorder %s114, %s115
      %p124 = scmp.eq.s32.totalorder %s20, 0
      %p125 = por %p123, %p124
      %p126 = scmp.ne.s32.totalorder %s114, %s115
      %p127 = scmp.eq.s32.totalorder %s21, 1
      %p128 = por %p126, %p127
      %p130 = scmp.ne.s32.totalorder %s115, %s129
      %p131 = scmp.eq.s32.totalorder %s21, 0
      %p132 = por %p130, %p131
      %s133 = ssub.s32 %s15, %s22
      %p134 = scmp.eq.s32.totalorder %s133, 0
      %s136 = sadd.s32 %s135, 1
      %s137 = scalar_select %p134, %s135, %s136
      %p140 = pneg %p134
      %p141 = scmp.eq.s32.totalorder %s15, 1
      %p142 = por %p140, %p141
      %p143 = scmp.ne.s32.totalorder %s135, %s138
      %p144 = scmp.eq.s32.totalorder %s15, 0
      %p145 = por %p143, %p144
      %p146 = scmp.ne.s32.totalorder %s135, %s138
      %p147 = scmp.eq.s32.totalorder %s20, 1
      %p148 = por %p146, %p147
      %p149 = scmp.ne.s32.totalorder %s138, %s139
      %p150 = scmp.eq.s32.totalorder %s20, 0
      %p151 = por %p149, %p150
      %p152 = scmp.ne.s32.totalorder %s138, %s139
      %p153 = scmp.eq.s32.totalorder %s21, 1
      %p154 = por %p152, %p153
      %p156 = scmp.ne.s32.totalorder %s139, %s155
      %p157 = scmp.eq.s32.totalorder %s21, 0
      %p158 = por %p156, %p157
      %p159 = scmp.le.s32.totalorder 1, %s15
      %p160 = scmp.lt.s32.totalorder %s15, 3
      %p161 = pnand %p159, %p160
      %p162 = pneg %p161
      // Predicated region
      $region9: #{mlp_forward.1} parent=5 // pred_check
        _
      $region10: #{mlp_forward.1} parent=5 // pred_check_branch
        %164 = sbr.rel (%p161) target = $region12
      $region11: #{mlp_forward.1} parent=5 // pred_region
        %s165 = ssub.s32 %s15, 1
        // Predicated region
        $region13: #{mlp_forward.1} parent=11 // pred_check
          %p166 = pneg %p62
        $region14: #{mlp_forward.1} parent=11 // pred_check_branch
          %168 = sbr.rel (%p166) target = $region16
        $region15: #{mlp_forward.1} parent=11 // pred_region
          %s170 = ssub.s32 12288, 12288
          %171 = vsyncadd [#allocation5], %s170
          %s173 = sshll.u32 [#allocation4], 4
          %s174 = int_to_ptr.vmem [resolvable:$true] %s173
          %176 = dma.hbm_to_vmem [thread:$0]  %s1, 12288, %s174, [#allocation5]
        $region16: #{mlp_forward.1} parent=11 // pred_fallthru
          _
        // Predicated region
        $region17: #{mlp_forward.1} parent=11 // pred_check
          %p177 = pneg %p83
        $region18: #{mlp_forward.1} parent=11 // pred_check_branch
          %179 = sbr.rel (%p177) target = $region20
        $region19: #{mlp_forward.1} parent=11 // pred_region
          _
        $region20: #{mlp_forward.1} parent=11 // pred_fallthru
          _
        // Predicated region
        $region21: #{mlp_forward.1} parent=11 // pred_check
          %p180 = pneg %p104
        $region22: #{mlp_forward.1} parent=11 // pred_check_branch
          %182 = sbr.rel (%p180) target = $region24
        $region23: #{mlp_forward.1} parent=11 // pred_region
          _
        $region24: #{mlp_forward.1} parent=11 // pred_fallthru
          _
        // Predicated region
        $region25: #{mlp_forward.1} parent=11 // pred_check
          %p183 = pneg %p125
        $region26: #{mlp_forward.1} parent=11 // pred_check_branch
          %185 = sbr.rel (%p183) target = $region28
        $region27: #{mlp_forward.1} parent=11 // pred_region
          _
        $region28: #{mlp_forward.1} parent=11 // pred_fallthru
          _
      $region12: #{mlp_forward.1} parent=5 // pred_fallthru
        _
      %p186 = scmp.lt.s32.totalorder %s15, 2
      // Predicated region
      $region29: #{mlp_forward.1} parent=5 // pred_check
        %p187 = pneg %p186
      $region30: #{mlp_forward.1} parent=5 // pred_check_branch
        %189 = sbr.rel (%p187) target = $region32
      $region31: #{mlp_forward.1} parent=5 // pred_region
        // Predicated region
        $region33: #{mlp_forward.1} parent=31 // pred_check
          %p190 = pneg %p35
        $region34: #{mlp_forward.1} parent=31 // pred_check_branch
          %192 = sbr.rel (%p190) target = $region36
        $region35: #{mlp_forward.1} parent=31 // pred_region
          %s193 = sand.u32 %s25, 1
          %s194 = scalar_lea.sflag [#allocation3], %s193
          %s195 = sand.u32 %s25, 1
          %s196 = smul.addr %s195, 768
          %s197 = scalar_lea.vmem [#allocation2], %s196
          %s199 = ssub.s32 12288, 12288
          %200 = vsyncadd %s194, %s199
          %s201 = smul.addr %s15, 96
          %s202 = smul.addr %s201, 128
          %s203 = scalar_lea.hbm %s0, %s202
          %s205 = sshll.u32 %s197, 4
          %s206 = int_to_ptr.vmem [resolvable:$true] %s205
          %208 = dma.hbm_to_vmem [thread:$0]  %s203, 12288, %s206, %s194
        $region36: #{mlp_forward.1} parent=31 // pred_fallthru
          _
      $region32: #{mlp_forward.1} parent=5 // pred_fallthru
        _
      %p209 = scmp.le.s32.totalorder 1, %s15
      %p210 = scmp.lt.s32.totalorder %s15, 3
      %p211 = pnand %p209, %p210
      %p212 = pneg %p211
      // Predicated region
      $region37: #{mlp_forward.1} parent=5 // pred_check
        _
      $region38: #{mlp_forward.1} parent=5 // pred_check_branch
        %214 = sbr.rel (%p211) target = $region40
      $region39: #{mlp_forward.1} parent=5 // pred_region
        %s215 = ssub.s32 %s15, 1
        %s216 = sand.u32 %s28, 1
        %s217 = scalar_lea.sflag [#allocation3], %s216
        %s218 = sand.u32 %s28, 1
        %s219 = smul.addr %s218, 768
        %s220 = scalar_lea.vmem [#allocation2], %s219
        // Predicated region
        $region41: #{mlp_forward.1} parent=39 // pred_check
          %p221 = pneg %p41
        $region42: #{mlp_forward.1} parent=39 // pred_check_branch
          %223 = sbr.rel (%p221) target = $region44
        $region43: #{mlp_forward.1} parent=39 // pred_region
          %224 = dma.done %s217, 12288
        $region44: #{mlp_forward.1} parent=39 // pred_fallthru
          _
        // Predicated region
        $region45: #{mlp_forward.1} parent=39 // pred_check
          %p225 = pneg %p62
        $region46: #{mlp_forward.1} parent=39 // pred_check_branch
          %227 = sbr.rel (%p225) target = $region48
        $region47: #{mlp_forward.1} parent=39 // pred_region
          %228 = dma.done [#allocation5], 12288
        $region48: #{mlp_forward.1} parent=39 // pred_fallthru
          _
        %s229 = sand.u32 %s28, 1
        %s230 = scalar_lea.sflag [#allocation3], %s229
        %s231 = sand.u32 %s28, 1
        %s232 = smul.addr %s231, 768
        %s233 = scalar_lea.vmem [#allocation2], %s232
        %p234 = pneg %p41
        %p235 = pneg %p38
        %p236 = pneg %p62
        %p237 = pneg %p59
        %p238 = pneg %p83
        %p239 = pneg %p80
        %p240 = pneg %p104
        %p241 = pneg %p101
        %p242 = pneg %p125
        %p243 = pneg %p122
        %p244 = pneg %p151
        %p245 = pneg %p148
        %p246 = scmp.lt.s32.totalorder %s20, 1
        %s247 = scalar_select %p246, %s20, 1
        %s248 = smul.addr %s247, 8
        %s249 = scalar_lea.vmem %s5, %s248
        %p250 = scmp.lt.s32.totalorder %s20, 1
        %s251 = scalar_select %p250, %s20, 1
        %s252 = smul.addr %s251, 8
        %s253 = scalar_lea.vmem %s5, %s252
        %v254 = vld [vmem:[%s220] sm:$0xff]
        %v255 = vld [vmem:[%s220 + $0x8] sm:$0xff]
        %v256 = vld [vmem:[%s220 + $0x10] sm:$0xff]
        %v257 = vld [vmem:[%s220 + $0x18] sm:$0xff]
        %v258 = vld [vmem:[%s220 + $0x20] sm:$0xff]
        %v259 = vld [vmem:[%s220 + $0x28] sm:$0xff]
        %v260 = vld [vmem:[%s220 + $0x30] sm:$0xff]
        %v261 = vld [vmem:[%s220 + $0x38] sm:$0xff]
        %v262 = vld [vmem:[%s220 + $0x40] sm:$0xff]
        %v263 = vld [vmem:[%s220 + $0x48] sm:$0xff]
        %v264 = vld [vmem:[%s220 + $0x50] sm:$0xff]
        %v265 = vld [vmem:[%s220 + $0x58] sm:$0xff]
        %v266 = vld [vmem:[%s220 + $0x60] sm:$0xff]
        %v267 = vld [vmem:[%s220 + $0x68] sm:$0xff]
        %v268 = vld [vmem:[%s220 + $0x70] sm:$0xff]
        %v269 = vld [vmem:[%s220 + $0x78] sm:$0xff]
        %v270 = vld [vmem:[%s220 + $0x80] sm:$0xff]
        %v271 = vld [vmem:[%s220 + $0x88] sm:$0xff]
        %v272 = vld [vmem:[%s220 + $0x90] sm:$0xff]
        %v273 = vld [vmem:[%s220 + $0x98] sm:$0xff]
        %v274 = vld [vmem:[%s220 + $0xa0] sm:$0xff]
        %v275 = vld [vmem:[%s220 + $0xa8] sm:$0xff]
        %v276 = vld [vmem:[%s220 + $0xb0] sm:$0xff]
        %v277 = vld [vmem:[%s220 + $0xb8] sm:$0xff]
        %v278 = vld [vmem:[%s220 + $0xc0] sm:$0xff]
        %v279 = vld [vmem:[%s220 + $0xc8] sm:$0xff]
        %v280 = vld [vmem:[%s220 + $0xd0] sm:$0xff]
        %v281 = vld [vmem:[%s220 + $0xd8] sm:$0xff]
        %v282 = vld [vmem:[%s220 + $0xe0] sm:$0xff]
        %v283 = vld [vmem:[%s220 + $0xe8] sm:$0xff]
        %v284 = vld [vmem:[%s220 + $0xf0] sm:$0xff]
        %v285 = vld [vmem:[%s220 + $0xf8] sm:$0xff]
        %v286 = vld [vmem:[%s220 + $0x100] sm:$0xff]
        %v287 = vld [vmem:[%s220 + $0x108] sm:$0xff]
        %v288 = vld [vmem:[%s220 + $0x110] sm:$0xff]
        %v289 = vld [vmem:[%s220 + $0x118] sm:$0xff]
        %v290 = vld [vmem:[%s220 + $0x120] sm:$0xff]
        %v291 = vld [vmem:[%s220 + $0x128] sm:$0xff]
        %v292 = vld [vmem:[%s220 + $0x130] sm:$0xff]
        %v293 = vld [vmem:[%s220 + $0x138] sm:$0xff]
        %v294 = vld [vmem:[%s220 + $0x140] sm:$0xff]
        %v295 = vld [vmem:[%s220 + $0x148] sm:$0xff]
        %v296 = vld [vmem:[%s220 + $0x150] sm:$0xff]
        %v297 = vld [vmem:[%s220 + $0x158] sm:$0xff]
        %v298 = vld [vmem:[%s220 + $0x160] sm:$0xff]
        %v299 = vld [vmem:[%s220 + $0x168] sm:$0xff]
        %v300 = vld [vmem:[%s220 + $0x170] sm:$0xff]
        %v301 = vld [vmem:[%s220 + $0x178] sm:$0xff]
        %v302 = vld [vmem:[%s220 + $0x180] sm:$0xff]
        %v303 = vld [vmem:[%s220 + $0x188] sm:$0xff]
        %v304 = vld [vmem:[%s220 + $0x190] sm:$0xff]
        %v305 = vld [vmem:[%s220 + $0x198] sm:$0xff]
        %v306 = vld [vmem:[%s220 + $0x1a0] sm:$0xff]
        %v307 = vld [vmem:[%s220 + $0x1a8] sm:$0xff]
        %v308 = vld [vmem:[%s220 + $0x1b0] sm:$0xff]
        %v309 = vld [vmem:[%s220 + $0x1b8] sm:$0xff]
        %v310 = vld [vmem:[%s220 + $0x1c0] sm:$0xff]
        %v311 = vld [vmem:[%s220 + $0x1c8] sm:$0xff]
        %v312 = vld [vmem:[%s220 + $0x1d0] sm:$0xff]
        %v313 = vld [vmem:[%s220 + $0x1d8] sm:$0xff]
        %v314 = vld [vmem:[%s220 + $0x1e0] sm:$0xff]
        %v315 = vld [vmem:[%s220 + $0x1e8] sm:$0xff]
        %v316 = vld [vmem:[%s220 + $0x1f0] sm:$0xff]
        %v317 = vld [vmem:[%s220 + $0x1f8] sm:$0xff]
        %v318 = vld [vmem:[%s220 + $0x200] sm:$0xff]
        %v319 = vld [vmem:[%s220 + $0x208] sm:$0xff]
        %v320 = vld [vmem:[%s220 + $0x210] sm:$0xff]
        %v321 = vld [vmem:[%s220 + $0x218] sm:$0xff]
        %v322 = vld [vmem:[%s220 + $0x220] sm:$0xff]
        %v323 = vld [vmem:[%s220 + $0x228] sm:$0xff]
        %v324 = vld [vmem:[%s220 + $0x230] sm:$0xff]
        %v325 = vld [vmem:[%s220 + $0x238] sm:$0xff]
        %v326 = vld [vmem:[%s220 + $0x240] sm:$0xff]
        %v327 = vld [vmem:[%s220 + $0x248] sm:$0xff]
        %v328 = vld [vmem:[%s220 + $0x250] sm:$0xff]
        %v329 = vld [vmem:[%s220 + $0x258] sm:$0xff]
        %v330 = vld [vmem:[%s220 + $0x260] sm:$0xff]
        %v331 = vld [vmem:[%s220 + $0x268] sm:$0xff]
        %v332 = vld [vmem:[%s220 + $0x270] sm:$0xff]
        %v333 = vld [vmem:[%s220 + $0x278] sm:$0xff]
        %v334 = vld [vmem:[%s220 + $0x280] sm:$0xff]
        %v335 = vld [vmem:[%s220 + $0x288] sm:$0xff]
        %v336 = vld [vmem:[%s220 + $0x290] sm:$0xff]
        %v337 = vld [vmem:[%s220 + $0x298] sm:$0xff]
        %v338 = vld [vmem:[%s220 + $0x2a0] sm:$0xff]
        %v339 = vld [vmem:[%s220 + $0x2a8] sm:$0xff]
        %v340 = vld [vmem:[%s220 + $0x2b0] sm:$0xff]
        %v341 = vld [vmem:[%s220 + $0x2b8] sm:$0xff]
        %v342 = vld [vmem:[%s220 + $0x2c0] sm:$0xff]
        %v343 = vld [vmem:[%s220 + $0x2c8] sm:$0xff]
        %v344 = vld [vmem:[%s220 + $0x2d0] sm:$0xff]
        %v345 = vld [vmem:[%s220 + $0x2d8] sm:$0xff]
        %v346 = vld [vmem:[%s220 + $0x2e0] sm:$0xff]
        %v347 = vld [vmem:[%s220 + $0x2e8] sm:$0xff]
        %v348 = vld [vmem:[%s220 + $0x2f0] sm:$0xff]
        %v349 = vld [vmem:[%s220 + $0x2f8] sm:$0xff]
        %v350 = vld [vmem:[#allocation4] sm:$0x1f]
        %v351 = vld [vmem:[#allocation4 + $0x8] sm:$0x1f]
        %v352 = vld [vmem:[#allocation4 + $0x10] sm:$0x1f]
        %v353 = vld [vmem:[#allocation4 + $0x18] sm:$0x1f]
        %v354 = vld [vmem:[#allocation4 + $0x20] sm:$0x1f]
        %v355 = vld [vmem:[#allocation4 + $0x28] sm:$0x1f]
        %v356 = vld [vmem:[#allocation4 + $0x30] sm:$0x1f]
        %v357 = vld [vmem:[#allocation4 + $0x38] sm:$0x1f]
        %v358 = vld [vmem:[#allocation4 + $0x40] sm:$0x1f]
        %v359 = vld [vmem:[#allocation4 + $0x48] sm:$0x1f]
        %v360 = vld [vmem:[#allocation4 + $0x50] sm:$0x1f]
        %v361 = vld [vmem:[#allocation4 + $0x58] sm:$0x1f]
        %v362 = vld [vmem:[#allocation4 + $0x60] sm:$0x1f]
        %v363 = vld [vmem:[#allocation4 + $0x68] sm:$0x1f]
        %v364 = vld [vmem:[#allocation4 + $0x70] sm:$0x1f]
        %v365 = vld [vmem:[#allocation4 + $0x78] sm:$0x1f]
        %v366 = vld [vmem:[#allocation4 + $0x80] sm:$0x1f]
        %v367 = vld [vmem:[#allocation4 + $0x88] sm:$0x1f]
        %v368 = vld [vmem:[#allocation4 + $0x90] sm:$0x1f]
        %v369 = vld [vmem:[#allocation4 + $0x98] sm:$0x1f]
        %v370 = vld [vmem:[#allocation4 + $0xa0] sm:$0x1f]
        %v371 = vld [vmem:[#allocation4 + $0xa8] sm:$0x1f]
        %v372 = vld [vmem:[#allocation4 + $0xb0] sm:$0x1f]
        %v373 = vld [vmem:[#allocation4 + $0xb8] sm:$0x1f]
        %v374 = vld [vmem:[#allocation4 + $0xc0] sm:$0x1f]
        %v375 = vld [vmem:[#allocation4 + $0xc8] sm:$0x1f]
        %v376 = vld [vmem:[#allocation4 + $0xd0] sm:$0x1f]
        %v377 = vld [vmem:[#allocation4 + $0xd8] sm:$0x1f]
        %v378 = vld [vmem:[#allocation4 + $0xe0] sm:$0x1f]
        %v379 = vld [vmem:[#allocation4 + $0xe8] sm:$0x1f]
        %v380 = vld [vmem:[#allocation4 + $0xf0] sm:$0x1f]
        %v381 = vld [vmem:[#allocation4 + $0xf8] sm:$0x1f]
        %v382 = vld [vmem:[#allocation4 + $0x100] sm:$0x1f]
        %v383 = vld [vmem:[#allocation4 + $0x108] sm:$0x1f]
        %v384 = vld [vmem:[#allocation4 + $0x110] sm:$0x1f]
        %v385 = vld [vmem:[#allocation4 + $0x118] sm:$0x1f]
        %v386 = vld [vmem:[#allocation4 + $0x120] sm:$0x1f]
        %v387 = vld [vmem:[#allocation4 + $0x128] sm:$0x1f]
        %v388 = vld [vmem:[#allocation4 + $0x130] sm:$0x1f]
        %v389 = vld [vmem:[#allocation4 + $0x138] sm:$0x1f]
        %v390 = vld [vmem:[#allocation4 + $0x140] sm:$0x1f]
        %v391 = vld [vmem:[#allocation4 + $0x148] sm:$0x1f]
        %v392 = vld [vmem:[#allocation4 + $0x150] sm:$0x1f]
        %v393 = vld [vmem:[#allocation4 + $0x158] sm:$0x1f]
        %v394 = vld [vmem:[#allocation4 + $0x160] sm:$0x1f]
        %v395 = vld [vmem:[#allocation4 + $0x168] sm:$0x1f]
        %v396 = vld [vmem:[#allocation4 + $0x170] sm:$0x1f]
        %v397 = vld [vmem:[#allocation4 + $0x178] sm:$0x1f]
        %v398 = vld [vmem:[#allocation4 + $0x180] sm:$0x1f]
        %v399 = vld [vmem:[#allocation4 + $0x188] sm:$0x1f]
        %v400 = vld [vmem:[#allocation4 + $0x190] sm:$0x1f]
        %v401 = vld [vmem:[#allocation4 + $0x198] sm:$0x1f]
        %v402 = vld [vmem:[#allocation4 + $0x1a0] sm:$0x1f]
        %v403 = vld [vmem:[#allocation4 + $0x1a8] sm:$0x1f]
        %v404 = vld [vmem:[#allocation4 + $0x1b0] sm:$0x1f]
        %v405 = vld [vmem:[#allocation4 + $0x1b8] sm:$0x1f]
        %v406 = vld [vmem:[#allocation4 + $0x1c0] sm:$0x1f]
        %v407 = vld [vmem:[#allocation4 + $0x1c8] sm:$0x1f]
        %v408 = vld [vmem:[#allocation4 + $0x1d0] sm:$0x1f]
        %v409 = vld [vmem:[#allocation4 + $0x1d8] sm:$0x1f]
        %v410 = vld [vmem:[#allocation4 + $0x1e0] sm:$0x1f]
        %v411 = vld [vmem:[#allocation4 + $0x1e8] sm:$0x1f]
        %v412 = vld [vmem:[#allocation4 + $0x1f0] sm:$0x1f]
        %v413 = vld [vmem:[#allocation4 + $0x1f8] sm:$0x1f]
        %v414 = vld [vmem:[#allocation4 + $0x200] sm:$0x1f]
        %v415 = vld [vmem:[#allocation4 + $0x208] sm:$0x1f]
        %v416 = vld [vmem:[#allocation4 + $0x210] sm:$0x1f]
        %v417 = vld [vmem:[#allocation4 + $0x218] sm:$0x1f]
        %v418 = vld [vmem:[#allocation4 + $0x220] sm:$0x1f]
        %v419 = vld [vmem:[#allocation4 + $0x228] sm:$0x1f]
        %v420 = vld [vmem:[#allocation4 + $0x230] sm:$0x1f]
        %v421 = vld [vmem:[#allocation4 + $0x238] sm:$0x1f]
        %v422 = vld [vmem:[#allocation4 + $0x240] sm:$0x1f]
        %v423 = vld [vmem:[#allocation4 + $0x248] sm:$0x1f]
        %v424 = vld [vmem:[#allocation4 + $0x250] sm:$0x1f]
        %v425 = vld [vmem:[#allocation4 + $0x258] sm:$0x1f]
        %v426 = vld [vmem:[#allocation4 + $0x260] sm:$0x1f]
        %v427 = vld [vmem:[#allocation4 + $0x268] sm:$0x1f]
        %v428 = vld [vmem:[#allocation4 + $0x270] sm:$0x1f]
        %v429 = vld [vmem:[#allocation4 + $0x278] sm:$0x1f]
        %v430 = vld [vmem:[#allocation4 + $0x280] sm:$0x1f]
        %v431 = vld [vmem:[#allocation4 + $0x288] sm:$0x1f]
        %v432 = vld [vmem:[#allocation4 + $0x290] sm:$0x1f]
        %v433 = vld [vmem:[#allocation4 + $0x298] sm:$0x1f]
        %v434 = vld [vmem:[#allocation4 + $0x2a0] sm:$0x1f]
        %v435 = vld [vmem:[#allocation4 + $0x2a8] sm:$0x1f]
        %v436 = vld [vmem:[#allocation4 + $0x2b0] sm:$0x1f]
        %v437 = vld [vmem:[#allocation4 + $0x2b8] sm:$0x1f]
        %v438 = vld [vmem:[#allocation4 + $0x2c0] sm:$0x1f]
        %v439 = vld [vmem:[#allocation4 + $0x2c8] sm:$0x1f]
        %v440 = vld [vmem:[#allocation4 + $0x2d0] sm:$0x1f]
        %v441 = vld [vmem:[#allocation4 + $0x2d8] sm:$0x1f]
        %v442 = vld [vmem:[#allocation4 + $0x2e0] sm:$0x1f]
        %v443 = vld [vmem:[#allocation4 + $0x2e8] sm:$0x1f]
        %v444 = vld [vmem:[#allocation4 + $0x2f0] sm:$0x1f]
        %v445 = vld [vmem:[#allocation4 + $0x2f8] sm:$0x1f]
        %v446 = vld [vmem:[%s2] sm:$0x1]
        %v448 = vlaneseq
        %v449 = vshrl.u32 %v448, 7
        %v450 = vsub.s32 0, %v449
        %v451 = vrot.slane %v446, %v450
        %453 = vmatprep.subr.mxu0 %v351
        %454 = vmatpush1.xpose.msra.mxu0 %v350
        %455 = vmatprep.subr.mxu0 0.0
        %456 = vmatpush1.xpose.msra.mxu0 0.0
        %457 = vmatprep.subr.mxu0 0.0
        %458 = vmatpush1.xpose.msra.mxu0 0.0
        %459 = vmatprep.subr.mxu0 0.0
        %460 = vmatpush1.xpose.msra.mxu0 0.0
        %461 = vmatprep.subr.mxu0 0.0
        %462 = vmatpush1.xpose.msra.mxu0 0.0
        %463 = vmatprep.subr.mxu0 0.0
        %464 = vmatpush1.xpose.msra.mxu0 0.0
        %465 = vmatprep.subr.mxu0 0.0
        %466 = vmatpush1.xpose.msra.mxu0 0.0
        %467 = vmatprep.subr.mxu0 0.0
        %468 = vmatpush1.xpose.msra.mxu0 0.0
        %469 = vmatprep.subr.mxu0 0.0
        %470 = vmatpush1.xpose.msra.mxu0 0.0
        %471 = vmatprep.subr.mxu0 0.0
        %472 = vmatpush1.xpose.msra.mxu0 0.0
        %473 = vmatprep.subr.mxu0 0.0
        %474 = vmatpush1.xpose.msra.mxu0 0.0
        %475 = vmatprep.subr.mxu0 0.0
        %476 = vmatpush1.xpose.msra.mxu0 0.0
        %477 = vmatprep.subr.mxu0 0.0
        %478 = vmatpush1.xpose.msra.mxu0 0.0
        %479 = vmatprep.subr.mxu0 0.0
        %480 = vmatpush1.xpose.msra.mxu0 0.0
        %481 = vmatprep.subr.mxu0 0.0
        %482 = vmatpush1.xpose.msra.mxu0 0.0
        %483 = vmatprep.subr.mxu0 0.0
        %484 = vmatpush1.xpose.msra.mxu0 0.0
        %485 = vmatprep.subr.mxu0 0.0
        %486 = vmatpush1.xpose.msra.mxu0 0.0
        %487 = vmatprep.subr.mxu0 0.0
        %488 = vmatpush1.xpose.msra.mxu0 0.0
        %489 = vmatprep.subr.mxu0 0.0
        %490 = vmatpush1.xpose.msra.mxu0 0.0
        %491 = vmatprep.subr.mxu0 0.0
        %492 = vmatpush1.xpose.msra.mxu0 0.0
        %493 = vmatprep.subr.mxu0 0.0
        %494 = vmatpush1.xpose.msra.mxu0 0.0
        %495 = vmatprep.subr.mxu0 0.0
        %496 = vmatpush1.xpose.msra.mxu0 0.0
        %497 = vmatprep.subr.mxu0 0.0
        %498 = vmatpush1.xpose.msra.mxu0 0.0
        %499 = vmatprep.subr.mxu0 0.0
        %500 = vmatpush1.xpose.msra.mxu0 0.0
        %501 = vmatprep.subr.mxu0 0.0
        %502 = vmatpush1.xpose.msra.mxu0 0.0
        %503 = vmatprep.subr.mxu0 0.0
        %504 = vmatpush1.xpose.msra.mxu0 0.0
        %505 = vmatprep.subr.mxu0 0.0
        %506 = vmatpush1.xpose.msra.mxu0 0.0
        %507 = vmatprep.subr.mxu0 0.0
        %508 = vmatpush1.xpose.msra.mxu0 0.0
        %509 = vmatprep.subr.mxu0 0.0
        %510 = vmatpush1.xpose.msra.mxu0 0.0
        %511 = vmatprep.subr.mxu0 0.0
        %512 = vmatpush1.xpose.msra.mxu0 0.0
        %513 = vmatprep.subr.mxu0 0.0
        %514 = vmatpush1.xpose.msra.mxu0 0.0
        %515 = vmatprep.subr.mxu0 0.0
        %516 = vmatpush1.xpose.msra.mxu0 0.0
        %517 = vmatprep.mubr.f32.mxu0 %v255
        %518 = vmatmul.mubr.f32.gmra.mrb[0].mxu0 %v254
        %v519 = vpop.f32.mrb[0].mxu0
        %v520 = vadd.f32 %v451, %v519
        %v521 = vpop.f32.mrb[0].mxu0
        %522 = vdwg.mxu0
        %523 = vmatprep.subr.mxu0 %v353
        %524 = vmatpush1.xpose.msra.mxu0 %v352
        %525 = vmatprep.subr.mxu0 0.0
        %526 = vmatpush1.xpose.msra.mxu0 0.0
        %527 = vmatprep.subr.mxu0 0.0
        %528 = vmatpush1.xpose.msra.mxu0 0.0
        %529 = vmatprep.subr.mxu0 0.0
        %530 = vmatpush1.xpose.msra.mxu0 0.0
        %531 = vmatprep.subr.mxu0 0.0
        %532 = vmatpush1.xpose.msra.mxu0 0.0
        %533 = vmatprep.subr.mxu0 0.0
        %534 = vmatpush1.xpose.msra.mxu0 0.0
        %535 = vmatprep.subr.mxu0 0.0
        %536 = vmatpush1.xpose.msra.mxu0 0.0
        %537 = vmatprep.subr.mxu0 0.0
        %538 = vmatpush1.xpose.msra.mxu0 0.0
        %539 = vmatprep.subr.mxu0 0.0
        %540 = vmatpush1.xpose.msra.mxu0 0.0
        %541 = vmatprep.subr.mxu0 0.0
        %542 = vmatpush1.xpose.msra.mxu0 0.0
        %543 = vmatprep.subr.mxu0 0.0
        %544 = vmatpush1.xpose.msra.mxu0 0.0
        %545 = vmatprep.subr.mxu0 0.0
        %546 = vmatpush1.xpose.msra.mxu0 0.0
        %547 = vmatprep.subr.mxu0 0.0
        %548 = vmatpush1.xpose.msra.mxu0 0.0
        %549 = vmatprep.subr.mxu0 0.0
        %550 = vmatpush1.xpose.msra.mxu0 0.0
        %551 = vmatprep.subr.mxu0 0.0
        %552 = vmatpush1.xpose.msra.mxu0 0.0
        %553 = vmatprep.subr.mxu0 0.0
        %554 = vmatpush1.xpose.msra.mxu0 0.0
        %555 = vmatprep.subr.mxu0 0.0
        %556 = vmatpush1.xpose.msra.mxu0 0.0
        %557 = vmatprep.subr.mxu0 0.0
        %558 = vmatpush1.xpose.msra.mxu0 0.0
        %559 = vmatprep.subr.mxu0 0.0
        %560 = vmatpush1.xpose.msra.mxu0 0.0
        %561 = vmatprep.subr.mxu0 0.0
        %562 = vmatpush1.xpose.msra.mxu0 0.0
        %563 = vmatprep.subr.mxu0 0.0
        %564 = vmatpush1.xpose.msra.mxu0 0.0
        %565 = vmatprep.subr.mxu0 0.0
        %566 = vmatpush1.xpose.msra.mxu0 0.0
        %567 = vmatprep.subr.mxu0 0.0
        %568 = vmatpush1.xpose.msra.mxu0 0.0
        %569 = vmatprep.subr.mxu0 0.0
        %570 = vmatpush1.xpose.msra.mxu0 0.0
        %571 = vmatprep.subr.mxu0 0.0
        %572 = vmatpush1.xpose.msra.mxu0 0.0
        %573 = vmatprep.subr.mxu0 0.0
        %574 = vmatpush1.xpose.msra.mxu0 0.0
        %575 = vmatprep.subr.mxu0 0.0
        %576 = vmatpush1.xpose.msra.mxu0 0.0
        %577 = vmatprep.subr.mxu0 0.0
        %578 = vmatpush1.xpose.msra.mxu0 0.0
        %579 = vmatprep.subr.mxu0 0.0
        %580 = vmatpush1.xpose.msra.mxu0 0.0
        %581 = vmatprep.subr.mxu0 0.0
        %582 = vmatpush1.xpose.msra.mxu0 0.0
        %583 = vmatprep.subr.mxu0 0.0
        %584 = vmatpush1.xpose.msra.mxu0 0.0
        %585 = vmatprep.subr.mxu0 0.0
        %586 = vmatpush1.xpose.msra.mxu0 0.0
        %587 = vmatprep.mubr.f32.mxu0 %v257
        %588 = vmatmul.mubr.f32.gmra.mrb[0].mxu0 %v256
        %v589 = vpop.f32.mrb[0].mxu0
        %v590 = vadd.f32 %v520, %v589
        %v591 = vpop.f32.mrb[0].mxu0
        %592 = vdwg.mxu0
        %593 = vmatprep.subr.mxu0 %v355
        %594 = vmatpush1.xpose.msra.mxu0 %v354
        %595 = vmatprep.subr.mxu0 0.0
        %596 = vmatpush1.xpose.msra.mxu0 0.0
        %597 = vmatprep.subr.mxu0 0.0
        %598 = vmatpush1.xpose.msra.mxu0 0.0
        %599 = vmatprep.subr.mxu0 0.0
        %600 = vmatpush1.xpose.msra.mxu0 0.0
        %601 = vmatprep.subr.mxu0 0.0
        %602 = vmatpush1.xpose.msra.mxu0 0.0
        %603 = vmatprep.subr.mxu0 0.0
        %604 = vmatpush1.xpose.msra.mxu0 0.0
        %605 = vmatprep.subr.mxu0 0.0
        %606 = vmatpush1.xpose.msra.mxu0 0.0
        %607 = vmatprep.subr.mxu0 0.0
        %608 = vmatpush1.xpose.msra.mxu0 0.0
        %609 = vmatprep.subr.mxu0 0.0
        %610 = vmatpush1.xpose.msra.mxu0 0.0
        %611 = vmatprep.subr.mxu0 0.0
        %612 = vmatpush1.xpose.msra.mxu0 0.0
        %613 = vmatprep.subr.mxu0 0.0
        %614 = vmatpush1.xpose.msra.mxu0 0.0
        %615 = vmatprep.subr.mxu0 0.0
        %616 = vmatpush1.xpose.msra.mxu0 0.0
        %617 = vmatprep.subr.mxu0 0.0
        %618 = vmatpush1.xpose.msra.mxu0 0.0
        %619 = vmatprep.subr.mxu0 0.0
        %620 = vmatpush1.xpose.msra.mxu0 0.0
        %621 = vmatprep.subr.mxu0 0.0
        %622 = vmatpush1.xpose.msra.mxu0 0.0
        %623 = vmatprep.subr.mxu0 0.0
        %624 = vmatpush1.xpose.msra.mxu0 0.0
        %625 = vmatprep.subr.mxu0 0.0
        %626 = vmatpush1.xpose.msra.mxu0 0.0
        %627 = vmatprep.subr.mxu0 0.0
        %628 = vmatpush1.xpose.msra.mxu0 0.0
        %629 = vmatprep.subr.mxu0 0.0
        %630 = vmatpush1.xpose.msra.mxu0 0.0
        %631 = vmatprep.subr.mxu0 0.0
        %632 = vmatpush1.xpose.msra.mxu0 0.0
        %633 = vmatprep.subr.mxu0 0.0
        %634 = vmatpush1.xpose.msra.mxu0 0.0
        %635 = vmatprep.subr.mxu0 0.0
        %636 = vmatpush1.xpose.msra.mxu0 0.0
        %637 = vmatprep.subr.mxu0 0.0
        %638 = vmatpush1.xpose.msra.mxu0 0.0
        %639 = vmatprep.subr.mxu0 0.0
        %640 = vmatpush1.xpose.msra.mxu0 0.0
        %641 = vmatprep.subr.mxu0 0.0
        %642 = vmatpush1.xpose.msra.mxu0 0.0
        %643 = vmatprep.subr.mxu0 0.0
        %644 = vmatpush1.xpose.msra.mxu0 0.0
        %645 = vmatprep.subr.mxu0 0.0
        %646 = vmatpush1.xpose.msra.mxu0 0.0
        %647 = vmatprep.subr.mxu0 0.0
        %648 = vmatpush1.xpose.msra.mxu0 0.0
        %649 = vmatprep.subr.mxu0 0.0
        %650 = vmatpush1.xpose.msra.mxu0 0.0
        %651 = vmatprep.subr.mxu0 0.0
        %652 = vmatpush1.xpose.msra.mxu0 0.0
        %653 = vmatprep.subr.mxu0 0.0
        %654 = vmatpush1.xpose.msra.mxu0 0.0
        %655 = vmatprep.subr.mxu0 0.0
        %656 = vmatpush1.xpose.msra.mxu0 0.0
        %657 = vmatprep.mubr.f32.mxu0 %v259
        %658 = vmatmul.mubr.f32.gmra.mrb[0].mxu0 %v258
        %v659 = vpop.f32.mrb[0].mxu0
        %v660 = vadd.f32 %v590, %v659
        %v661 = vpop.f32.mrb[0].mxu0
        %662 = vdwg.mxu0
        %663 = vmatprep.subr.mxu0 %v357
        %664 = vmatpush1.xpose.msra.mxu0 %v356
        %665 = vmatprep.subr.mxu0 0.0
        %666 = vmatpush1.xpose.msra.mxu0 0.0
        %667 = vmatprep.subr.mxu0 0.0
        %668 = vmatpush1.xpose.msra.mxu0 0.0
        %669 = vmatprep.subr.mxu0 0.0
        %670 = vmatpush1.xpose.msra.mxu0 0.0
        %671 = vmatprep.subr.mxu0 0.0
        %672 = vmatpush1.xpose.msra.mxu0 0.0
        %673 = vmatprep.subr.mxu0 0.0
        %674 = vmatpush1.xpose.msra.mxu0 0.0
        %675 = vmatprep.subr.mxu0 0.0
        %676 = vmatpush1.xpose.msra.mxu0 0.0
        %677 = vmatprep.subr.mxu0 0.0
        %678 = vmatpush1.xpose.msra.mxu0 0.0
        %679 = vmatprep.subr.mxu0 0.0
        %680 = vmatpush1.xpose.msra.mxu0 0.0
        %681 = vmatprep.subr.mxu0 0.0
        %682 = vmatpush1.xpose.msra.mxu0 0.0
        %683 = vmatprep.subr.mxu0 0.0
        %684 = vmatpush1.xpose.msra.mxu0 0.0
        %685 = vmatprep.subr.mxu0 0.0
        %686 = vmatpush1.xpose.msra.mxu0 0.0
        %687 = vmatprep.subr.mxu0 0.0
        %688 = vmatpush1.xpose.msra.mxu0 0.0
        %689 = vmatprep.subr.mxu0 0.0
        %690 = vmatpush1.xpose.msra.mxu0 0.0
        %691 = vmatprep.subr.mxu0 0.0
        %692 = vmatpush1.xpose.msra.mxu0 0.0
        %693 = vmatprep.subr.mxu0 0.0
        %694 = vmatpush1.xpose.msra.mxu0 0.0
        %695 = vmatprep.subr.mxu0 0.0
        %696 = vmatpush1.xpose.msra.mxu0 0.0
        %697 = vmatprep.subr.mxu0 0.0
        %698 = vmatpush1.xpose.msra.mxu0 0.0
        %699 = vmatprep.subr.mxu0 0.0
        %700 = vmatpush1.xpose.msra.mxu0 0.0
        %701 = vmatprep.subr.mxu0 0.0
        %702 = vmatpush1.xpose.msra.mxu0 0.0
        %703 = vmatprep.subr.mxu0 0.0
        %704 = vmatpush1.xpose.msra.mxu0 0.0
        %705 = vmatprep.subr.mxu0 0.0
        %706 = vmatpush1.xpose.msra.mxu0 0.0
        %707 = vmatprep.subr.mxu0 0.0
        %708 = vmatpush1.xpose.msra.mxu0 0.0
        %709 = vmatprep.subr.mxu0 0.0
        %710 = vmatpush1.xpose.msra.mxu0 0.0
        %711 = vmatprep.subr.mxu0 0.0
        %712 = vmatpush1.xpose.msra.mxu0 0.0
        %713 = vmatprep.subr.mxu0 0.0
        %714 = vmatpush1.xpose.msra.mxu0 0.0
        %715 = vmatprep.subr.mxu0 0.0
        %716 = vmatpush1.xpose.msra.mxu0 0.0
        %717 = vmatprep.subr.mxu0 0.0
        %718 = vmatpush1.xpose.msra.mxu0 0.0
        %719 = vmatprep.subr.mxu0 0.0
        %720 = vmatpush1.xpose.msra.mxu0 0.0
        %721 = vmatprep.subr.mxu0 0.0
        %722 = vmatpush1.xpose.msra.mxu0 0.0
        %723 = vmatprep.subr.mxu0 0.0
        %724 = vmatpush1.xpose.msra.mxu0 0.0
        %725 = vmatprep.subr.mxu0 0.0
        %726 = vmatpush1.xpose.msra.mxu0 0.0
        %727 = vmatprep.mubr.f32.mxu0 %v261
        %728 = vmatmul.mubr.f32.gmra.mrb[0].mxu0 %v260
        %v729 = vpop.f32.mrb[0].mxu0
        %v730 = vadd.f32 %v660, %v729
        %v731 = vpop.f32.mrb[0].mxu0
        %732 = vdwg.mxu0
        %733 = vmatprep.subr.mxu0 %v359
        %734 = vmatpush1.xpose.msra.mxu0 %v358
        %735 = vmatprep.subr.mxu0 0.0
        %736 = vmatpush1.xpose.msra.mxu0 0.0
        %737 = vmatprep.subr.mxu0 0.0
        %738 = vmatpush1.xpose.msra.mxu0 0.0
        %739 = vmatprep.subr.mxu0 0.0
        %740 = vmatpush1.xpose.msra.mxu0 0.0
        %741 = vmatprep.subr.mxu0 0.0
        %742 = vmatpush1.xpose.msra.mxu0 0.0
        %743 = vmatprep.subr.mxu0 0.0
        %744 = vmatpush1.xpose.msra.mxu0 0.0
        %745 = vmatprep.subr.mxu0 0.0
        %746 = vmatpush1.xpose.msra.mxu0 0.0
        %747 = vmatprep.subr.mxu0 0.0
        %748 = vmatpush1.xpose.msra.mxu0 0.0
        %749 = vmatprep.subr.mxu0 0.0
        %750 = vmatpush1.xpose.msra.mxu0 0.0
        %751 = vmatprep.subr.mxu0 0.0
        %752 = vmatpush1.xpose.msra.mxu0 0.0
        %753 = vmatprep.subr.mxu0 0.0
        %754 = vmatpush1.xpose.msra.mxu0 0.0
        %755 = vmatprep.subr.mxu0 0.0
        %756 = vmatpush1.xpose.msra.mxu0 0.0
        %757 = vmatprep.subr.mxu0 0.0
        %758 = vmatpush1.xpose.msra.mxu0 0.0
        %759 = vmatprep.subr.mxu0 0.0
        %760 = vmatpush1.xpose.msra.mxu0 0.0
        %761 = vmatprep.subr.mxu0 0.0
        %762 = vmatpush1.xpose.msra.mxu0 0.0
        %763 = vmatprep.subr.mxu0 0.0
        %764 = vmatpush1.xpose.msra.mxu0 0.0
        %765 = vmatprep.subr.mxu0 0.0
        %766 = vmatpush1.xpose.msra.mxu0 0.0
        %767 = vmatprep.subr.mxu0 0.0
        %768 = vmatpush1.xpose.msra.mxu0 0.0
        %769 = vmatprep.subr.mxu0 0.0
        %770 = vmatpush1.xpose.msra.mxu0 0.0
        %771 = vmatprep.subr.mxu0 0.0
        %772 = vmatpush1.xpose.msra.mxu0 0.0
        %773 = vmatprep.subr.mxu0 0.0
        %774 = vmatpush1.xpose.msra.mxu0 0.0
        %775 = vmatprep.subr.mxu0 0.0
        %776 = vmatpush1.xpose.msra.mxu0 0.0
        %777 = vmatprep.subr.mxu0 0.0
        %778 = vmatpush1.xpose.msra.mxu0 0.0
        %779 = vmatprep.subr.mxu0 0.0
        %780 = vmatpush1.xpose.msra.mxu0 0.0
        %781 = vmatprep.subr.mxu0 0.0
        %782 = vmatpush1.xpose.msra.mxu0 0.0
        %783 = vmatprep.subr.mxu0 0.0
        %784 = vmatpush1.xpose.msra.mxu0 0.0
        %785 = vmatprep.subr.mxu0 0.0
        %786 = vmatpush1.xpose.msra.mxu0 0.0
        %787 = vmatprep.subr.mxu0 0.0
        %788 = vmatpush1.xpose.msra.mxu0 0.0
        %789 = vmatprep.subr.mxu0 0.0
        %790 = vmatpush1.xpose.msra.mxu0 0.0
        %791 = vmatprep.subr.mxu0 0.0
        %792 = vmatpush1.xpose.msra.mxu0 0.0
        %793 = vmatprep.subr.mxu0 0.0
        %794 = vmatpush1.xpose.msra.mxu0 0.0
        %795 = vmatprep.subr.mxu0 0.0
        %796 = vmatpush1.xpose.msra.mxu0 0.0
        %797 = vmatprep.mubr.f32.mxu0 %v263
        %798 = vmatmul.mubr.f32.gmra.mrb[0].mxu0 %v262
        %v799 = vpop.f32.mrb[0].mxu0
        %v800 = vadd.f32 %v730, %v799
        %v801 = vpop.f32.mrb[0].mxu0
        %802 = vdwg.mxu0
        %803 = vmatprep.subr.mxu0 %v361
        %804 = vmatpush1.xpose.msra.mxu0 %v360
        %805 = vmatprep.subr.mxu0 0.0
        %806 = vmatpush1.xpose.msra.mxu0 0.0
        %807 = vmatprep.subr.mxu0 0.0
        %808 = vmatpush1.xpose.msra.mxu0 0.0
        %809 = vmatprep.subr.mxu0 0.0
        %810 = vmatpush1.xpose.msra.mxu0 0.0
        %811 = vmatprep.subr.mxu0 0.0
        %812 = vmatpush1.xpose.msra.mxu0 0.0
        %813 = vmatprep.subr.mxu0 0.0
        %814 = vmatpush1.xpose.msra.mxu0 0.0
        %815 = vmatprep.subr.mxu0 0.0
        %816 = vmatpush1.xpose.msra.mxu0 0.0
        %817 = vmatprep.subr.mxu0 0.0
        %818 = vmatpush1.xpose.msra.mxu0 0.0
        %819 = vmatprep.subr.mxu0 0.0
        %820 = vmatpush1.xpose.msra.mxu0 0.0
        %821 = vmatprep.subr.mxu0 0.0
        %822 = vmatpush1.xpose.msra.mxu0 0.0
        %823 = vmatprep.subr.mxu0 0.0
        %824 = vmatpush1.xpose.msra.mxu0 0.0
        %825 = vmatprep.subr.mxu0 0.0
        %826 = vmatpush1.xpose.msra.mxu0 0.0
        %827 = vmatprep.subr.mxu0 0.0
        %828 = vmatpush1.xpose.msra.mxu0 0.0
        %829 = vmatprep.subr.mxu0 0.0
        %830 = vmatpush1.xpose.msra.mxu0 0.0
        %831 = vmatprep.subr.mxu0 0.0
        %832 = vmatpush1.xpose.msra.mxu0 0.0
        %833 = vmatprep.subr.mxu0 0.0
        %834 = vmatpush1.xpose.msra.mxu0 0.0
        %835 = vmatprep.subr.mxu0 0.0
        %836 = vmatpush1.xpose.msra.mxu0 0.0
        %837 = vmatprep.subr.mxu0 0.0
        %838 = vmatpush1.xpose.msra.mxu0 0.0
        %839 = vmatprep.subr.mxu0 0.0
        %840 = vmatpush1.xpose.msra.mxu0 0.0
        %841 = vmatprep.subr.mxu0 0.0
        %842 = vmatpush1.xpose.msra.mxu0 0.0
        %843 = vmatprep.subr.mxu0 0.0
        %844 = vmatpush1.xpose.msra.mxu0 0.0
        %845 = vmatprep.subr.mxu0 0.0
        %846 = vmatpush1.xpose.msra.mxu0 0.0
        %847 = vmatprep.subr.mxu0 0.0
        %848 = vmatpush1.xpose.msra.mxu0 0.0
        %849 = vmatprep.subr.mxu0 0.0
        %850 = vmatpush1.xpose.msra.mxu0 0.0
        %851 = vmatprep.subr.mxu0 0.0
        %852 = vmatpush1.xpose.msra.mxu0 0.0
        %853 = vmatprep.subr.mxu0 0.0
        %854 = vmatpush1.xpose.msra.mxu0 0.0
        %855 = vmatprep.subr.mxu0 0.0
        %856 = vmatpush1.xpose.msra.mxu0 0.0
        %857 = vmatprep.subr.mxu0 0.0
        %858 = vmatpush1.xpose.msra.mxu0 0.0
        %859 = vmatprep.subr.mxu0 0.0
        %860 = vmatpush1.xpose.msra.mxu0 0.0
        %861 = vmatprep.subr.mxu0 0.0
        %862 = vmatpush1.xpose.msra.mxu0 0.0
        %863 = vmatprep.subr.mxu0 0.0
        %864 = vmatpush1.xpose.msra.mxu0 0.0
        %865 = vmatprep.subr.mxu0 0.0
        %866 = vmatpush1.xpose.msra.mxu0 0.0
        %867 = vmatprep.mubr.f32.mxu0 %v265
        %868 = vmatmul.mubr.f32.gmra.mrb[0].mxu0 %v264
        %v869 = vpop.f32.mrb[0].mxu0
        %v870 = vadd.f32 %v800, %v869
        %v871 = vpop.f32.mrb[0].mxu0
        %872 = vdwg.mxu0
        %873 = vmatprep.subr.mxu0 %v363
        %874 = vmatpush1.xpose.msra.mxu0 %v362
        %875 = vmatprep.subr.mxu0 0.0
        %876 = vmatpush1.xpose.msra.mxu0 0.0
        %877 = vmatprep.subr.mxu0 0.0
        %878 = vmatpush1.xpose.msra.mxu0 0.0
        %879 = vmatprep.subr.mxu0 0.0
        %880 = vmatpush1.xpose.msra.mxu0 0.0
        %881 = vmatprep.subr.mxu0 0.0
        %882 = vmatpush1.xpose.msra.mxu0 0.0
        %883 = vmatprep.subr.mxu0 0.0
        %884 = vmatpush1.xpose.msra.mxu0 0.0
        %885 = vmatprep.subr.mxu0 0.0
        %886 = vmatpush1.xpose.msra.mxu0 0.0
        %887 = vmatprep.subr.mxu0 0.0
        %888 = vmatpush1.xpose.msra.mxu0 0.0
        %889 = vmatprep.subr.mxu0 0.0
        %890 = vmatpush1.xpose.msra.mxu0 0.0
        %891 = vmatprep.subr.mxu0 0.0
        %892 = vmatpush1.xpose.msra.mxu0 0.0
        %893 = vmatprep.subr.mxu0 0.0
        %894 = vmatpush1.xpose.msra.mxu0 0.0
        %895 = vmatprep.subr.mxu0 0.0
        %896 = vmatpush1.xpose.msra.mxu0 0.0
        %897 = vmatprep.subr.mxu0 0.0
        %898 = vmatpush1.xpose.msra.mxu0 0.0
        %899 = vmatprep.subr.mxu0 0.0
        %900 = vmatpush1.xpose.msra.mxu0 0.0
        %901 = vmatprep.subr.mxu0 0.0
        %902 = vmatpush1.xpose.msra.mxu0 0.0
        %903 = vmatprep.subr.mxu0 0.0
        %904 = vmatpush1.xpose.msra.mxu0 0.0
        %905 = vmatprep.subr.mxu0 0.0
        %906 = vmatpush1.xpose.msra.mxu0 0.0
        %907 = vmatprep.subr.mxu0 0.0
        %908 = vmatpush1.xpose.msra.mxu0 0.0
        %909 = vmatprep.subr.mxu0 0.0
        %910 = vmatpush1.xpose.msra.mxu0 0.0
        %911 = vmatprep.subr.mxu0 0.0
        %912 = vmatpush1.xpose.msra.mxu0 0.0
        %913 = vmatprep.subr.mxu0 0.0
        %914 = vmatpush1.xpose.msra.mxu0 0.0
        %915 = vmatprep.subr.mxu0 0.0
        %916 = vmatpush1.xpose.msra.mxu0 0.0
        %917 = vmatprep.subr.mxu0 0.0
        %918 = vmatpush1.xpose.msra.mxu0 0.0
        %919 = vmatprep.subr.mxu0 0.0
        %920 = vmatpush1.xpose.msra.mxu0 0.0
        %921 = vmatprep.subr.mxu0 0.0
        %922 = vmatpush1.xpose.msra.mxu0 0.0
        %923 = vmatprep.subr.mxu0 0.0
        %924 = vmatpush1.xpose.msra.mxu0 0.0
        %925 = vmatprep.subr.mxu0 0.0
        %926 = vmatpush1.xpose.msra.mxu0 0.0
        %927 = vmatprep.subr.mxu0 0.0
        %928 = vmatpush1.xpose.msra.mxu0 0.0
        %929 = vmatprep.subr.mxu0 0.0
        %930 = vmatpush1.xpose.msra.mxu0 0.0
        %931 = vmatprep.subr.mxu0 0.0
        %932 = vmatpush1.xpose.msra.mxu0 0.0
        %933 = vmatprep.subr.mxu0 0.0
        %934 = vmatpush1.xpose.msra.mxu0 0.0
        %935 = vmatprep.subr.mxu0 0.0
        %936 = vmatpush1.xpose.msra.mxu0 0.0
        %937 = vmatprep.mubr.f32.mxu0 %v267
        %938 = vmatmul.mubr.f32.gmra.mrb[0].mxu0 %v266
        %v939 = vpop.f32.mrb[0].mxu0
        %v940 = vadd.f32 %v870, %v939
        %v941 = vpop.f32.mrb[0].mxu0
        %942 = vdwg.mxu0
        %943 = vmatprep.subr.mxu0 %v365
        %944 = vmatpush1.xpose.msra.mxu0 %v364
        %945 = vmatprep.subr.mxu0 0.0
        %946 = vmatpush1.xpose.msra.mxu0 0.0
        %947 = vmatprep.subr.mxu0 0.0
        %948 = vmatpush1.xpose.msra.mxu0 0.0
        %949 = vmatprep.subr.mxu0 0.0
        %950 = vmatpush1.xpose.msra.mxu0 0.0
        %951 = vmatprep.subr.mxu0 0.0
        %952 = vmatpush1.xpose.msra.mxu0 0.0
        %953 = vmatprep.subr.mxu0 0.0
        %954 = vmatpush1.xpose.msra.mxu0 0.0
        %955 = vmatprep.subr.mxu0 0.0
        %956 = vmatpush1.xpose.msra.mxu0 0.0
        %957 = vmatprep.subr.mxu0 0.0
        %958 = vmatpush1.xpose.msra.mxu0 0.0
        %959 = vmatprep.subr.mxu0 0.0
        %960 = vmatpush1.xpose.msra.mxu0 0.0
        %961 = vmatprep.subr.mxu0 0.0
        %962 = vmatpush1.xpose.msra.mxu0 0.0
        %963 = vmatprep.subr.mxu0 0.0
        %964 = vmatpush1.xpose.msra.mxu0 0.0
        %965 = vmatprep.subr.mxu0 0.0
        %966 = vmatpush1.xpose.msra.mxu0 0.0
        %967 = vmatprep.subr.mxu0 0.0
        %968 = vmatpush1.xpose.msra.mxu0 0.0
        %969 = vmatprep.subr.mxu0 0.0
        %970 = vmatpush1.xpose.msra.mxu0 0.0
        %971 = vmatprep.subr.mxu0 0.0
        %972 = vmatpush1.xpose.msra.mxu0 0.0
        %973 = vmatprep.subr.mxu0 0.0
        %974 = vmatpush1.xpose.msra.mxu0 0.0
        %975 = vmatprep.subr.mxu0 0.0
        %976 = vmatpush1.xpose.msra.mxu0 0.0
        %977 = vmatprep.subr.mxu0 0.0
        %978 = vmatpush1.xpose.msra.mxu0 0.0
        %979 = vmatprep.subr.mxu0 0.0
        %980 = vmatpush1.xpose.msra.mxu0 0.0
        %981 = vmatprep.subr.mxu0 0.0
        %982 = vmatpush1.xpose.msra.mxu0 0.0
        %983 = vmatprep.subr.mxu0 0.0
        %984 = vmatpush1.xpose.msra.mxu0 0.0
        %985 = vmatprep.subr.mxu0 0.0
        %986 = vmatpush1.xpose.msra.mxu0 0.0
        %987 = vmatprep.subr.mxu0 0.0
        %988 = vmatpush1.xpose.msra.mxu0 0.0
        %989 = vmatprep.subr.mxu0 0.0
        %990 = vmatpush1.xpose.msra.mxu0 0.0
        %991 = vmatprep.subr.mxu0 0.0
        %992 = vmatpush1.xpose.msra.mxu0 0.0
        %993 = vmatprep.subr.mxu0 0.0
        %994 = vmatpush1.xpose.msra.mxu0 0.0
        %995 = vmatprep.subr.mxu0 0.0
        %996 = vmatpush1.xpose.msra.mxu0 0.0
        %997 = vmatprep.subr.mxu0 0.0
        %998 = vmatpush1.xpose.msra.mxu0 0.0
        %999 = vmatprep.subr.mxu0 0.0
        %1000 = vmatpush1.xpose.msra.mxu0 0.0
        %1001 = vmatprep.subr.mxu0 0.0
        %1002 = vmatpush1.xpose.msra.mxu0 0.0
        %1003 = vmatprep.subr.mxu0 0.0
        %1004 = vmatpush1.xpose.msra.mxu0 0.0
        %1005 = vmatprep.subr.mxu0 0.0
        %1006 = vmatpush1.xpose.msra.mxu0 0.0
        %1007 = vmatprep.mubr.f32.mxu0 %v269
        %1008 = vmatmul.mubr.f32.gmra.mrb[0].mxu0 %v268
        %v1009 = vpop.f32.mrb[0].mxu0
        %v1010 = vadd.f32 %v940, %v1009
        %v1011 = vpop.f32.mrb[0].mxu0
        %1012 = vdwg.mxu0
        %1013 = vmatprep.subr.mxu0 %v367
        %1014 = vmatpush1.xpose.msra.mxu0 %v366
        %1015 = vmatprep.subr.mxu0 0.0
        %1016 = vmatpush1.xpose.msra.mxu0 0.0
        %1017 = vmatprep.subr.mxu0 0.0
        %1018 = vmatpush1.xpose.msra.mxu0 0.0
        %1019 = vmatprep.subr.mxu0 0.0
        %1020 = vmatpush1.xpose.msra.mxu0 0.0
        %1021 = vmatprep.subr.mxu0 0.0
        %1022 = vmatpush1.xpose.msra.mxu0 0.0
        %1023 = vmatprep.subr.mxu0 0.0
        %1024 = vmatpush1.xpose.msra.mxu0 0.0
        %1025 = vmatprep.subr.mxu0 0.0
        %1026 = vmatpush1.xpose.msra.mxu0 0.0
        %1027 = vmatprep.subr.mxu0 0.0
        %1028 = vmatpush1.xpose.msra.mxu0 0.0
        %1029 = vmatprep.subr.mxu0 0.0
        %1030 = vmatpush1.xpose.msra.mxu0 0.0
        %1031 = vmatprep.subr.mxu0 0.0
        %1032 = vmatpush1.xpose.msra.mxu0 0.0
        %1033 = vmatprep.subr.mxu0 0.0
        %1034 = vmatpush1.xpose.msra.mxu0 0.0
        %1035 = vmatprep.subr.mxu0 0.0
        %1036 = vmatpush1.xpose.msra.mxu0 0.0
        %1037 = vmatprep.subr.mxu0 0.0
        %1038 = vmatpush1.xpose.msra.mxu0 0.0
        %1039 = vmatprep.subr.mxu0 0.0
        %1040 = vmatpush1.xpose.msra.mxu0 0.0
        %1041 = vmatprep.subr.mxu0 0.0
        %1042 = vmatpush1.xpose.msra.mxu0 0.0
        %1043 = vmatprep.subr.mxu0 0.0
        %1044 = vmatpush1.xpose.msra.mxu0 0.0
        %1045 = vmatprep.subr.mxu0 0.0
        %1046 = vmatpush1.xpose.msra.mxu0 0.0
        %1047 = vmatprep.subr.mxu0 0.0
        %1048 = vmatpush1.xpose.msra.mxu0 0.0
        %1049 = vmatprep.subr.mxu0 0.0
        %1050 = vmatpush1.xpose.msra.mxu0 0.0
        %1051 = vmatprep.subr.mxu0 0.0
        %1052 = vmatpush1.xpose.msra.mxu0 0.0
        %1053 = vmatprep.subr.mxu0 0.0
        %1054 = vmatpush1.xpose.msra.mxu0 0.0
        %1055 = vmatprep.subr.mxu0 0.0
        %1056 = vmatpush1.xpose.msra.mxu0 0.0
        %1057 = vmatprep.subr.mxu0 0.0
        %1058 = vmatpush1.xpose.msra.mxu0 0.0
        %1059 = vmatprep.subr.mxu0 0.0
        %1060 = vmatpush1.xpose.msra.mxu0 0.0
        %1061 = vmatprep.subr.mxu0 0.0
        %1062 = vmatpush1.xpose.msra.mxu0 0.0
        %1063 = vmatprep.subr.mxu0 0.0
        %1064 = vmatpush1.xpose.msra.mxu0 0.0
        %1065 = vmatprep.subr.mxu0 0.0
        %1066 = vmatpush1.xpose.msra.mxu0 0.0
        %1067 = vmatprep.subr.mxu0 0.0
        %1068 = vmatpush1.xpose.msra.mxu0 0.0
        %1069 = vmatprep.subr.mxu0 0.0
        %1070 = vmatpush1.xpose.msra.mxu0 0.0
        %1071 = vmatprep.subr.mxu0 0.0
        %1072 = vmatpush1.xpose.msra.mxu0 0.0
        %1073 = vmatprep.subr.mxu0 0.0
        %1074 = vmatpush1.xpose.msra.mxu0 0.0
        %1075 = vmatprep.subr.mxu0 0.0
        %1076 = vmatpush1.xpose.msra.mxu0 0.0
        %1077 = vmatprep.mubr.f32.mxu0 %v271
        %1078 = vmatmul.mubr.f32.gmra.mrb[0].mxu0 %v270
        %v1079 = vpop.f32.mrb[0].mxu0
        %v1080 = vadd.f32 %v1010, %v1079
        %v1081 = vpop.f32.mrb[0].mxu0
        %1082 = vdwg.mxu0
        %1083 = vmatprep.subr.mxu0 %v369
        %1084 = vmatpush1.xpose.msra.mxu0 %v368
        %1085 = vmatprep.subr.mxu0 0.0
        %1086 = vmatpush1.xpose.msra.mxu0 0.0
        %1087 = vmatprep.subr.mxu0 0.0
        %1088 = vmatpush1.xpose.msra.mxu0 0.0
        %1089 = vmatprep.subr.mxu0 0.0
        %1090 = vmatpush1.xpose.msra.mxu0 0.0
        %1091 = vmatprep.subr.mxu0 0.0
        %1092 = vmatpush1.xpose.msra.mxu0 0.0
        %1093 = vmatprep.subr.mxu0 0.0
        %1094 = vmatpush1.xpose.msra.mxu0 0.0
        %1095 = vmatprep.subr.mxu0 0.0
        %1096 = vmatpush1.xpose.msra.mxu0 0.0
        %1097 = vmatprep.subr.mxu0 0.0
        %1098 = vmatpush1.xpose.msra.mxu0 0.0
        %1099 = vmatprep.subr.mxu0 0.0
        %1100 = vmatpush1.xpose.msra.mxu0 0.0
        %1101 = vmatprep.subr.mxu0 0.0
        %1102 = vmatpush1.xpose.msra.mxu0 0.0
        %1103 = vmatprep.subr.mxu0 0.0
        %1104 = vmatpush1.xpose.msra.mxu0 0.0
        %1105 = vmatprep.subr.mxu0 0.0
        %1106 = vmatpush1.xpose.msra.mxu0 0.0
        %1107 = vmatprep.subr.mxu0 0.0
        %1108 = vmatpush1.xpose.msra.mxu0 0.0
        %1109 = vmatprep.subr.mxu0 0.0
        %1110 = vmatpush1.xpose.msra.mxu0 0.0
        %1111 = vmatprep.subr.mxu0 0.0
        %1112 = vmatpush1.xpose.msra.mxu0 0.0
        %1113 = vmatprep.subr.mxu0 0.0
        %1114 = vmatpush1.xpose.msra.mxu0 0.0
        %1115 = vmatprep.subr.mxu0 0.0
        %1116 = vmatpush1.xpose.msra.mxu0 0.0
        %1117 = vmatprep.subr.mxu0 0.0
        %1118 = vmatpush1.xpose.msra.mxu0 0.0
        %1119 = vmatprep.subr.mxu0 0.0
        %1120 = vmatpush1.xpose.msra.mxu0 0.0
        %1121 = vmatprep.subr.mxu0 0.0
        %1122 = vmatpush1.xpose.msra.mxu0 0.0
        %1123 = vmatprep.subr.mxu0 0.0
        %1124 = vmatpush1.xpose.msra.mxu0 0.0
        %1125 = vmatprep.subr.mxu0 0.0
        %1126 = vmatpush1.xpose.msra.mxu0 0.0
        %1127 = vmatprep.subr.mxu0 0.0
        %1128 = vmatpush1.xpose.msra.mxu0 0.0
        %1129 = vmatprep.subr.mxu0 0.0
        %1130 = vmatpush1.xpose.msra.mxu0 0.0
        %1131 = vmatprep.subr.mxu0 0.0
        %1132 = vmatpush1.xpose.msra.mxu0 0.0
        %1133 = vmatprep.subr.mxu0 0.0
        %1134 = vmatpush1.xpose.msra.mxu0 0.0
        %1135 = vmatprep.subr.mxu0 0.0
        %1136 = vmatpush1.xpose.msra.mxu0 0.0
        %1137 = vmatprep.subr.mxu0 0.0
        %1138 = vmatpush1.xpose.msra.mxu0 0.0
        %1139 = vmatprep.subr.mxu0 0.0
        %1140 = vmatpush1.xpose.msra.mxu0 0.0
        %1141 = vmatprep.subr.mxu0 0.0
        %1142 = vmatpush1.xpose.msra.mxu0 0.0
        %1143 = vmatprep.subr.mxu0 0.0
        %1144 = vmatpush1.xpose.msra.mxu0 0.0
        %1145 = vmatprep.subr.mxu0 0.0
        %1146 = vmatpush1.xpose.msra.mxu0 0.0
        %1147 = vmatprep.mubr.f32.mxu0 %v273
        %1148 = vmatmul.mubr.f32.gmra.mrb[0].mxu0 %v272
        %v1149 = vpop.f32.mrb[0].mxu0
        %v1150 = vadd.f32 %v1080, %v1149
        %v1151 = vpop.f32.mrb[0].mxu0
        %1152 = vdwg.mxu0
        %1153 = vmatprep.subr.mxu0 %v371
        %1154 = vmatpush1.xpose.msra.mxu0 %v370
        %1155 = vmatprep.subr.mxu0 0.0
        %1156 = vmatpush1.xpose.msra.mxu0 0.0
        %1157 = vmatprep.subr.mxu0 0.0
        %1158 = vmatpush1.xpose.msra.mxu0 0.0
        %1159 = vmatprep.subr.mxu0 0.0
        %1160 = vmatpush1.xpose.msra.mxu0 0.0
        %1161 = vmatprep.subr.mxu0 0.0
        %1162 = vmatpush1.xpose.msra.mxu0 0.0
        %1163 = vmatprep.subr.mxu0 0.0
        %1164 = vmatpush1.xpose.msra.mxu0 0.0
        %1165 = vmatprep.subr.mxu0 0.0
        %1166 = vmatpush1.xpose.msra.mxu0 0.0
        %1167 = vmatprep.subr.mxu0 0.0
        %1168 = vmatpush1.xpose.msra.mxu0 0.0
        %1169 = vmatprep.subr.mxu0 0.0
        %1170 = vmatpush1.xpose.msra.mxu0 0.0
        %1171 = vmatprep.subr.mxu0 0.0
        %1172 = vmatpush1.xpose.msra.mxu0 0.0
        %1173 = vmatprep.subr.mxu0 0.0
        %1174 = vmatpush1.xpose.msra.mxu0 0.0
        %1175 = vmatprep.subr.mxu0 0.0
        %1176 = vmatpush1.xpose.msra.mxu0 0.0
        %1177 = vmatprep.subr.mxu0 0.0
        %1178 = vmatpush1.xpose.msra.mxu0 0.0
        %1179 = vmatprep.subr.mxu0 0.0
        %1180 = vmatpush1.xpose.msra.mxu0 0.0
        %1181 = vmatprep.subr.mxu0 0.0
        %1182 = vmatpush1.xpose.msra.mxu0 0.0
        %1183 = vmatprep.subr.mxu0 0.0
        %1184 = vmatpush1.xpose.msra.mxu0 0.0
        %1185 = vmatprep.subr.mxu0 0.0
        %1186 = vmatpush1.xpose.msra.mxu0 0.0
        %1187 = vmatprep.subr.mxu0 0.0
        %1188 = vmatpush1.xpose.msra.mxu0 0.0
        %1189 = vmatprep.subr.mxu0 0.0
        %1190 = vmatpush1.xpose.msra.mxu0 0.0
        %1191 = vmatprep.subr.mxu0 0.0
        %1192 = vmatpush1.xpose.msra.mxu0 0.0
        %1193 = vmatprep.subr.mxu0 0.0
        %1194 = vmatpush1.xpose.msra.mxu0 0.0
        %1195 = vmatprep.subr.mxu0 0.0
        %1196 = vmatpush1.xpose.msra.mxu0 0.0
        %1197 = vmatprep.subr.mxu0 0.0
        %1198 = vmatpush1.xpose.msra.mxu0 0.0
        %1199 = vmatprep.subr.mxu0 0.0
        %1200 = vmatpush1.xpose.msra.mxu0 0.0
        %1201 = vmatprep.subr.mxu0 0.0
        %1202 = vmatpush1.xpose.msra.mxu0 0.0
        %1203 = vmatprep.subr.mxu0 0.0
        %1204 = vmatpush1.xpose.msra.mxu0 0.0
        %1205 = vmatprep.subr.mxu0 0.0
        %1206 = vmatpush1.xpose.msra.mxu0 0.0
        %1207 = vmatprep.subr.mxu0 0.0
        %1208 = vmatpush1.xpose.msra.mxu0 0.0
        %1209 = vmatprep.subr.mxu0 0.0
        %1210 = vmatpush1.xpose.msra.mxu0 0.0
        %1211 = vmatprep.subr.mxu0 0.0
        %1212 = vmatpush1.xpose.msra.mxu0 0.0
        %1213 = vmatprep.subr.mxu0 0.0
        %1214 = vmatpush1.xpose.msra.mxu0 0.0
        %1215 = vmatprep.subr.mxu0 0.0
        %1216 = vmatpush1.xpose.msra.mxu0 0.0
        %1217 = vmatprep.mubr.f32.mxu0 %v275
        %1218 = vmatmul.mubr.f32.gmra.mrb[0].mxu0 %v274
        %v1219 = vpop.f32.mrb[0].mxu0
        %v1220 = vadd.f32 %v1150, %v1219
        %v1221 = vpop.f32.mrb[0].mxu0
        %1222 = vdwg.mxu0
        %1223 = vmatprep.subr.mxu0 %v373
        %1224 = vmatpush1.xpose.msra.mxu0 %v372
        %1225 = vmatprep.subr.mxu0 0.0
        %1226 = vmatpush1.xpose.msra.mxu0 0.0
        %1227 = vmatprep.subr.mxu0 0.0
        %1228 = vmatpush1.xpose.msra.mxu0 0.0
        %1229 = vmatprep.subr.mxu0 0.0
        %1230 = vmatpush1.xpose.msra.mxu0 0.0
        %1231 = vmatprep.subr.mxu0 0.0
        %1232 = vmatpush1.xpose.msra.mxu0 0.0
        %1233 = vmatprep.subr.mxu0 0.0
        %1234 = vmatpush1.xpose.msra.mxu0 0.0
        %1235 = vmatprep.subr.mxu0 0.0
        %1236 = vmatpush1.xpose.msra.mxu0 0.0
        %1237 = vmatprep.subr.mxu0 0.0
        %1238 = vmatpush1.xpose.msra.mxu0 0.0
        %1239 = vmatprep.subr.mxu0 0.0
        %1240 = vmatpush1.xpose.msra.mxu0 0.0
        %1241 = vmatprep.subr.mxu0 0.0
        %1242 = vmatpush1.xpose.msra.mxu0 0.0
        %1243 = vmatprep.subr.mxu0 0.0
        %1244 = vmatpush1.xpose.msra.mxu0 0.0
        %1245 = vmatprep.subr.mxu0 0.0
        %1246 = vmatpush1.xpose.msra.mxu0 0.0
        %1247 = vmatprep.subr.mxu0 0.0
        %1248 = vmatpush1.xpose.msra.mxu0 0.0
        %1249 = vmatprep.subr.mxu0 0.0
        %1250 = vmatpush1.xpose.msra.mxu0 0.0
        %1251 = vmatprep.subr.mxu0 0.0
        %1252 = vmatpush1.xpose.msra.mxu0 0.0
        %1253 = vmatprep.subr.mxu0 0.0
        %1254 = vmatpush1.xpose.msra.mxu0 0.0
        %1255 = vmatprep.subr.mxu0 0.0
        %1256 = vmatpush1.xpose.msra.mxu0 0.0
        %1257 = vmatprep.subr.mxu0 0.0
        %1258 = vmatpush1.xpose.msra.mxu0 0.0
        %1259 = vmatprep.subr.mxu0 0.0
        %1260 = vmatpush1.xpose.msra.mxu0 0.0
        %1261 = vmatprep.subr.mxu0 0.0
        %1262 = vmatpush1.xpose.msra.mxu0 0.0
        %1263 = vmatprep.subr.mxu0 0.0
        %1264 = vmatpush1.xpose.msra.mxu0 0.0
        %1265 = vmatprep.subr.mxu0 0.0
        %1266 = vmatpush1.xpose.msra.mxu0 0.0
        %1267 = vmatprep.subr.mxu0 0.0
        %1268 = vmatpush1.xpose.msra.mxu0 0.0
        %1269 = vmatprep.subr.mxu0 0.0
        %1270 = vmatpush1.xpose.msra.mxu0 0.0
        %1271 = vmatprep.subr.mxu0 0.0
        %1272 = vmatpush1.xpose.msra.mxu0 0.0
        %1273 = vmatprep.subr.mxu0 0.0
        %1274 = vmatpush1.xpose.msra.mxu0 0.0
        %1275 = vmatprep.subr.mxu0 0.0
        %1276 = vmatpush1.xpose.msra.mxu0 0.0
        %1277 = vmatprep.subr.mxu0 0.0
        %1278 = vmatpush1.xpose.msra.mxu0 0.0
        %1279 = vmatprep.subr.mxu0 0.0
        %1280 = vmatpush1.xpose.msra.mxu0 0.0
        %1281 = vmatprep.subr.mxu0 0.0
        %1282 = vmatpush1.xpose.msra.mxu0 0.0
        %1283 = vmatprep.subr.mxu0 0.0
        %1284 = vmatpush1.xpose.msra.mxu0 0.0
        %1285 = vmatprep.subr.mxu0 0.0
        %1286 = vmatpush1.xpose.msra.mxu0 0.0
        %1287 = vmatprep.mubr.f32.mxu0 %v277
        %1288 = vmatmul.mubr.f32.gmra.mrb[0].mxu0 %v276
        %v1289 = vpop.f32.mrb[0].mxu0
        %v1290 = vadd.f32 %v1220, %v1289
        %v1291 = vpop.f32.mrb[0].mxu0
        %1292 = vdwg.mxu0
        %1293 = vmatprep.subr.mxu0 %v375
        %1294 = vmatpush1.xpose.msra.mxu0 %v374
        %1295 = vmatprep.subr.mxu0 0.0
        %1296 = vmatpush1.xpose.msra.mxu0 0.0
        %1297 = vmatprep.subr.mxu0 0.0
        %1298 = vmatpush1.xpose.msra.mxu0 0.0
        %1299 = vmatprep.subr.mxu0 0.0
        %1300 = vmatpush1.xpose.msra.mxu0 0.0
        %1301 = vmatprep.subr.mxu0 0.0
        %1302 = vmatpush1.xpose.msra.mxu0 0.0
        %1303 = vmatprep.subr.mxu0 0.0
        %1304 = vmatpush1.xpose.msra.mxu0 0.0
        %1305 = vmatprep.subr.mxu0 0.0
        %1306 = vmatpush1.xpose.msra.mxu0 0.0
        %1307 = vmatprep.subr.mxu0 0.0
        %1308 = vmatpush1.xpose.msra.mxu0 0.0
        %1309 = vmatprep.subr.mxu0 0.0
        %1310 = vmatpush1.xpose.msra.mxu0 0.0
        %1311 = vmatprep.subr.mxu0 0.0
        %1312 = vmatpush1.xpose.msra.mxu0 0.0
        %1313 = vmatprep.subr.mxu0 0.0
        %1314 = vmatpush1.xpose.msra.mxu0 0.0
        %1315 = vmatprep.subr.mxu0 0.0
        %1316 = vmatpush1.xpose.msra.mxu0 0.0
        %1317 = vmatprep.subr.mxu0 0.0
        %1318 = vmatpush1.xpose.msra.mxu0 0.0
        %1319 = vmatprep.subr.mxu0 0.0
        %1320 = vmatpush1.xpose.msra.mxu0 0.0
        %1321 = vmatprep.subr.mxu0 0.0
        %1322 = vmatpush1.xpose.msra.mxu0 0.0
        %1323 = vmatprep.subr.mxu0 0.0
        %1324 = vmatpush1.xpose.msra.mxu0 0.0
        %1325 = vmatprep.subr.mxu0 0.0
        %1326 = vmatpush1.xpose.msra.mxu0 0.0
        %1327 = vmatprep.subr.mxu0 0.0
        %1328 = vmatpush1.xpose.msra.mxu0 0.0
        %1329 = vmatprep.subr.mxu0 0.0
        %1330 = vmatpush1.xpose.msra.mxu0 0.0
        %1331 = vmatprep.subr.mxu0 0.0
        %1332 = vmatpush1.xpose.msra.mxu0 0.0
        %1333 = vmatprep.subr.mxu0 0.0
        %1334 = vmatpush1.xpose.msra.mxu0 0.0
        %1335 = vmatprep.subr.mxu0 0.0
        %1336 = vmatpush1.xpose.msra.mxu0 0.0
        %1337 = vmatprep.subr.mxu0 0.0
        %1338 = vmatpush1.xpose.msra.mxu0 0.0
        %1339 = vmatprep.subr.mxu0 0.0
        %1340 = vmatpush1.xpose.msra.mxu0 0.0
        %1341 = vmatprep.subr.mxu0 0.0
        %1342 = vmatpush1.xpose.msra.mxu0 0.0
        %1343 = vmatprep.subr.mxu0 0.0
        %1344 = vmatpush1.xpose.msra.mxu0 0.0
        %1345 = vmatprep.subr.mxu0 0.0
        %1346 = vmatpush1.xpose.msra.mxu0 0.0
        %1347 = vmatprep.subr.mxu0 0.0
        %1348 = vmatpush1.xpose.msra.mxu0 0.0
        %1349 = vmatprep.subr.mxu0 0.0
        %1350 = vmatpush1.xpose.msra.mxu0 0.0
        %1351 = vmatprep.subr.mxu0 0.0
        %1352 = vmatpush1.xpose.msra.mxu0 0.0
        %1353 = vmatprep.subr.mxu0 0.0
        %1354 = vmatpush1.xpose.msra.mxu0 0.0
        %1355 = vmatprep.subr.mxu0 0.0
        %1356 = vmatpush1.xpose.msra.mxu0 0.0
        %1357 = vmatprep.mubr.f32.mxu0 %v279
        %1358 = vmatmul.mubr.f32.gmra.mrb[0].mxu0 %v278
        %v1359 = vpop.f32.mrb[0].mxu0
        %v1360 = vadd.f32 %v1290, %v1359
        %v1361 = vpop.f32.mrb[0].mxu0
        %1362 = vdwg.mxu0
        %1363 = vmatprep.subr.mxu0 %v377
        %1364 = vmatpush1.xpose.msra.mxu0 %v376
        %1365 = vmatprep.subr.mxu0 0.0
        %1366 = vmatpush1.xpose.msra.mxu0 0.0
        %1367 = vmatprep.subr.mxu0 0.0
        %1368 = vmatpush1.xpose.msra.mxu0 0.0
        %1369 = vmatprep.subr.mxu0 0.0
        %1370 = vmatpush1.xpose.msra.mxu0 0.0
        %1371 = vmatprep.subr.mxu0 0.0
        %1372 = vmatpush1.xpose.msra.mxu0 0.0
        %1373 = vmatprep.subr.mxu0 0.0
        %1374 = vmatpush1.xpose.msra.mxu0 0.0
        %1375 = vmatprep.subr.mxu0 0.0
        %1376 = vmatpush1.xpose.msra.mxu0 0.0
        %1377 = vmatprep.subr.mxu0 0.0
        %1378 = vmatpush1.xpose.msra.mxu0 0.0
        %1379 = vmatprep.subr.mxu0 0.0
        %1380 = vmatpush1.xpose.msra.mxu0 0.0
        %1381 = vmatprep.subr.mxu0 0.0
        %1382 = vmatpush1.xpose.msra.mxu0 0.0
        %1383 = vmatprep.subr.mxu0 0.0
        %1384 = vmatpush1.xpose.msra.mxu0 0.0
        %1385 = vmatprep.subr.mxu0 0.0
        %1386 = vmatpush1.xpose.msra.mxu0 0.0
        %1387 = vmatprep.subr.mxu0 0.0
        %1388 = vmatpush1.xpose.msra.mxu0 0.0
        %1389 = vmatprep.subr.mxu0 0.0
        %1390 = vmatpush1.xpose.msra.mxu0 0.0
        %1391 = vmatprep.subr.mxu0 0.0
        %1392 = vmatpush1.xpose.msra.mxu0 0.0
        %1393 = vmatprep.subr.mxu0 0.0
        %1394 = vmatpush1.xpose.msra.mxu0 0.0
        %1395 = vmatprep.subr.mxu0 0.0
        %1396 = vmatpush1.xpose.msra.mxu0 0.0
        %1397 = vmatprep.subr.mxu0 0.0
        %1398 = vmatpush1.xpose.msra.mxu0 0.0
        %1399 = vmatprep.subr.mxu0 0.0
        %1400 = vmatpush1.xpose.msra.mxu0 0.0
        %1401 = vmatprep.subr.mxu0 0.0
        %1402 = vmatpush1.xpose.msra.mxu0 0.0
        %1403 = vmatprep.subr.mxu0 0.0
        %1404 = vmatpush1.xpose.msra.mxu0 0.0
        %1405 = vmatprep.subr.mxu0 0.0
        %1406 = vmatpush1.xpose.msra.mxu0 0.0
        %1407 = vmatprep.subr.mxu0 0.0
        %1408 = vmatpush1.xpose.msra.mxu0 0.0
        %1409 = vmatprep.subr.mxu0 0.0
        %1410 = vmatpush1.xpose.msra.mxu0 0.0
        %1411 = vmatprep.subr.mxu0 0.0
        %1412 = vmatpush1.xpose.msra.mxu0 0.0
        %1413 = vmatprep.subr.mxu0 0.0
        %1414 = vmatpush1.xpose.msra.mxu0 0.0
        %1415 = vmatprep.subr.mxu0 0.0
        %1416 = vmatpush1.xpose.msra.mxu0 0.0
        %1417 = vmatprep.subr.mxu0 0.0
        %1418 = vmatpush1.xpose.msra.mxu0 0.0
        %1419 = vmatprep.subr.mxu0 0.0
        %1420 = vmatpush1.xpose.msra.mxu0 0.0
        %1421 = vmatprep.subr.mxu0 0.0
        %1422 = vmatpush1.xpose.msra.mxu0 0.0
        %1423 = vmatprep.subr.mxu0 0.0
        %1424 = vmatpush1.xpose.msra.mxu0 0.0
        %1425 = vmatprep.subr.mxu0 0.0
        %1426 = vmatpush1.xpose.msra.mxu0 0.0
        %1427 = vmatprep.mubr.f32.mxu0 %v281
        %1428 = vmatmul.mubr.f32.gmra.mrb[0].mxu0 %v280
        %v1429 = vpop.f32.mrb[0].mxu0
        %v1430 = vadd.f32 %v1360, %v1429
        %v1431 = vpop.f32.mrb[0].mxu0
        %1432 = vdwg.mxu0
        %1433 = vmatprep.subr.mxu0 %v379
        %1434 = vmatpush1.xpose.msra.mxu0 %v378
        %1435 = vmatprep.subr.mxu0 0.0
        %1436 = vmatpush1.xpose.msra.mxu0 0.0
        %1437 = vmatprep.subr.mxu0 0.0
        %1438 = vmatpush1.xpose.msra.mxu0 0.0
        %1439 = vmatprep.subr.mxu0 0.0
        %1440 = vmatpush1.xpose.msra.mxu0 0.0
        %1441 = vmatprep.subr.mxu0 0.0
        %1442 = vmatpush1.xpose.msra.mxu0 0.0
        %1443 = vmatprep.subr.mxu0 0.0
        %1444 = vmatpush1.xpose.msra.mxu0 0.0
        %1445 = vmatprep.subr.mxu0 0.0
        %1446 = vmatpush1.xpose.msra.mxu0 0.0
        %1447 = vmatprep.subr.mxu0 0.0
        %1448 = vmatpush1.xpose.msra.mxu0 0.0
        %1449 = vmatprep.subr.mxu0 0.0
        %1450 = vmatpush1.xpose.msra.mxu0 0.0
        %1451 = vmatprep.subr.mxu0 0.0
        %1452 = vmatpush1.xpose.msra.mxu0 0.0
        %1453 = vmatprep.subr.mxu0 0.0
        %1454 = vmatpush1.xpose.msra.mxu0 0.0
        %1455 = vmatprep.subr.mxu0 0.0
        %1456 = vmatpush1.xpose.msra.mxu0 0.0
        %1457 = vmatprep.subr.mxu0 0.0
        %1458 = vmatpush1.xpose.msra.mxu0 0.0
        %1459 = vmatprep.subr.mxu0 0.0
        %1460 = vmatpush1.xpose.msra.mxu0 0.0
        %1461 = vmatprep.subr.mxu0 0.0
        %1462 = vmatpush1.xpose.msra.mxu0 0.0
        %1463 = vmatprep.subr.mxu0 0.0
        %1464 = vmatpush1.xpose.msra.mxu0 0.0
        %1465 = vmatprep.subr.mxu0 0.0
        %1466 = vmatpush1.xpose.msra.mxu0 0.0
        %1467 = vmatprep.subr.mxu0 0.0
        %1468 = vmatpush1.xpose.msra.mxu0 0.0
        %1469 = vmatprep.subr.mxu0 0.0
        %1470 = vmatpush1.xpose.msra.mxu0 0.0
        %1471 = vmatprep.subr.mxu0 0.0
        %1472 = vmatpush1.xpose.msra.mxu0 0.0
        %1473 = vmatprep.subr.mxu0 0.0
        %1474 = vmatpush1.xpose.msra.mxu0 0.0
        %1475 = vmatprep.subr.mxu0 0.0
        %1476 = vmatpush1.xpose.msra.mxu0 0.0
        %1477 = vmatprep.subr.mxu0 0.0
        %1478 = vmatpush1.xpose.msra.mxu0 0.0
        %1479 = vmatprep.subr.mxu0 0.0
        %1480 = vmatpush1.xpose.msra.mxu0 0.0
        %1481 = vmatprep.subr.mxu0 0.0
        %1482 = vmatpush1.xpose.msra.mxu0 0.0
        %1483 = vmatprep.subr.mxu0 0.0
        %1484 = vmatpush1.xpose.msra.mxu0 0.0
        %1485 = vmatprep.subr.mxu0 0.0
        %1486 = vmatpush1.xpose.msra.mxu0 0.0
        %1487 = vmatprep.subr.mxu0 0.0
        %1488 = vmatpush1.xpose.msra.mxu0 0.0
        %1489 = vmatprep.subr.mxu0 0.0
        %1490 = vmatpush1.xpose.msra.mxu0 0.0
        %1491 = vmatprep.subr.mxu0 0.0
        %1492 = vmatpush1.xpose.msra.mxu0 0.0
        %1493 = vmatprep.subr.mxu0 0.0
        %1494 = vmatpush1.xpose.msra.mxu0 0.0
        %1495 = vmatprep.subr.mxu0 0.0
        %1496 = vmatpush1.xpose.msra.mxu0 0.0
        %1497 = vmatprep.mubr.f32.mxu0 %v283
        %1498 = vmatmul.mubr.f32.gmra.mrb[0].mxu0 %v282
        %v1499 = vpop.f32.mrb[0].mxu0
        %v1500 = vadd.f32 %v1430, %v1499
        %v1501 = vpop.f32.mrb[0].mxu0
        %1502 = vdwg.mxu0
        %1503 = vmatprep.subr.mxu0 %v381
        %1504 = vmatpush1.xpose.msra.mxu0 %v380
        %1505 = vmatprep.subr.mxu0 0.0
        %1506 = vmatpush1.xpose.msra.mxu0 0.0
        %1507 = vmatprep.subr.mxu0 0.0
        %1508 = vmatpush1.xpose.msra.mxu0 0.0
        %1509 = vmatprep.subr.mxu0 0.0
        %1510 = vmatpush1.xpose.msra.mxu0 0.0
        %1511 = vmatprep.subr.mxu0 0.0
        %1512 = vmatpush1.xpose.msra.mxu0 0.0
        %1513 = vmatprep.subr.mxu0 0.0
        %1514 = vmatpush1.xpose.msra.mxu0 0.0
        %1515 = vmatprep.subr.mxu0 0.0
        %1516 = vmatpush1.xpose.msra.mxu0 0.0
        %1517 = vmatprep.subr.mxu0 0.0
        %1518 = vmatpush1.xpose.msra.mxu0 0.0
        %1519 = vmatprep.subr.mxu0 0.0
        %1520 = vmatpush1.xpose.msra.mxu0 0.0
        %1521 = vmatprep.subr.mxu0 0.0
        %1522 = vmatpush1.xpose.msra.mxu0 0.0
        %1523 = vmatprep.subr.mxu0 0.0
        %1524 = vmatpush1.xpose.msra.mxu0 0.0
        %1525 = vmatprep.subr.mxu0 0.0
        %1526 = vmatpush1.xpose.msra.mxu0 0.0
        %1527 = vmatprep.subr.mxu0 0.0
        %1528 = vmatpush1.xpose.msra.mxu0 0.0
        %1529 = vmatprep.subr.mxu0 0.0
        %1530 = vmatpush1.xpose.msra.mxu0 0.0
        %1531 = vmatprep.subr.mxu0 0.0
        %1532 = vmatpush1.xpose.msra.mxu0 0.0
        %1533 = vmatprep.subr.mxu0 0.0
        %1534 = vmatpush1.xpose.msra.mxu0 0.0
        %1535 = vmatprep.subr.mxu0 0.0
        %1536 = vmatpush1.xpose.msra.mxu0 0.0
        %1537 = vmatprep.subr.mxu0 0.0
        %1538 = vmatpush1.xpose.msra.mxu0 0.0
        %1539 = vmatprep.subr.mxu0 0.0
        %1540 = vmatpush1.xpose.msra.mxu0 0.0
        %1541 = vmatprep.subr.mxu0 0.0
        %1542 = vmatpush1.xpose.msra.mxu0 0.0
        %1543 = vmatprep.subr.mxu0 0.0
        %1544 = vmatpush1.xpose.msra.mxu0 0.0
        %1545 = vmatprep.subr.mxu0 0.0
        %1546 = vmatpush1.xpose.msra.mxu0 0.0
        %1547 = vmatprep.subr.mxu0 0.0
        %1548 = vmatpush1.xpose.msra.mxu0 0.0
        %1549 = vmatprep.subr.mxu0 0.0
        %1550 = vmatpush1.xpose.msra.mxu0 0.0
        %1551 = vmatprep.subr.mxu0 0.0
        %1552 = vmatpush1.xpose.msra.mxu0 0.0
        %1553 = vmatprep.subr.mxu0 0.0
        %1554 = vmatpush1.xpose.msra.mxu0 0.0
        %1555 = vmatprep.subr.mxu0 0.0
        %1556 = vmatpush1.xpose.msra.mxu0 0.0
        %1557 = vmatprep.subr.mxu0 0.0
        %1558 = vmatpush1.xpose.msra.mxu0 0.0
        %1559 = vmatprep.subr.mxu0 0.0
        %1560 = vmatpush1.xpose.msra.mxu0 0.0
        %1561 = vmatprep.subr.mxu0 0.0
        %1562 = vmatpush1.xpose.msra.mxu0 0.0
        %1563 = vmatprep.subr.mxu0 0.0
        %1564 = vmatpush1.xpose.msra.mxu0 0.0
        %1565 = vmatprep.subr.mxu0 0.0
        %1566 = vmatpush1.xpose.msra.mxu0 0.0
        %1567 = vmatprep.mubr.f32.mxu0 %v285
        %1568 = vmatmul.mubr.f32.gmra.mrb[0].mxu0 %v284
        %v1569 = vpop.f32.mrb[0].mxu0
        %v1570 = vadd.f32 %v1500, %v1569
        %v1571 = vpop.f32.mrb[0].mxu0
        %1572 = vdwg.mxu0
        %1573 = vmatprep.subr.mxu0 %v383
        %1574 = vmatpush1.xpose.msra.mxu0 %v382
        %1575 = vmatprep.subr.mxu0 0.0
        %1576 = vmatpush1.xpose.msra.mxu0 0.0
        %1577 = vmatprep.subr.mxu0 0.0
        %1578 = vmatpush1.xpose.msra.mxu0 0.0
        %1579 = vmatprep.subr.mxu0 0.0
        %1580 = vmatpush1.xpose.msra.mxu0 0.0
        %1581 = vmatprep.subr.mxu0 0.0
        %1582 = vmatpush1.xpose.msra.mxu0 0.0
        %1583 = vmatprep.subr.mxu0 0.0
        %1584 = vmatpush1.xpose.msra.mxu0 0.0
        %1585 = vmatprep.subr.mxu0 0.0
        %1586 = vmatpush1.xpose.msra.mxu0 0.0
        %1587 = vmatprep.subr.mxu0 0.0
        %1588 = vmatpush1.xpose.msra.mxu0 0.0
        %1589 = vmatprep.subr.mxu0 0.0
        %1590 = vmatpush1.xpose.msra.mxu0 0.0
        %1591 = vmatprep.subr.mxu0 0.0
        %1592 = vmatpush1.xpose.msra.mxu0 0.0
        %1593 = vmatprep.subr.mxu0 0.0
        %1594 = vmatpush1.xpose.msra.mxu0 0.0
        %1595 = vmatprep.subr.mxu0 0.0
        %1596 = vmatpush1.xpose.msra.mxu0 0.0
        %1597 = vmatprep.subr.mxu0 0.0
        %1598 = vmatpush1.xpose.msra.mxu0 0.0
        %1599 = vmatprep.subr.mxu0 0.0
        %1600 = vmatpush1.xpose.msra.mxu0 0.0
        %1601 = vmatprep.subr.mxu0 0.0
        %1602 = vmatpush1.xpose.msra.mxu0 0.0
        %1603 = vmatprep.subr.mxu0 0.0
        %1604 = vmatpush1.xpose.msra.mxu0 0.0
        %1605 = vmatprep.subr.mxu0 0.0
        %1606 = vmatpush1.xpose.msra.mxu0 0.0
        %1607 = vmatprep.subr.mxu0 0.0
        %1608 = vmatpush1.xpose.msra.mxu0 0.0
        %1609 = vmatprep.subr.mxu0 0.0
        %1610 = vmatpush1.xpose.msra.mxu0 0.0
        %1611 = vmatprep.subr.mxu0 0.0
        %1612 = vmatpush1.xpose.msra.mxu0 0.0
        %1613 = vmatprep.subr.mxu0 0.0
        %1614 = vmatpush1.xpose.msra.mxu0 0.0
        %1615 = vmatprep.subr.mxu0 0.0
        %1616 = vmatpush1.xpose.msra.mxu0 0.0
        %1617 = vmatprep.subr.mxu0 0.0
        %1618 = vmatpush1.xpose.msra.mxu0 0.0
        %1619 = vmatprep.subr.mxu0 0.0
        %1620 = vmatpush1.xpose.msra.mxu0 0.0
        %1621 = vmatprep.subr.mxu0 0.0
        %1622 = vmatpush1.xpose.msra.mxu0 0.0
        %1623 = vmatprep.subr.mxu0 0.0
        %1624 = vmatpush1.xpose.msra.mxu0 0.0
        %1625 = vmatprep.subr.mxu0 0.0
        %1626 = vmatpush1.xpose.msra.mxu0 0.0
        %1627 = vmatprep.subr.mxu0 0.0
        %1628 = vmatpush1.xpose.msra.mxu0 0.0
        %1629 = vmatprep.subr.mxu0 0.0
        %1630 = vmatpush1.xpose.msra.mxu0 0.0
        %1631 = vmatprep.subr.mxu0 0.0
        %1632 = vmatpush1.xpose.msra.mxu0 0.0
        %1633 = vmatprep.subr.mxu0 0.0
        %1634 = vmatpush1.xpose.msra.mxu0 0.0
        %1635 = vmatprep.subr.mxu0 0.0
        %1636 = vmatpush1.xpose.msra.mxu0 0.0
        %1637 = vmatprep.mubr.f32.mxu0 %v287
        %1638 = vmatmul.mubr.f32.gmra.mrb[0].mxu0 %v286
        %v1639 = vpop.f32.mrb[0].mxu0
        %v1640 = vadd.f32 %v1570, %v1639
        %v1641 = vpop.f32.mrb[0].mxu0
        %1642 = vdwg.mxu0
        %1643 = vmatprep.subr.mxu0 %v385
        %1644 = vmatpush1.xpose.msra.mxu0 %v384
        %1645 = vmatprep.subr.mxu0 0.0
        %1646 = vmatpush1.xpose.msra.mxu0 0.0
        %1647 = vmatprep.subr.mxu0 0.0
        %1648 = vmatpush1.xpose.msra.mxu0 0.0
        %1649 = vmatprep.subr.mxu0 0.0
        %1650 = vmatpush1.xpose.msra.mxu0 0.0
        %1651 = vmatprep.subr.mxu0 0.0
        %1652 = vmatpush1.xpose.msra.mxu0 0.0
        %1653 = vmatprep.subr.mxu0 0.0
        %1654 = vmatpush1.xpose.msra.mxu0 0.0
        %1655 = vmatprep.subr.mxu0 0.0
        %1656 = vmatpush1.xpose.msra.mxu0 0.0
        %1657 = vmatprep.subr.mxu0 0.0
        %1658 = vmatpush1.xpose.msra.mxu0 0.0
        %1659 = vmatprep.subr.mxu0 0.0
        %1660 = vmatpush1.xpose.msra.mxu0 0.0
        %1661 = vmatprep.subr.mxu0 0.0
        %1662 = vmatpush1.xpose.msra.mxu0 0.0
        %1663 = vmatprep.subr.mxu0 0.0
        %1664 = vmatpush1.xpose.msra.mxu0 0.0
        %1665 = vmatprep.subr.mxu0 0.0
        %1666 = vmatpush1.xpose.msra.mxu0 0.0
        %1667 = vmatprep.subr.mxu0 0.0
        %1668 = vmatpush1.xpose.msra.mxu0 0.0
        %1669 = vmatprep.subr.mxu0 0.0
        %1670 = vmatpush1.xpose.msra.mxu0 0.0
        %1671 = vmatprep.subr.mxu0 0.0
        %1672 = vmatpush1.xpose.msra.mxu0 0.0
        %1673 = vmatprep.subr.mxu0 0.0
        %1674 = vmatpush1.xpose.msra.mxu0 0.0
        %1675 = vmatprep.subr.mxu0 0.0
        %1676 = vmatpush1.xpose.msra.mxu0 0.0
        %1677 = vmatprep.subr.mxu0 0.0
        %1678 = vmatpush1.xpose.msra.mxu0 0.0
        %1679 = vmatprep.subr.mxu0 0.0
        %1680 = vmatpush1.xpose.msra.mxu0 0.0
        %1681 = vmatprep.subr.mxu0 0.0
        %1682 = vmatpush1.xpose.msra.mxu0 0.0
        %1683 = vmatprep.subr.mxu0 0.0
        %1684 = vmatpush1.xpose.msra.mxu0 0.0
        %1685 = vmatprep.subr.mxu0 0.0
        %1686 = vmatpush1.xpose.msra.mxu0 0.0
        %1687 = vmatprep.subr.mxu0 0.0
        %1688 = vmatpush1.xpose.msra.mxu0 0.0
        %1689 = vmatprep.subr.mxu0 0.0
        %1690 = vmatpush1.xpose.msra.mxu0 0.0
        %1691 = vmatprep.subr.mxu0 0.0
        %1692 = vmatpush1.xpose.msra.mxu0 0.0
        %1693 = vmatprep.subr.mxu0 0.0
        %1694 = vmatpush1.xpose.msra.mxu0 0.0
        %1695 = vmatprep.subr.mxu0 0.0
        %1696 = vmatpush1.xpose.msra.mxu0 0.0
        %1697 = vmatprep.subr.mxu0 0.0
        %1698 = vmatpush1.xpose.msra.mxu0 0.0
        %1699 = vmatprep.subr.mxu0 0.0
        %1700 = vmatpush1.xpose.msra.mxu0 0.0
        %1701 = vmatprep.subr.mxu0 0.0
        %1702 = vmatpush1.xpose.msra.mxu0 0.0
        %1703 = vmatprep.subr.mxu0 0.0
        %1704 = vmatpush1.xpose.msra.mxu0 0.0
        %1705 = vmatprep.subr.mxu0 0.0
        %1706 = vmatpush1.xpose.msra.mxu0 0.0
        %1707 = vmatprep.mubr.f32.mxu0 %v289
        %1708 = vmatmul.mubr.f32.gmra.mrb[0].mxu0 %v288
        %v1709 = vpop.f32.mrb[0].mxu0
        %v1710 = vadd.f32 %v1640, %v1709
        %v1711 = vpop.f32.mrb[0].mxu0
        %1712 = vdwg.mxu0
        %1713 = vmatprep.subr.mxu0 %v387
        %1714 = vmatpush1.xpose.msra.mxu0 %v386
        %1715 = vmatprep.subr.mxu0 0.0
        %1716 = vmatpush1.xpose.msra.mxu0 0.0
        %1717 = vmatprep.subr.mxu0 0.0
        %1718 = vmatpush1.xpose.msra.mxu0 0.0
        %1719 = vmatprep.subr.mxu0 0.0
        %1720 = vmatpush1.xpose.msra.mxu0 0.0
        %1721 = vmatprep.subr.mxu0 0.0
        %1722 = vmatpush1.xpose.msra.mxu0 0.0
        %1723 = vmatprep.subr.mxu0 0.0
        %1724 = vmatpush1.xpose.msra.mxu0 0.0
        %1725 = vmatprep.subr.mxu0 0.0
        %1726 = vmatpush1.xpose.msra.mxu0 0.0
        %1727 = vmatprep.subr.mxu0 0.0
        %1728 = vmatpush1.xpose.msra.mxu0 0.0
        %1729 = vmatprep.subr.mxu0 0.0
        %1730 = vmatpush1.xpose.msra.mxu0 0.0
        %1731 = vmatprep.subr.mxu0 0.0
        %1732 = vmatpush1.xpose.msra.mxu0 0.0
        %1733 = vmatprep.subr.mxu0 0.0
        %1734 = vmatpush1.xpose.msra.mxu0 0.0
        %1735 = vmatprep.subr.mxu0 0.0
        %1736 = vmatpush1.xpose.msra.mxu0 0.0
        %1737 = vmatprep.subr.mxu0 0.0
        %1738 = vmatpush1.xpose.msra.mxu0 0.0
        %1739 = vmatprep.subr.mxu0 0.0
        %1740 = vmatpush1.xpose.msra.mxu0 0.0
        %1741 = vmatprep.subr.mxu0 0.0
        %1742 = vmatpush1.xpose.msra.mxu0 0.0
        %1743 = vmatprep.subr.mxu0 0.0
        %1744 = vmatpush1.xpose.msra.mxu0 0.0
        %1745 = vmatprep.subr.mxu0 0.0
        %1746 = vmatpush1.xpose.msra.mxu0 0.0
        %1747 = vmatprep.subr.mxu0 0.0
        %1748 = vmatpush1.xpose.msra.mxu0 0.0
        %1749 = vmatprep.subr.mxu0 0.0
        %1750 = vmatpush1.xpose.msra.mxu0 0.0
        %1751 = vmatprep.subr.mxu0 0.0
        %1752 = vmatpush1.xpose.msra.mxu0 0.0
        %1753 = vmatprep.subr.mxu0 0.0
        %1754 = vmatpush1.xpose.msra.mxu0 0.0
        %1755 = vmatprep.subr.mxu0 0.0
        %1756 = vmatpush1.xpose.msra.mxu0 0.0
        %1757 = vmatprep.subr.mxu0 0.0
        %1758 = vmatpush1.xpose.msra.mxu0 0.0
        %1759 = vmatprep.subr.mxu0 0.0
        %1760 = vmatpush1.xpose.msra.mxu0 0.0
        %1761 = vmatprep.subr.mxu0 0.0
        %1762 = vmatpush1.xpose.msra.mxu0 0.0
        %1763 = vmatprep.subr.mxu0 0.0
        %1764 = vmatpush1.xpose.msra.mxu0 0.0
        %1765 = vmatprep.subr.mxu0 0.0
        %1766 = vmatpush1.xpose.msra.mxu0 0.0
        %1767 = vmatprep.subr.mxu0 0.0
        %1768 = vmatpush1.xpose.msra.mxu0 0.0
        %1769 = vmatprep.subr.mxu0 0.0
        %1770 = vmatpush1.xpose.msra.mxu0 0.0
        %1771 = vmatprep.subr.mxu0 0.0
        %1772 = vmatpush1.xpose.msra.mxu0 0.0
        %1773 = vmatprep.subr.mxu0 0.0
        %1774 = vmatpush1.xpose.msra.mxu0 0.0
        %1775 = vmatprep.subr.mxu0 0.0
        %1776 = vmatpush1.xpose.msra.mxu0 0.0
        %1777 = vmatprep.mubr.f32.mxu0 %v291
        %1778 = vmatmul.mubr.f32.gmra.mrb[0].mxu0 %v290
        %v1779 = vpop.f32.mrb[0].mxu0
        %v1780 = vadd.f32 %v1710, %v1779
        %v1781 = vpop.f32.mrb[0].mxu0
        %1782 = vdwg.mxu0
        %1783 = vmatprep.subr.mxu0 %v389
        %1784 = vmatpush1.xpose.msra.mxu0 %v388
        %1785 = vmatprep.subr.mxu0 0.0
        %1786 = vmatpush1.xpose.msra.mxu0 0.0
        %1787 = vmatprep.subr.mxu0 0.0
        %1788 = vmatpush1.xpose.msra.mxu0 0.0
        %1789 = vmatprep.subr.mxu0 0.0
        %1790 = vmatpush1.xpose.msra.mxu0 0.0
        %1791 = vmatprep.subr.mxu0 0.0
        %1792 = vmatpush1.xpose.msra.mxu0 0.0
        %1793 = vmatprep.subr.mxu0 0.0
        %1794 = vmatpush1.xpose.msra.mxu0 0.0
        %1795 = vmatprep.subr.mxu0 0.0
        %1796 = vmatpush1.xpose.msra.mxu0 0.0
        %1797 = vmatprep.subr.mxu0 0.0
        %1798 = vmatpush1.xpose.msra.mxu0 0.0
        %1799 = vmatprep.subr.mxu0 0.0
        %1800 = vmatpush1.xpose.msra.mxu0 0.0
        %1801 = vmatprep.subr.mxu0 0.0
        %1802 = vmatpush1.xpose.msra.mxu0 0.0
        %1803 = vmatprep.subr.mxu0 0.0
        %1804 = vmatpush1.xpose.msra.mxu0 0.0
        %1805 = vmatprep.subr.mxu0 0.0
        %1806 = vmatpush1.xpose.msra.mxu0 0.0
        %1807 = vmatprep.subr.mxu0 0.0
        %1808 = vmatpush1.xpose.msra.mxu0 0.0
        %1809 = vmatprep.subr.mxu0 0.0
        %1810 = vmatpush1.xpose.msra.mxu0 0.0
        %1811 = vmatprep.subr.mxu0 0.0
        %1812 = vmatpush1.xpose.msra.mxu0 0.0
        %1813 = vmatprep.subr.mxu0 0.0
        %1814 = vmatpush1.xpose.msra.mxu0 0.0
        %1815 = vmatprep.subr.mxu0 0.0
        %1816 = vmatpush1.xpose.msra.mxu0 0.0
        %1817 = vmatprep.subr.mxu0 0.0
        %1818 = vmatpush1.xpose.msra.mxu0 0.0
        %1819 = vmatprep.subr.mxu0 0.0
        %1820 = vmatpush1.xpose.msra.mxu0 0.0
        %1821 = vmatprep.subr.mxu0 0.0
        %1822 = vmatpush1.xpose.msra.mxu0 0.0
        %1823 = vmatprep.subr.mxu0 0.0
        %1824 = vmatpush1.xpose.msra.mxu0 0.0
        %1825 = vmatprep.subr.mxu0 0.0
        %1826 = vmatpush1.xpose.msra.mxu0 0.0
        %1827 = vmatprep.subr.mxu0 0.0
        %1828 = vmatpush1.xpose.msra.mxu0 0.0
        %1829 = vmatprep.subr.mxu0 0.0
        %1830 = vmatpush1.xpose.msra.mxu0 0.0
        %1831 = vmatprep.subr.mxu0 0.0
        %1832 = vmatpush1.xpose.msra.mxu0 0.0
        %1833 = vmatprep.subr.mxu0 0.0
        %1834 = vmatpush1.xpose.msra.mxu0 0.0
        %1835 = vmatprep.subr.mxu0 0.0
        %1836 = vmatpush1.xpose.msra.mxu0 0.0
        %1837 = vmatprep.subr.mxu0 0.0
        %1838 = vmatpush1.xpose.msra.mxu0 0.0
        %1839 = vmatprep.subr.mxu0 0.0
        %1840 = vmatpush1.xpose.msra.mxu0 0.0
        %1841 = vmatprep.subr.mxu0 0.0
        %1842 = vmatpush1.xpose.msra.mxu0 0.0
        %1843 = vmatprep.subr.mxu0 0.0
        %1844 = vmatpush1.xpose.msra.mxu0 0.0
        %1845 = vmatprep.subr.mxu0 0.0
        %1846 = vmatpush1.xpose.msra.mxu0 0.0
        %1847 = vmatprep.mubr.f32.mxu0 %v293
        %1848 = vmatmul.mubr.f32.gmra.mrb[0].mxu0 %v292
        %v1849 = vpop.f32.mrb[0].mxu0
        %v1850 = vadd.f32 %v1780, %v1849
        %v1851 = vpop.f32.mrb[0].mxu0
        %1852 = vdwg.mxu0
        %1853 = vmatprep.subr.mxu0 %v391
        %1854 = vmatpush1.xpose.msra.mxu0 %v390
        %1855 = vmatprep.subr.mxu0 0.0
        %1856 = vmatpush1.xpose.msra.mxu0 0.0
        %1857 = vmatprep.subr.mxu0 0.0
        %1858 = vmatpush1.xpose.msra.mxu0 0.0
        %1859 = vmatprep.subr.mxu0 0.0
        %1860 = vmatpush1.xpose.msra.mxu0 0.0
        %1861 = vmatprep.subr.mxu0 0.0
        %1862 = vmatpush1.xpose.msra.mxu0 0.0
        %1863 = vmatprep.subr.mxu0 0.0
        %1864 = vmatpush1.xpose.msra.mxu0 0.0
        %1865 = vmatprep.subr.mxu0 0.0
        %1866 = vmatpush1.xpose.msra.mxu0 0.0
        %1867 = vmatprep.subr.mxu0 0.0
        %1868 = vmatpush1.xpose.msra.mxu0 0.0
        %1869 = vmatprep.subr.mxu0 0.0
        %1870 = vmatpush1.xpose.msra.mxu0 0.0
        %1871 = vmatprep.subr.mxu0 0.0
        %1872 = vmatpush1.xpose.msra.mxu0 0.0
        %1873 = vmatprep.subr.mxu0 0.0
        %1874 = vmatpush1.xpose.msra.mxu0 0.0
        %1875 = vmatprep.subr.mxu0 0.0
        %1876 = vmatpush1.xpose.msra.mxu0 0.0
        %1877 = vmatprep.subr.mxu0 0.0
        %1878 = vmatpush1.xpose.msra.mxu0 0.0
        %1879 = vmatprep.subr.mxu0 0.0
        %1880 = vmatpush1.xpose.msra.mxu0 0.0
        %1881 = vmatprep.subr.mxu0 0.0
        %1882 = vmatpush1.xpose.msra.mxu0 0.0
        %1883 = vmatprep.subr.mxu0 0.0
        %1884 = vmatpush1.xpose.msra.mxu0 0.0
        %1885 = vmatprep.subr.mxu0 0.0
        %1886 = vmatpush1.xpose.msra.mxu0 0.0
        %1887 = vmatprep.subr.mxu0 0.0
        %1888 = vmatpush1.xpose.msra.mxu0 0.0
        %1889 = vmatprep.subr.mxu0 0.0
        %1890 = vmatpush1.xpose.msra.mxu0 0.0
        %1891 = vmatprep.subr.mxu0 0.0
        %1892 = vmatpush1.xpose.msra.mxu0 0.0
        %1893 = vmatprep.subr.mxu0 0.0
        %1894 = vmatpush1.xpose.msra.mxu0 0.0
        %1895 = vmatprep.subr.mxu0 0.0
        %1896 = vmatpush1.xpose.msra.mxu0 0.0
        %1897 = vmatprep.subr.mxu0 0.0
        %1898 = vmatpush1.xpose.msra.mxu0 0.0
        %1899 = vmatprep.subr.mxu0 0.0
        %1900 = vmatpush1.xpose.msra.mxu0 0.0
        %1901 = vmatprep.subr.mxu0 0.0
        %1902 = vmatpush1.xpose.msra.mxu0 0.0
        %1903 = vmatprep.subr.mxu0 0.0
        %1904 = vmatpush1.xpose.msra.mxu0 0.0
        %1905 = vmatprep.subr.mxu0 0.0
        %1906 = vmatpush1.xpose.msra.mxu0 0.0
        %1907 = vmatprep.subr.mxu0 0.0
        %1908 = vmatpush1.xpose.msra.mxu0 0.0
        %1909 = vmatprep.subr.mxu0 0.0
        %1910 = vmatpush1.xpose.msra.mxu0 0.0
        %1911 = vmatprep.subr.mxu0 0.0
        %1912 = vmatpush1.xpose.msra.mxu0 0.0
        %1913 = vmatprep.subr.mxu0 0.0
        %1914 = vmatpush1.xpose.msra.mxu0 0.0
        %1915 = vmatprep.subr.mxu0 0.0
        %1916 = vmatpush1.xpose.msra.mxu0 0.0
        %1917 = vmatprep.mubr.f32.mxu0 %v295
        %1918 = vmatmul.mubr.f32.gmra.mrb[0].mxu0 %v294
        %v1919 = vpop.f32.mrb[0].mxu0
        %v1920 = vadd.f32 %v1850, %v1919
        %v1921 = vpop.f32.mrb[0].mxu0
        %1922 = vdwg.mxu0
        %1923 = vmatprep.subr.mxu0 %v393
        %1924 = vmatpush1.xpose.msra.mxu0 %v392
        %1925 = vmatprep.subr.mxu0 0.0
        %1926 = vmatpush1.xpose.msra.mxu0 0.0
        %1927 = vmatprep.subr.mxu0 0.0
        %1928 = vmatpush1.xpose.msra.mxu0 0.0
        %1929 = vmatprep.subr.mxu0 0.0
        %1930 = vmatpush1.xpose.msra.mxu0 0.0
        %1931 = vmatprep.subr.mxu0 0.0
        %1932 = vmatpush1.xpose.msra.mxu0 0.0
        %1933 = vmatprep.subr.mxu0 0.0
        %1934 = vmatpush1.xpose.msra.mxu0 0.0
        %1935 = vmatprep.subr.mxu0 0.0
        %1936 = vmatpush1.xpose.msra.mxu0 0.0
        %1937 = vmatprep.subr.mxu0 0.0
        %1938 = vmatpush1.xpose.msra.mxu0 0.0
        %1939 = vmatprep.subr.mxu0 0.0
        %1940 = vmatpush1.xpose.msra.mxu0 0.0
        %1941 = vmatprep.subr.mxu0 0.0
        %1942 = vmatpush1.xpose.msra.mxu0 0.0
        %1943 = vmatprep.subr.mxu0 0.0
        %1944 = vmatpush1.xpose.msra.mxu0 0.0
        %1945 = vmatprep.subr.mxu0 0.0
        %1946 = vmatpush1.xpose.msra.mxu0 0.0
        %1947 = vmatprep.subr.mxu0 0.0
        %1948 = vmatpush1.xpose.msra.mxu0 0.0
        %1949 = vmatprep.subr.mxu0 0.0
        %1950 = vmatpush1.xpose.msra.mxu0 0.0
        %1951 = vmatprep.subr.mxu0 0.0
        %1952 = vmatpush1.xpose.msra.mxu0 0.0
        %1953 = vmatprep.subr.mxu0 0.0
        %1954 = vmatpush1.xpose.msra.mxu0 0.0
        %1955 = vmatprep.subr.mxu0 0.0
        %1956 = vmatpush1.xpose.msra.mxu0 0.0
        %1957 = vmatprep.subr.mxu0 0.0
        %1958 = vmatpush1.xpose.msra.mxu0 0.0
        %1959 = vmatprep.subr.mxu0 0.0
        %1960 = vmatpush1.xpose.msra.mxu0 0.0
        %1961 = vmatprep.subr.mxu0 0.0
        %1962 = vmatpush1.xpose.msra.mxu0 0.0
        %1963 = vmatprep.subr.mxu0 0.0
        %1964 = vmatpush1.xpose.msra.mxu0 0.0
        %1965 = vmatprep.subr.mxu0 0.0
        %1966 = vmatpush1.xpose.msra.mxu0 0.0
        %1967 = vmatprep.subr.mxu0 0.0
        %1968 = vmatpush1.xpose.msra.mxu0 0.0
        %1969 = vmatprep.subr.mxu0 0.0
        %1970 = vmatpush1.xpose.msra.mxu0 0.0
        %1971 = vmatprep.subr.mxu0 0.0
        %1972 = vmatpush1.xpose.msra.mxu0 0.0
        %1973 = vmatprep.subr.mxu0 0.0
        %1974 = vmatpush1.xpose.msra.mxu0 0.0
        %1975 = vmatprep.subr.mxu0 0.0
        %1976 = vmatpush1.xpose.msra.mxu0 0.0
        %1977 = vmatprep.subr.mxu0 0.0
        %1978 = vmatpush1.xpose.msra.mxu0 0.0
        %1979 = vmatprep.subr.mxu0 0.0
        %1980 = vmatpush1.xpose.msra.mxu0 0.0
        %1981 = vmatprep.subr.mxu0 0.0
        %1982 = vmatpush1.xpose.msra.mxu0 0.0
        %1983 = vmatprep.subr.mxu0 0.0
        %1984 = vmatpush1.xpose.msra.mxu0 0.0
        %1985 = vmatprep.subr.mxu0 0.0
        %1986 = vmatpush1.xpose.msra.mxu0 0.0
        %1987 = vmatprep.mubr.f32.mxu0 %v297
        %1988 = vmatmul.mubr.f32.gmra.mrb[0].mxu0 %v296
        %v1989 = vpop.f32.mrb[0].mxu0
        %v1990 = vadd.f32 %v1920, %v1989
        %v1991 = vpop.f32.mrb[0].mxu0
        %1992 = vdwg.mxu0
        %1993 = vmatprep.subr.mxu0 %v395
        %1994 = vmatpush1.xpose.msra.mxu0 %v394
        %1995 = vmatprep.subr.mxu0 0.0
        %1996 = vmatpush1.xpose.msra.mxu0 0.0
        %1997 = vmatprep.subr.mxu0 0.0
        %1998 = vmatpush1.xpose.msra.mxu0 0.0
        %1999 = vmatprep.subr.mxu0 0.0
        %2000 = vmatpush1.xpose.msra.mxu0 0.0
        %2001 = vmatprep.subr.mxu0 0.0
        %2002 = vmatpush1.xpose.msra.mxu0 0.0
        %2003 = vmatprep.subr.mxu0 0.0
        %2004 = vmatpush1.xpose.msra.mxu0 0.0
        %2005 = vmatprep.subr.mxu0 0.0
        %2006 = vmatpush1.xpose.msra.mxu0 0.0
        %2007 = vmatprep.subr.mxu0 0.0
        %2008 = vmatpush1.xpose.msra.mxu0 0.0
        %2009 = vmatprep.subr.mxu0 0.0
        %2010 = vmatpush1.xpose.msra.mxu0 0.0
        %2011 = vmatprep.subr.mxu0 0.0
        %2012 = vmatpush1.xpose.msra.mxu0 0.0
        %2013 = vmatprep.subr.mxu0 0.0
        %2014 = vmatpush1.xpose.msra.mxu0 0.0
        %2015 = vmatprep.subr.mxu0 0.0
        %2016 = vmatpush1.xpose.msra.mxu0 0.0
        %2017 = vmatprep.subr.mxu0 0.0
        %2018 = vmatpush1.xpose.msra.mxu0 0.0
        %2019 = vmatprep.subr.mxu0 0.0
        %2020 = vmatpush1.xpose.msra.mxu0 0.0
        %2021 = vmatprep.subr.mxu0 0.0
        %2022 = vmatpush1.xpose.msra.mxu0 0.0
        %2023 = vmatprep.subr.mxu0 0.0
        %2024 = vmatpush1.xpose.msra.mxu0 0.0
        %2025 = vmatprep.subr.mxu0 0.0
        %2026 = vmatpush1.xpose.msra.mxu0 0.0
        %2027 = vmatprep.subr.mxu0 0.0
        %2028 = vmatpush1.xpose.msra.mxu0 0.0
        %2029 = vmatprep.subr.mxu0 0.0
        %2030 = vmatpush1.xpose.msra.mxu0 0.0
        %2031 = vmatprep.subr.mxu0 0.0
        %2032 = vmatpush1.xpose.msra.mxu0 0.0
        %2033 = vmatprep.subr.mxu0 0.0
        %2034 = vmatpush1.xpose.msra.mxu0 0.0
        %2035 = vmatprep.subr.mxu0 0.0
        %2036 = vmatpush1.xpose.msra.mxu0 0.0
        %2037 = vmatprep.subr.mxu0 0.0
        %2038 = vmatpush1.xpose.msra.mxu0 0.0
        %2039 = vmatprep.subr.mxu0 0.0
        %2040 = vmatpush1.xpose.msra.mxu0 0.0
        %2041 = vmatprep.subr.mxu0 0.0
        %2042 = vmatpush1.xpose.msra.mxu0 0.0
        %2043 = vmatprep.subr.mxu0 0.0
        %2044 = vmatpush1.xpose.msra.mxu0 0.0
        %2045 = vmatprep.subr.mxu0 0.0
        %2046 = vmatpush1.xpose.msra.mxu0 0.0
        %2047 = vmatprep.subr.mxu0 0.0
        %2048 = vmatpush1.xpose.msra.mxu0 0.0
        %2049 = vmatprep.subr.mxu0 0.0
        %2050 = vmatpush1.xpose.msra.mxu0 0.0
        %2051 = vmatprep.subr.mxu0 0.0
        %2052 = vmatpush1.xpose.msra.mxu0 0.0
        %2053 = vmatprep.subr.mxu0 0.0
        %2054 = vmatpush1.xpose.msra.mxu0 0.0
        %2055 = vmatprep.subr.mxu0 0.0
        %2056 = vmatpush1.xpose.msra.mxu0 0.0
        %2057 = vmatprep.mubr.f32.mxu0 %v299
        %2058 = vmatmul.mubr.f32.gmra.mrb[0].mxu0 %v298
        %v2059 = vpop.f32.mrb[0].mxu0
        %v2060 = vadd.f32 %v1990, %v2059
        %v2061 = vpop.f32.mrb[0].mxu0
        %2062 = vdwg.mxu0
        %2063 = vmatprep.subr.mxu0 %v397
        %2064 = vmatpush1.xpose.msra.mxu0 %v396
        %2065 = vmatprep.subr.mxu0 0.0
        %2066 = vmatpush1.xpose.msra.mxu0 0.0
        %2067 = vmatprep.subr.mxu0 0.0
        %2068 = vmatpush1.xpose.msra.mxu0 0.0
        %2069 = vmatprep.subr.mxu0 0.0
        %2070 = vmatpush1.xpose.msra.mxu0 0.0
        %2071 = vmatprep.subr.mxu0 0.0
        %2072 = vmatpush1.xpose.msra.mxu0 0.0
        %2073 = vmatprep.subr.mxu0 0.0
        %2074 = vmatpush1.xpose.msra.mxu0 0.0
        %2075 = vmatprep.subr.mxu0 0.0
        %2076 = vmatpush1.xpose.msra.mxu0 0.0
        %2077 = vmatprep.subr.mxu0 0.0
        %2078 = vmatpush1.xpose.msra.mxu0 0.0
        %2079 = vmatprep.subr.mxu0 0.0
        %2080 = vmatpush1.xpose.msra.mxu0 0.0
        %2081 = vmatprep.subr.mxu0 0.0
        %2082 = vmatpush1.xpose.msra.mxu0 0.0
        %2083 = vmatprep.subr.mxu0 0.0
        %2084 = vmatpush1.xpose.msra.mxu0 0.0
        %2085 = vmatprep.subr.mxu0 0.0
        %2086 = vmatpush1.xpose.msra.mxu0 0.0
        %2087 = vmatprep.subr.mxu0 0.0
        %2088 = vmatpush1.xpose.msra.mxu0 0.0
        %2089 = vmatprep.subr.mxu0 0.0
        %2090 = vmatpush1.xpose.msra.mxu0 0.0
        %2091 = vmatprep.subr.mxu0 0.0
        %2092 = vmatpush1.xpose.msra.mxu0 0.0
        %2093 = vmatprep.subr.mxu0 0.0
        %2094 = vmatpush1.xpose.msra.mxu0 0.0
        %2095 = vmatprep.subr.mxu0 0.0
        %2096 = vmatpush1.xpose.msra.mxu0 0.0
        %2097 = vmatprep.subr.mxu0 0.0
        %2098 = vmatpush1.xpose.msra.mxu0 0.0
        %2099 = vmatprep.subr.mxu0 0.0
        %2100 = vmatpush1.xpose.msra.mxu0 0.0
        %2101 = vmatprep.subr.mxu0 0.0
        %2102 = vmatpush1.xpose.msra.mxu0 0.0
        %2103 = vmatprep.subr.mxu0 0.0
        %2104 = vmatpush1.xpose.msra.mxu0 0.0
        %2105 = vmatprep.subr.mxu0 0.0
        %2106 = vmatpush1.xpose.msra.mxu0 0.0
        %2107 = vmatprep.subr.mxu0 0.0
        %2108 = vmatpush1.xpose.msra.mxu0 0.0
        %2109 = vmatprep.subr.mxu0 0.0
        %2110 = vmatpush1.xpose.msra.mxu0 0.0
        %2111 = vmatprep.subr.mxu0 0.0
        %2112 = vmatpush1.xpose.msra.mxu0 0.0
        %2113 = vmatprep.subr.mxu0 0.0
        %2114 = vmatpush1.xpose.msra.mxu0 0.0
        %2115 = vmatprep.subr.mxu0 0.0
        %2116 = vmatpush1.xpose.msra.mxu0 0.0
        %2117 = vmatprep.subr.mxu0 0.0
        %2118 = vmatpush1.xpose.msra.mxu0 0.0
        %2119 = vmatprep.subr.mxu0 0.0
        %2120 = vmatpush1.xpose.msra.mxu0 0.0
        %2121 = vmatprep.subr.mxu0 0.0
        %2122 = vmatpush1.xpose.msra.mxu0 0.0
        %2123 = vmatprep.subr.mxu0 0.0
        %2124 = vmatpush1.xpose.msra.mxu0 0.0
        %2125 = vmatprep.subr.mxu0 0.0
        %2126 = vmatpush1.xpose.msra.mxu0 0.0
        %2127 = vmatprep.mubr.f32.mxu0 %v301
        %2128 = vmatmul.mubr.f32.gmra.mrb[0].mxu0 %v300
        %v2129 = vpop.f32.mrb[0].mxu0
        %v2130 = vadd.f32 %v2060, %v2129
        %v2131 = vpop.f32.mrb[0].mxu0
        %2132 = vdwg.mxu0
        %2133 = vmatprep.subr.mxu0 %v399
        %2134 = vmatpush1.xpose.msra.mxu0 %v398
        %2135 = vmatprep.subr.mxu0 0.0
        %2136 = vmatpush1.xpose.msra.mxu0 0.0
        %2137 = vmatprep.subr.mxu0 0.0
        %2138 = vmatpush1.xpose.msra.mxu0 0.0
        %2139 = vmatprep.subr.mxu0 0.0
        %2140 = vmatpush1.xpose.msra.mxu0 0.0
        %2141 = vmatprep.subr.mxu0 0.0
        %2142 = vmatpush1.xpose.msra.mxu0 0.0
        %2143 = vmatprep.subr.mxu0 0.0
        %2144 = vmatpush1.xpose.msra.mxu0 0.0
        %2145 = vmatprep.subr.mxu0 0.0
        %2146 = vmatpush1.xpose.msra.mxu0 0.0
        %2147 = vmatprep.subr.mxu0 0.0
        %2148 = vmatpush1.xpose.msra.mxu0 0.0
        %2149 = vmatprep.subr.mxu0 0.0
        %2150 = vmatpush1.xpose.msra.mxu0 0.0
        %2151 = vmatprep.subr.mxu0 0.0
        %2152 = vmatpush1.xpose.msra.mxu0 0.0
        %2153 = vmatprep.subr.mxu0 0.0
        %2154 = vmatpush1.xpose.msra.mxu0 0.0
        %2155 = vmatprep.subr.mxu0 0.0
        %2156 = vmatpush1.xpose.msra.mxu0 0.0
        %2157 = vmatprep.subr.mxu0 0.0
        %2158 = vmatpush1.xpose.msra.mxu0 0.0
        %2159 = vmatprep.subr.mxu0 0.0
        %2160 = vmatpush1.xpose.msra.mxu0 0.0
        %2161 = vmatprep.subr.mxu0 0.0
        %2162 = vmatpush1.xpose.msra.mxu0 0.0
        %2163 = vmatprep.subr.mxu0 0.0
        %2164 = vmatpush1.xpose.msra.mxu0 0.0
        %2165 = vmatprep.subr.mxu0 0.0
        %2166 = vmatpush1.xpose.msra.mxu0 0.0
        %2167 = vmatprep.subr.mxu0 0.0
        %2168 = vmatpush1.xpose.msra.mxu0 0.0
        %2169 = vmatprep.subr.mxu0 0.0
        %2170 = vmatpush1.xpose.msra.mxu0 0.0
        %2171 = vmatprep.subr.mxu0 0.0
        %2172 = vmatpush1.xpose.msra.mxu0 0.0
        %2173 = vmatprep.subr.mxu0 0.0
        %2174 = vmatpush1.xpose.msra.mxu0 0.0
        %2175 = vmatprep.subr.mxu0 0.0
        %2176 = vmatpush1.xpose.msra.mxu0 0.0
        %2177 = vmatprep.subr.mxu0 0.0
        %2178 = vmatpush1.xpose.msra.mxu0 0.0
        %2179 = vmatprep.subr.mxu0 0.0
        %2180 = vmatpush1.xpose.msra.mxu0 0.0
        %2181 = vmatprep.subr.mxu0 0.0
        %2182 = vmatpush1.xpose.msra.mxu0 0.0
        %2183 = vmatprep.subr.mxu0 0.0
        %2184 = vmatpush1.xpose.msra.mxu0 0.0
        %2185 = vmatprep.subr.mxu0 0.0
        %2186 = vmatpush1.xpose.msra.mxu0 0.0
        %2187 = vmatprep.subr.mxu0 0.0
        %2188 = vmatpush1.xpose.msra.mxu0 0.0
        %2189 = vmatprep.subr.mxu0 0.0
        %2190 = vmatpush1.xpose.msra.mxu0 0.0
        %2191 = vmatprep.subr.mxu0 0.0
        %2192 = vmatpush1.xpose.msra.mxu0 0.0
        %2193 = vmatprep.subr.mxu0 0.0
        %2194 = vmatpush1.xpose.msra.mxu0 0.0
        %2195 = vmatprep.subr.mxu0 0.0
        %2196 = vmatpush1.xpose.msra.mxu0 0.0
        %2197 = vmatprep.mubr.f32.mxu0 %v303
        %2198 = vmatmul.mubr.f32.gmra.mrb[0].mxu0 %v302
        %v2199 = vpop.f32.mrb[0].mxu0
        %v2200 = vadd.f32 %v2130, %v2199
        %v2201 = vpop.f32.mrb[0].mxu0
        %2202 = vdwg.mxu0
        %2203 = vmatprep.subr.mxu0 %v401
        %2204 = vmatpush1.xpose.msra.mxu0 %v400
        %2205 = vmatprep.subr.mxu0 0.0
        %2206 = vmatpush1.xpose.msra.mxu0 0.0
        %2207 = vmatprep.subr.mxu0 0.0
        %2208 = vmatpush1.xpose.msra.mxu0 0.0
        %2209 = vmatprep.subr.mxu0 0.0
        %2210 = vmatpush1.xpose.msra.mxu0 0.0
        %2211 = vmatprep.subr.mxu0 0.0
        %2212 = vmatpush1.xpose.msra.mxu0 0.0
        %2213 = vmatprep.subr.mxu0 0.0
        %2214 = vmatpush1.xpose.msra.mxu0 0.0
        %2215 = vmatprep.subr.mxu0 0.0
        %2216 = vmatpush1.xpose.msra.mxu0 0.0
        %2217 = vmatprep.subr.mxu0 0.0
        %2218 = vmatpush1.xpose.msra.mxu0 0.0
        %2219 = vmatprep.subr.mxu0 0.0
        %2220 = vmatpush1.xpose.msra.mxu0 0.0
        %2221 = vmatprep.subr.mxu0 0.0
        %2222 = vmatpush1.xpose.msra.mxu0 0.0
        %2223 = vmatprep.subr.mxu0 0.0
        %2224 = vmatpush1.xpose.msra.mxu0 0.0
        %2225 = vmatprep.subr.mxu0 0.0
        %2226 = vmatpush1.xpose.msra.mxu0 0.0
        %2227 = vmatprep.subr.mxu0 0.0
        %2228 = vmatpush1.xpose.msra.mxu0 0.0
        %2229 = vmatprep.subr.mxu0 0.0
        %2230 = vmatpush1.xpose.msra.mxu0 0.0
        %2231 = vmatprep.subr.mxu0 0.0
        %2232 = vmatpush1.xpose.msra.mxu0 0.0
        %2233 = vmatprep.subr.mxu0 0.0
        %2234 = vmatpush1.xpose.msra.mxu0 0.0
        %2235 = vmatprep.subr.mxu0 0.0
        %2236 = vmatpush1.xpose.msra.mxu0 0.0
        %2237 = vmatprep.subr.mxu0 0.0
        %2238 = vmatpush1.xpose.msra.mxu0 0.0
        %2239 = vmatprep.subr.mxu0 0.0
        %2240 = vmatpush1.xpose.msra.mxu0 0.0
        %2241 = vmatprep.subr.mxu0 0.0
        %2242 = vmatpush1.xpose.msra.mxu0 0.0
        %2243 = vmatprep.subr.mxu0 0.0
        %2244 = vmatpush1.xpose.msra.mxu0 0.0
        %2245 = vmatprep.subr.mxu0 0.0
        %2246 = vmatpush1.xpose.msra.mxu0 0.0
        %2247 = vmatprep.subr.mxu0 0.0
        %2248 = vmatpush1.xpose.msra.mxu0 0.0
        %2249 = vmatprep.subr.mxu0 0.0
        %2250 = vmatpush1.xpose.msra.mxu0 0.0
        %2251 = vmatprep.subr.mxu0 0.0
        %2252 = vmatpush1.xpose.msra.mxu0 0.0
        %2253 = vmatprep.subr.mxu0 0.0
        %2254 = vmatpush1.xpose.msra.mxu0 0.0
        %2255 = vmatprep.subr.mxu0 0.0
        %2256 = vmatpush1.xpose.msra.mxu0 0.0
        %2257 = vmatprep.subr.mxu0 0.0
        %2258 = vmatpush1.xpose.msra.mxu0 0.0
        %2259 = vmatprep.subr.mxu0 0.0
        %2260 = vmatpush1.xpose.msra.mxu0 0.0
        %2261 = vmatprep.subr.mxu0 0.0
        %2262 = vmatpush1.xpose.msra.mxu0 0.0
        %2263 = vmatprep.subr.mxu0 0.0
        %2264 = vmatpush1.xpose.msra.mxu0 0.0
        %2265 = vmatprep.subr.mxu0 0.0
        %2266 = vmatpush1.xpose.msra.mxu0 0.0
        %2267 = vmatprep.mubr.f32.mxu0 %v305
        %2268 = vmatmul.mubr.f32.gmra.mrb[0].mxu0 %v304
        %v2269 = vpop.f32.mrb[0].mxu0
        %v2270 = vadd.f32 %v2200, %v2269
        %v2271 = vpop.f32.mrb[0].mxu0
        %2272 = vdwg.mxu0
        %2273 = vmatprep.subr.mxu0 %v403
        %2274 = vmatpush1.xpose.msra.mxu0 %v402
        %2275 = vmatprep.subr.mxu0 0.0
        %2276 = vmatpush1.xpose.msra.mxu0 0.0
        %2277 = vmatprep.subr.mxu0 0.0
        %2278 = vmatpush1.xpose.msra.mxu0 0.0
        %2279 = vmatprep.subr.mxu0 0.0
        %2280 = vmatpush1.xpose.msra.mxu0 0.0
        %2281 = vmatprep.subr.mxu0 0.0
        %2282 = vmatpush1.xpose.msra.mxu0 0.0
        %2283 = vmatprep.subr.mxu0 0.0
        %2284 = vmatpush1.xpose.msra.mxu0 0.0
        %2285 = vmatprep.subr.mxu0 0.0
        %2286 = vmatpush1.xpose.msra.mxu0 0.0
        %2287 = vmatprep.subr.mxu0 0.0
        %2288 = vmatpush1.xpose.msra.mxu0 0.0
        %2289 = vmatprep.subr.mxu0 0.0
        %2290 = vmatpush1.xpose.msra.mxu0 0.0
        %2291 = vmatprep.subr.mxu0 0.0
        %2292 = vmatpush1.xpose.msra.mxu0 0.0
        %2293 = vmatprep.subr.mxu0 0.0
        %2294 = vmatpush1.xpose.msra.mxu0 0.0
        %2295 = vmatprep.subr.mxu0 0.0
        %2296 = vmatpush1.xpose.msra.mxu0 0.0
        %2297 = vmatprep.subr.mxu0 0.0
        %2298 = vmatpush1.xpose.msra.mxu0 0.0
        %2299 = vmatprep.subr.mxu0 0.0
        %2300 = vmatpush1.xpose.msra.mxu0 0.0
        %2301 = vmatprep.subr.mxu0 0.0
        %2302 = vmatpush1.xpose.msra.mxu0 0.0
        %2303 = vmatprep.subr.mxu0 0.0
        %2304 = vmatpush1.xpose.msra.mxu0 0.0
        %2305 = vmatprep.subr.mxu0 0.0
        %2306 = vmatpush1.xpose.msra.mxu0 0.0
        %2307 = vmatprep.subr.mxu0 0.0
        %2308 = vmatpush1.xpose.msra.mxu0 0.0
        %2309 = vmatprep.subr.mxu0 0.0
        %2310 = vmatpush1.xpose.msra.mxu0 0.0
        %2311 = vmatprep.subr.mxu0 0.0
        %2312 = vmatpush1.xpose.msra.mxu0 0.0
        %2313 = vmatprep.subr.mxu0 0.0
        %2314 = vmatpush1.xpose.msra.mxu0 0.0
        %2315 = vmatprep.subr.mxu0 0.0
        %2316 = vmatpush1.xpose.msra.mxu0 0.0
        %2317 = vmatprep.subr.mxu0 0.0
        %2318 = vmatpush1.xpose.msra.mxu0 0.0
        %2319 = vmatprep.subr.mxu0 0.0
        %2320 = vmatpush1.xpose.msra.mxu0 0.0
        %2321 = vmatprep.subr.mxu0 0.0
        %2322 = vmatpush1.xpose.msra.mxu0 0.0
        %2323 = vmatprep.subr.mxu0 0.0
        %2324 = vmatpush1.xpose.msra.mxu0 0.0
        %2325 = vmatprep.subr.mxu0 0.0
        %2326 = vmatpush1.xpose.msra.mxu0 0.0
        %2327 = vmatprep.subr.mxu0 0.0
        %2328 = vmatpush1.xpose.msra.mxu0 0.0
        %2329 = vmatprep.subr.mxu0 0.0
        %2330 = vmatpush1.xpose.msra.mxu0 0.0
        %2331 = vmatprep.subr.mxu0 0.0
        %2332 = vmatpush1.xpose.msra.mxu0 0.0
        %2333 = vmatprep.subr.mxu0 0.0
        %2334 = vmatpush1.xpose.msra.mxu0 0.0
        %2335 = vmatprep.subr.mxu0 0.0
        %2336 = vmatpush1.xpose.msra.mxu0 0.0
        %2337 = vmatprep.mubr.f32.mxu0 %v307
        %2338 = vmatmul.mubr.f32.gmra.mrb[0].mxu0 %v306
        %v2339 = vpop.f32.mrb[0].mxu0
        %v2340 = vadd.f32 %v2270, %v2339
        %v2341 = vpop.f32.mrb[0].mxu0
        %2342 = vdwg.mxu0
        %2343 = vmatprep.subr.mxu0 %v405
        %2344 = vmatpush1.xpose.msra.mxu0 %v404
        %2345 = vmatprep.subr.mxu0 0.0
        %2346 = vmatpush1.xpose.msra.mxu0 0.0
        %2347 = vmatprep.subr.mxu0 0.0
        %2348 = vmatpush1.xpose.msra.mxu0 0.0
        %2349 = vmatprep.subr.mxu0 0.0
        %2350 = vmatpush1.xpose.msra.mxu0 0.0
        %2351 = vmatprep.subr.mxu0 0.0
        %2352 = vmatpush1.xpose.msra.mxu0 0.0
        %2353 = vmatprep.subr.mxu0 0.0
        %2354 = vmatpush1.xpose.msra.mxu0 0.0
        %2355 = vmatprep.subr.mxu0 0.0
        %2356 = vmatpush1.xpose.msra.mxu0 0.0
        %2357 = vmatprep.subr.mxu0 0.0
        %2358 = vmatpush1.xpose.msra.mxu0 0.0
        %2359 = vmatprep.subr.mxu0 0.0
        %2360 = vmatpush1.xpose.msra.mxu0 0.0
        %2361 = vmatprep.subr.mxu0 0.0
        %2362 = vmatpush1.xpose.msra.mxu0 0.0
        %2363 = vmatprep.subr.mxu0 0.0
        %2364 = vmatpush1.xpose.msra.mxu0 0.0
        %2365 = vmatprep.subr.mxu0 0.0
        %2366 = vmatpush1.xpose.msra.mxu0 0.0
        %2367 = vmatprep.subr.mxu0 0.0
        %2368 = vmatpush1.xpose.msra.mxu0 0.0
        %2369 = vmatprep.subr.mxu0 0.0
        %2370 = vmatpush1.xpose.msra.mxu0 0.0
        %2371 = vmatprep.subr.mxu0 0.0
        %2372 = vmatpush1.xpose.msra.mxu0 0.0
        %2373 = vmatprep.subr.mxu0 0.0
        %2374 = vmatpush1.xpose.msra.mxu0 0.0
        %2375 = vmatprep.subr.mxu0 0.0
        %2376 = vmatpush1.xpose.msra.mxu0 0.0
        %2377 = vmatprep.subr.mxu0 0.0
        %2378 = vmatpush1.xpose.msra.mxu0 0.0
        %2379 = vmatprep.subr.mxu0 0.0
        %2380 = vmatpush1.xpose.msra.mxu0 0.0
        %2381 = vmatprep.subr.mxu0 0.0
        %2382 = vmatpush1.xpose.msra.mxu0 0.0
        %2383 = vmatprep.subr.mxu0 0.0
        %2384 = vmatpush1.xpose.msra.mxu0 0.0
        %2385 = vmatprep.subr.mxu0 0.0
        %2386 = vmatpush1.xpose.msra.mxu0 0.0
        %2387 = vmatprep.subr.mxu0 0.0
        %2388 = vmatpush1.xpose.msra.mxu0 0.0
        %2389 = vmatprep.subr.mxu0 0.0
        %2390 = vmatpush1.xpose.msra.mxu0 0.0
        %2391 = vmatprep.subr.mxu0 0.0
        %2392 = vmatpush1.xpose.msra.mxu0 0.0
        %2393 = vmatprep.subr.mxu0 0.0
        %2394 = vmatpush1.xpose.msra.mxu0 0.0
        %2395 = vmatprep.subr.mxu0 0.0
        %2396 = vmatpush1.xpose.msra.mxu0 0.0
        %2397 = vmatprep.subr.mxu0 0.0
        %2398 = vmatpush1.xpose.msra.mxu0 0.0
        %2399 = vmatprep.subr.mxu0 0.0
        %2400 = vmatpush1.xpose.msra.mxu0 0.0
        %2401 = vmatprep.subr.mxu0 0.0
        %2402 = vmatpush1.xpose.msra.mxu0 0.0
        %2403 = vmatprep.subr.mxu0 0.0
        %2404 = vmatpush1.xpose.msra.mxu0 0.0
        %2405 = vmatprep.subr.mxu0 0.0
        %2406 = vmatpush1.xpose.msra.mxu0 0.0
        %2407 = vmatprep.mubr.f32.mxu0 %v309
        %2408 = vmatmul.mubr.f32.gmra.mrb[0].mxu0 %v308
        %v2409 = vpop.f32.mrb[0].mxu0
        %v2410 = vadd.f32 %v2340, %v2409
        %v2411 = vpop.f32.mrb[0].mxu0
        %2412 = vdwg.mxu0
        %2413 = vmatprep.subr.mxu0 %v407
        %2414 = vmatpush1.xpose.msra.mxu0 %v406
        %2415 = vmatprep.subr.mxu0 0.0
        %2416 = vmatpush1.xpose.msra.mxu0 0.0
        %2417 = vmatprep.subr.mxu0 0.0
        %2418 = vmatpush1.xpose.msra.mxu0 0.0
        %2419 = vmatprep.subr.mxu0 0.0
        %2420 = vmatpush1.xpose.msra.mxu0 0.0
        %2421 = vmatprep.subr.mxu0 0.0
        %2422 = vmatpush1.xpose.msra.mxu0 0.0
        %2423 = vmatprep.subr.mxu0 0.0
        %2424 = vmatpush1.xpose.msra.mxu0 0.0
        %2425 = vmatprep.subr.mxu0 0.0
        %2426 = vmatpush1.xpose.msra.mxu0 0.0
        %2427 = vmatprep.subr.mxu0 0.0
        %2428 = vmatpush1.xpose.msra.mxu0 0.0
        %2429 = vmatprep.subr.mxu0 0.0
        %2430 = vmatpush1.xpose.msra.mxu0 0.0
        %2431 = vmatprep.subr.mxu0 0.0
        %2432 = vmatpush1.xpose.msra.mxu0 0.0
        %2433 = vmatprep.subr.mxu0 0.0
        %2434 = vmatpush1.xpose.msra.mxu0 0.0
        %2435 = vmatprep.subr.mxu0 0.0
        %2436 = vmatpush1.xpose.msra.mxu0 0.0
        %2437 = vmatprep.subr.mxu0 0.0
        %2438 = vmatpush1.xpose.msra.mxu0 0.0
        %2439 = vmatprep.subr.mxu0 0.0
        %2440 = vmatpush1.xpose.msra.mxu0 0.0
        %2441 = vmatprep.subr.mxu0 0.0
        %2442 = vmatpush1.xpose.msra.mxu0 0.0
        %2443 = vmatprep.subr.mxu0 0.0
        %2444 = vmatpush1.xpose.msra.mxu0 0.0
        %2445 = vmatprep.subr.mxu0 0.0
        %2446 = vmatpush1.xpose.msra.mxu0 0.0
        %2447 = vmatprep.subr.mxu0 0.0
        %2448 = vmatpush1.xpose.msra.mxu0 0.0
        %2449 = vmatprep.subr.mxu0 0.0
        %2450 = vmatpush1.xpose.msra.mxu0 0.0
        %2451 = vmatprep.subr.mxu0 0.0
        %2452 = vmatpush1.xpose.msra.mxu0 0.0
        %2453 = vmatprep.subr.mxu0 0.0
        %2454 = vmatpush1.xpose.msra.mxu0 0.0
        %2455 = vmatprep.subr.mxu0 0.0
        %2456 = vmatpush1.xpose.msra.mxu0 0.0
        %2457 = vmatprep.subr.mxu0 0.0
        %2458 = vmatpush1.xpose.msra.mxu0 0.0
        %2459 = vmatprep.subr.mxu0 0.0
        %2460 = vmatpush1.xpose.msra.mxu0 0.0
        %2461 = vmatprep.subr.mxu0 0.0
        %2462 = vmatpush1.xpose.msra.mxu0 0.0
        %2463 = vmatprep.subr.mxu0 0.0
        %2464 = vmatpush1.xpose.msra.mxu0 0.0
        %2465 = vmatprep.subr.mxu0 0.0
        %2466 = vmatpush1.xpose.msra.mxu0 0.0
        %2467 = vmatprep.subr.mxu0 0.0
        %2468 = vmatpush1.xpose.msra.mxu0 0.0
        %2469 = vmatprep.subr.mxu0 0.0
        %2470 = vmatpush1.xpose.msra.mxu0 0.0
        %2471 = vmatprep.subr.mxu0 0.0
        %2472 = vmatpush1.xpose.msra.mxu0 0.0
        %2473 = vmatprep.subr.mxu0 0.0
        %2474 = vmatpush1.xpose.msra.mxu0 0.0
        %2475 = vmatprep.subr.mxu0 0.0
        %2476 = vmatpush1.xpose.msra.mxu0 0.0
        %2477 = vmatprep.mubr.f32.mxu0 %v311
        %2478 = vmatmul.mubr.f32.gmra.mrb[0].mxu0 %v310
        %v2479 = vpop.f32.mrb[0].mxu0
        %v2480 = vadd.f32 %v2410, %v2479
        %v2481 = vpop.f32.mrb[0].mxu0
        %2482 = vdwg.mxu0
        %2483 = vmatprep.subr.mxu0 %v409
        %2484 = vmatpush1.xpose.msra.mxu0 %v408
        %2485 = vmatprep.subr.mxu0 0.0
        %2486 = vmatpush1.xpose.msra.mxu0 0.0
        %2487 = vmatprep.subr.mxu0 0.0
        %2488 = vmatpush1.xpose.msra.mxu0 0.0
        %2489 = vmatprep.subr.mxu0 0.0
        %2490 = vmatpush1.xpose.msra.mxu0 0.0
        %2491 = vmatprep.subr.mxu0 0.0
        %2492 = vmatpush1.xpose.msra.mxu0 0.0
        %2493 = vmatprep.subr.mxu0 0.0
        %2494 = vmatpush1.xpose.msra.mxu0 0.0
        %2495 = vmatprep.subr.mxu0 0.0
        %2496 = vmatpush1.xpose.msra.mxu0 0.0
        %2497 = vmatprep.subr.mxu0 0.0
        %2498 = vmatpush1.xpose.msra.mxu0 0.0
        %2499 = vmatprep.subr.mxu0 0.0
        %2500 = vmatpush1.xpose.msra.mxu0 0.0
        %2501 = vmatprep.subr.mxu0 0.0
        %2502 = vmatpush1.xpose.msra.mxu0 0.0
        %2503 = vmatprep.subr.mxu0 0.0
        %2504 = vmatpush1.xpose.msra.mxu0 0.0
        %2505 = vmatprep.subr.mxu0 0.0
        %2506 = vmatpush1.xpose.msra.mxu0 0.0
        %2507 = vmatprep.subr.mxu0 0.0
        %2508 = vmatpush1.xpose.msra.mxu0 0.0
        %2509 = vmatprep.subr.mxu0 0.0
        %2510 = vmatpush1.xpose.msra.mxu0 0.0
        %2511 = vmatprep.subr.mxu0 0.0
        %2512 = vmatpush1.xpose.msra.mxu0 0.0
        %2513 = vmatprep.subr.mxu0 0.0
        %2514 = vmatpush1.xpose.msra.mxu0 0.0
        %2515 = vmatprep.subr.mxu0 0.0
        %2516 = vmatpush1.xpose.msra.mxu0 0.0
        %2517 = vmatprep.subr.mxu0 0.0
        %2518 = vmatpush1.xpose.msra.mxu0 0.0
        %2519 = vmatprep.subr.mxu0 0.0
        %2520 = vmatpush1.xpose.msra.mxu0 0.0
        %2521 = vmatprep.subr.mxu0 0.0
        %2522 = vmatpush1.xpose.msra.mxu0 0.0
        %2523 = vmatprep.subr.mxu0 0.0
        %2524 = vmatpush1.xpose.msra.mxu0 0.0
        %2525 = vmatprep.subr.mxu0 0.0
        %2526 = vmatpush1.xpose.msra.mxu0 0.0
        %2527 = vmatprep.subr.mxu0 0.0
        %2528 = vmatpush1.xpose.msra.mxu0 0.0
        %2529 = vmatprep.subr.mxu0 0.0
        %2530 = vmatpush1.xpose.msra.mxu0 0.0
        %2531 = vmatprep.subr.mxu0 0.0
        %2532 = vmatpush1.xpose.msra.mxu0 0.0
        %2533 = vmatprep.subr.mxu0 0.0
        %2534 = vmatpush1.xpose.msra.mxu0 0.0
        %2535 = vmatprep.subr.mxu0 0.0
        %2536 = vmatpush1.xpose.msra.mxu0 0.0
        %2537 = vmatprep.subr.mxu0 0.0
        %2538 = vmatpush1.xpose.msra.mxu0 0.0
        %2539 = vmatprep.subr.mxu0 0.0
        %2540 = vmatpush1.xpose.msra.mxu0 0.0
        %2541 = vmatprep.subr.mxu0 0.0
        %2542 = vmatpush1.xpose.msra.mxu0 0.0
        %2543 = vmatprep.subr.mxu0 0.0
        %2544 = vmatpush1.xpose.msra.mxu0 0.0
        %2545 = vmatprep.subr.mxu0 0.0
        %2546 = vmatpush1.xpose.msra.mxu0 0.0
        %2547 = vmatprep.mubr.f32.mxu0 %v313
        %2548 = vmatmul.mubr.f32.gmra.mrb[0].mxu0 %v312
        %v2549 = vpop.f32.mrb[0].mxu0
        %v2550 = vadd.f32 %v2480, %v2549
        %v2551 = vpop.f32.mrb[0].mxu0
        %2552 = vdwg.mxu0
        %2553 = vmatprep.subr.mxu0 %v411
        %2554 = vmatpush1.xpose.msra.mxu0 %v410
        %2555 = vmatprep.subr.mxu0 0.0
        %2556 = vmatpush1.xpose.msra.mxu0 0.0
        %2557 = vmatprep.subr.mxu0 0.0
        %2558 = vmatpush1.xpose.msra.mxu0 0.0
        %2559 = vmatprep.subr.mxu0 0.0
        %2560 = vmatpush1.xpose.msra.mxu0 0.0
        %2561 = vmatprep.subr.mxu0 0.0
        %2562 = vmatpush1.xpose.msra.mxu0 0.0
        %2563 = vmatprep.subr.mxu0 0.0
        %2564 = vmatpush1.xpose.msra.mxu0 0.0
        %2565 = vmatprep.subr.mxu0 0.0
        %2566 = vmatpush1.xpose.msra.mxu0 0.0
        %2567 = vmatprep.subr.mxu0 0.0
        %2568 = vmatpush1.xpose.msra.mxu0 0.0
        %2569 = vmatprep.subr.mxu0 0.0
        %2570 = vmatpush1.xpose.msra.mxu0 0.0
        %2571 = vmatprep.subr.mxu0 0.0
        %2572 = vmatpush1.xpose.msra.mxu0 0.0
        %2573 = vmatprep.subr.mxu0 0.0
        %2574 = vmatpush1.xpose.msra.mxu0 0.0
        %2575 = vmatprep.subr.mxu0 0.0
        %2576 = vmatpush1.xpose.msra.mxu0 0.0
        %2577 = vmatprep.subr.mxu0 0.0
        %2578 = vmatpush1.xpose.msra.mxu0 0.0
        %2579 = vmatprep.subr.mxu0 0.0
        %2580 = vmatpush1.xpose.msra.mxu0 0.0
        %2581 = vmatprep.subr.mxu0 0.0
        %2582 = vmatpush1.xpose.msra.mxu0 0.0
        %2583 = vmatprep.subr.mxu0 0.0
        %2584 = vmatpush1.xpose.msra.mxu0 0.0
        %2585 = vmatprep.subr.mxu0 0.0
        %2586 = vmatpush1.xpose.msra.mxu0 0.0
        %2587 = vmatprep.subr.mxu0 0.0
        %2588 = vmatpush1.xpose.msra.mxu0 0.0
        %2589 = vmatprep.subr.mxu0 0.0
        %2590 = vmatpush1.xpose.msra.mxu0 0.0
        %2591 = vmatprep.subr.mxu0 0.0
        %2592 = vmatpush1.xpose.msra.mxu0 0.0
        %2593 = vmatprep.subr.mxu0 0.0
        %2594 = vmatpush1.xpose.msra.mxu0 0.0
        %2595 = vmatprep.subr.mxu0 0.0
        %2596 = vmatpush1.xpose.msra.mxu0 0.0
        %2597 = vmatprep.subr.mxu0 0.0
        %2598 = vmatpush1.xpose.msra.mxu0 0.0
        %2599 = vmatprep.subr.mxu0 0.0
        %2600 = vmatpush1.xpose.msra.mxu0 0.0
        %2601 = vmatprep.subr.mxu0 0.0
        %2602 = vmatpush1.xpose.msra.mxu0 0.0
        %2603 = vmatprep.subr.mxu0 0.0
        %2604 = vmatpush1.xpose.msra.mxu0 0.0
        %2605 = vmatprep.subr.mxu0 0.0
        %2606 = vmatpush1.xpose.msra.mxu0 0.0
        %2607 = vmatprep.subr.mxu0 0.0
        %2608 = vmatpush1.xpose.msra.mxu0 0.0
        %2609 = vmatprep.subr.mxu0 0.0
        %2610 = vmatpush1.xpose.msra.mxu0 0.0
        %2611 = vmatprep.subr.mxu0 0.0
        %2612 = vmatpush1.xpose.msra.mxu0 0.0
        %2613 = vmatprep.subr.mxu0 0.0
        %2614 = vmatpush1.xpose.msra.mxu0 0.0
        %2615 = vmatprep.subr.mxu0 0.0
        %2616 = vmatpush1.xpose.msra.mxu0 0.0
        %2617 = vmatprep.mubr.f32.mxu0 %v315
        %2618 = vmatmul.mubr.f32.gmra.mrb[0].mxu0 %v314
        %v2619 = vpop.f32.mrb[0].mxu0
        %v2620 = vadd.f32 %v2550, %v2619
        %v2621 = vpop.f32.mrb[0].mxu0
        %2622 = vdwg.mxu0
        %2623 = vmatprep.subr.mxu0 %v413
        %2624 = vmatpush1.xpose.msra.mxu0 %v412
        %2625 = vmatprep.subr.mxu0 0.0
        %2626 = vmatpush1.xpose.msra.mxu0 0.0
        %2627 = vmatprep.subr.mxu0 0.0
        %2628 = vmatpush1.xpose.msra.mxu0 0.0
        %2629 = vmatprep.subr.mxu0 0.0
        %2630 = vmatpush1.xpose.msra.mxu0 0.0
        %2631 = vmatprep.subr.mxu0 0.0
        %2632 = vmatpush1.xpose.msra.mxu0 0.0
        %2633 = vmatprep.subr.mxu0 0.0
        %2634 = vmatpush1.xpose.msra.mxu0 0.0
        %2635 = vmatprep.subr.mxu0 0.0
        %2636 = vmatpush1.xpose.msra.mxu0 0.0
        %2637 = vmatprep.subr.mxu0 0.0
        %2638 = vmatpush1.xpose.msra.mxu0 0.0
        %2639 = vmatprep.subr.mxu0 0.0
        %2640 = vmatpush1.xpose.msra.mxu0 0.0
        %2641 = vmatprep.subr.mxu0 0.0
        %2642 = vmatpush1.xpose.msra.mxu0 0.0
        %2643 = vmatprep.subr.mxu0 0.0
        %2644 = vmatpush1.xpose.msra.mxu0 0.0
        %2645 = vmatprep.subr.mxu0 0.0
        %2646 = vmatpush1.xpose.msra.mxu0 0.0
        %2647 = vmatprep.subr.mxu0 0.0
        %2648 = vmatpush1.xpose.msra.mxu0 0.0
        %2649 = vmatprep.subr.mxu0 0.0
        %2650 = vmatpush1.xpose.msra.mxu0 0.0
        %2651 = vmatprep.subr.mxu0 0.0
        %2652 = vmatpush1.xpose.msra.mxu0 0.0
        %2653 = vmatprep.subr.mxu0 0.0
        %2654 = vmatpush1.xpose.msra.mxu0 0.0
        %2655 = vmatprep.subr.mxu0 0.0
        %2656 = vmatpush1.xpose.msra.mxu0 0.0
        %2657 = vmatprep.subr.mxu0 0.0
        %2658 = vmatpush1.xpose.msra.mxu0 0.0
        %2659 = vmatprep.subr.mxu0 0.0
        %2660 = vmatpush1.xpose.msra.mxu0 0.0
        %2661 = vmatprep.subr.mxu0 0.0
        %2662 = vmatpush1.xpose.msra.mxu0 0.0
        %2663 = vmatprep.subr.mxu0 0.0
        %2664 = vmatpush1.xpose.msra.mxu0 0.0
        %2665 = vmatprep.subr.mxu0 0.0
        %2666 = vmatpush1.xpose.msra.mxu0 0.0
        %2667 = vmatprep.subr.mxu0 0.0
        %2668 = vmatpush1.xpose.msra.mxu0 0.0
        %2669 = vmatprep.subr.mxu0 0.0
        %2670 = vmatpush1.xpose.msra.mxu0 0.0
        %2671 = vmatprep.subr.mxu0 0.0
        %2672 = vmatpush1.xpose.msra.mxu0 0.0
        %2673 = vmatprep.subr.mxu0 0.0
        %2674 = vmatpush1.xpose.msra.mxu0 0.0
        %2675 = vmatprep.subr.mxu0 0.0
        %2676 = vmatpush1.xpose.msra.mxu0 0.0
        %2677 = vmatprep.subr.mxu0 0.0
        %2678 = vmatpush1.xpose.msra.mxu0 0.0
        %2679 = vmatprep.subr.mxu0 0.0
        %2680 = vmatpush1.xpose.msra.mxu0 0.0
        %2681 = vmatprep.subr.mxu0 0.0
        %2682 = vmatpush1.xpose.msra.mxu0 0.0
        %2683 = vmatprep.subr.mxu0 0.0
        %2684 = vmatpush1.xpose.msra.mxu0 0.0
        %2685 = vmatprep.subr.mxu0 0.0
        %2686 = vmatpush1.xpose.msra.mxu0 0.0
        %2687 = vmatprep.mubr.f32.mxu0 %v317
        %2688 = vmatmul.mubr.f32.gmra.mrb[0].mxu0 %v316
        %v2689 = vpop.f32.mrb[0].mxu0
        %v2690 = vadd.f32 %v2620, %v2689
        %v2691 = vpop.f32.mrb[0].mxu0
        %2692 = vdwg.mxu0
        %2693 = vmatprep.subr.mxu0 %v415
        %2694 = vmatpush1.xpose.msra.mxu0 %v414
        %2695 = vmatprep.subr.mxu0 0.0
        %2696 = vmatpush1.xpose.msra.mxu0 0.0
        %2697 = vmatprep.subr.mxu0 0.0
        %2698 = vmatpush1.xpose.msra.mxu0 0.0
        %2699 = vmatprep.subr.mxu0 0.0
        %2700 = vmatpush1.xpose.msra.mxu0 0.0
        %2701 = vmatprep.subr.mxu0 0.0
        %2702 = vmatpush1.xpose.msra.mxu0 0.0
        %2703 = vmatprep.subr.mxu0 0.0
        %2704 = vmatpush1.xpose.msra.mxu0 0.0
        %2705 = vmatprep.subr.mxu0 0.0
        %2706 = vmatpush1.xpose.msra.mxu0 0.0
        %2707 = vmatprep.subr.mxu0 0.0
        %2708 = vmatpush1.xpose.msra.mxu0 0.0
        %2709 = vmatprep.subr.mxu0 0.0
        %2710 = vmatpush1.xpose.msra.mxu0 0.0
        %2711 = vmatprep.subr.mxu0 0.0
        %2712 = vmatpush1.xpose.msra.mxu0 0.0
        %2713 = vmatprep.subr.mxu0 0.0
        %2714 = vmatpush1.xpose.msra.mxu0 0.0
        %2715 = vmatprep.subr.mxu0 0.0
        %2716 = vmatpush1.xpose.msra.mxu0 0.0
        %2717 = vmatprep.subr.mxu0 0.0
        %2718 = vmatpush1.xpose.msra.mxu0 0.0
        %2719 = vmatprep.subr.mxu0 0.0
        %2720 = vmatpush1.xpose.msra.mxu0 0.0
        %2721 = vmatprep.subr.mxu0 0.0
        %2722 = vmatpush1.xpose.msra.mxu0 0.0
        %2723 = vmatprep.subr.mxu0 0.0
        %2724 = vmatpush1.xpose.msra.mxu0 0.0
        %2725 = vmatprep.subr.mxu0 0.0
        %2726 = vmatpush1.xpose.msra.mxu0 0.0
        %2727 = vmatprep.subr.mxu0 0.0
        %2728 = vmatpush1.xpose.msra.mxu0 0.0
        %2729 = vmatprep.subr.mxu0 0.0
        %2730 = vmatpush1.xpose.msra.mxu0 0.0
        %2731 = vmatprep.subr.mxu0 0.0
        %2732 = vmatpush1.xpose.msra.mxu0 0.0
        %2733 = vmatprep.subr.mxu0 0.0
        %2734 = vmatpush1.xpose.msra.mxu0 0.0
        %2735 = vmatprep.subr.mxu0 0.0
        %2736 = vmatpush1.xpose.msra.mxu0 0.0
        %2737 = vmatprep.subr.mxu0 0.0
        %2738 = vmatpush1.xpose.msra.mxu0 0.0
        %2739 = vmatprep.subr.mxu0 0.0
        %2740 = vmatpush1.xpose.msra.mxu0 0.0
        %2741 = vmatprep.subr.mxu0 0.0
        %2742 = vmatpush1.xpose.msra.mxu0 0.0
        %2743 = vmatprep.subr.mxu0 0.0
        %2744 = vmatpush1.xpose.msra.mxu0 0.0
        %2745 = vmatprep.subr.mxu0 0.0
        %2746 = vmatpush1.xpose.msra.mxu0 0.0
        %2747 = vmatprep.subr.mxu0 0.0
        %2748 = vmatpush1.xpose.msra.mxu0 0.0
        %2749 = vmatprep.subr.mxu0 0.0
        %2750 = vmatpush1.xpose.msra.mxu0 0.0
        %2751 = vmatprep.subr.mxu0 0.0
        %2752 = vmatpush1.xpose.msra.mxu0 0.0
        %2753 = vmatprep.subr.mxu0 0.0
        %2754 = vmatpush1.xpose.msra.mxu0 0.0
        %2755 = vmatprep.subr.mxu0 0.0
        %2756 = vmatpush1.xpose.msra.mxu0 0.0
        %2757 = vmatprep.mubr.f32.mxu0 %v319
        %2758 = vmatmul.mubr.f32.gmra.mrb[0].mxu0 %v318
        %v2759 = vpop.f32.mrb[0].mxu0
        %v2760 = vadd.f32 %v2690, %v2759
        %v2761 = vpop.f32.mrb[0].mxu0
        %2762 = vdwg.mxu0
        %2763 = vmatprep.subr.mxu0 %v417
        %2764 = vmatpush1.xpose.msra.mxu0 %v416
        %2765 = vmatprep.subr.mxu0 0.0
        %2766 = vmatpush1.xpose.msra.mxu0 0.0
        %2767 = vmatprep.subr.mxu0 0.0
        %2768 = vmatpush1.xpose.msra.mxu0 0.0
        %2769 = vmatprep.subr.mxu0 0.0
        %2770 = vmatpush1.xpose.msra.mxu0 0.0
        %2771 = vmatprep.subr.mxu0 0.0
        %2772 = vmatpush1.xpose.msra.mxu0 0.0
        %2773 = vmatprep.subr.mxu0 0.0
        %2774 = vmatpush1.xpose.msra.mxu0 0.0
        %2775 = vmatprep.subr.mxu0 0.0
        %2776 = vmatpush1.xpose.msra.mxu0 0.0
        %2777 = vmatprep.subr.mxu0 0.0
        %2778 = vmatpush1.xpose.msra.mxu0 0.0
        %2779 = vmatprep.subr.mxu0 0.0
        %2780 = vmatpush1.xpose.msra.mxu0 0.0
        %2781 = vmatprep.subr.mxu0 0.0
        %2782 = vmatpush1.xpose.msra.mxu0 0.0
        %2783 = vmatprep.subr.mxu0 0.0
        %2784 = vmatpush1.xpose.msra.mxu0 0.0
        %2785 = vmatprep.subr.mxu0 0.0
        %2786 = vmatpush1.xpose.msra.mxu0 0.0
        %2787 = vmatprep.subr.mxu0 0.0
        %2788 = vmatpush1.xpose.msra.mxu0 0.0
        %2789 = vmatprep.subr.mxu0 0.0
        %2790 = vmatpush1.xpose.msra.mxu0 0.0
        %2791 = vmatprep.subr.mxu0 0.0
        %2792 = vmatpush1.xpose.msra.mxu0 0.0
        %2793 = vmatprep.subr.mxu0 0.0
        %2794 = vmatpush1.xpose.msra.mxu0 0.0
        %2795 = vmatprep.subr.mxu0 0.0
        %2796 = vmatpush1.xpose.msra.mxu0 0.0
        %2797 = vmatprep.subr.mxu0 0.0
        %2798 = vmatpush1.xpose.msra.mxu0 0.0
        %2799 = vmatprep.subr.mxu0 0.0
        %2800 = vmatpush1.xpose.msra.mxu0 0.0
        %2801 = vmatprep.subr.mxu0 0.0
        %2802 = vmatpush1.xpose.msra.mxu0 0.0
        %2803 = vmatprep.subr.mxu0 0.0
        %2804 = vmatpush1.xpose.msra.mxu0 0.0
        %2805 = vmatprep.subr.mxu0 0.0
        %2806 = vmatpush1.xpose.msra.mxu0 0.0
        %2807 = vmatprep.subr.mxu0 0.0
        %2808 = vmatpush1.xpose.msra.mxu0 0.0
        %2809 = vmatprep.subr.mxu0 0.0
        %2810 = vmatpush1.xpose.msra.mxu0 0.0
        %2811 = vmatprep.subr.mxu0 0.0
        %2812 = vmatpush1.xpose.msra.mxu0 0.0
        %2813 = vmatprep.subr.mxu0 0.0
        %2814 = vmatpush1.xpose.msra.mxu0 0.0
        %2815 = vmatprep.subr.mxu0 0.0
        %2816 = vmatpush1.xpose.msra.mxu0 0.0
        %2817 = vmatprep.subr.mxu0 0.0
        %2818 = vmatpush1.xpose.msra.mxu0 0.0
        %2819 = vmatprep.subr.mxu0 0.0
        %2820 = vmatpush1.xpose.msra.mxu0 0.0
        %2821 = vmatprep.subr.mxu0 0.0
        %2822 = vmatpush1.xpose.msra.mxu0 0.0
        %2823 = vmatprep.subr.mxu0 0.0
        %2824 = vmatpush1.xpose.msra.mxu0 0.0
        %2825 = vmatprep.subr.mxu0 0.0
        %2826 = vmatpush1.xpose.msra.mxu0 0.0
        %2827 = vmatprep.mubr.f32.mxu0 %v321
        %2828 = vmatmul.mubr.f32.gmra.mrb[0].mxu0 %v320
        %v2829 = vpop.f32.mrb[0].mxu0
        %v2830 = vadd.f32 %v2760, %v2829
        %v2831 = vpop.f32.mrb[0].mxu0
        %2832 = vdwg.mxu0
        %2833 = vmatprep.subr.mxu0 %v419
        %2834 = vmatpush1.xpose.msra.mxu0 %v418
        %2835 = vmatprep.subr.mxu0 0.0
        %2836 = vmatpush1.xpose.msra.mxu0 0.0
        %2837 = vmatprep.subr.mxu0 0.0
        %2838 = vmatpush1.xpose.msra.mxu0 0.0
        %2839 = vmatprep.subr.mxu0 0.0
        %2840 = vmatpush1.xpose.msra.mxu0 0.0
        %2841 = vmatprep.subr.mxu0 0.0
        %2842 = vmatpush1.xpose.msra.mxu0 0.0
        %2843 = vmatprep.subr.mxu0 0.0
        %2844 = vmatpush1.xpose.msra.mxu0 0.0
        %2845 = vmatprep.subr.mxu0 0.0
        %2846 = vmatpush1.xpose.msra.mxu0 0.0
        %2847 = vmatprep.subr.mxu0 0.0
        %2848 = vmatpush1.xpose.msra.mxu0 0.0
        %2849 = vmatprep.subr.mxu0 0.0
        %2850 = vmatpush1.xpose.msra.mxu0 0.0
        %2851 = vmatprep.subr.mxu0 0.0
        %2852 = vmatpush1.xpose.msra.mxu0 0.0
        %2853 = vmatprep.subr.mxu0 0.0
        %2854 = vmatpush1.xpose.msra.mxu0 0.0
        %2855 = vmatprep.subr.mxu0 0.0
        %2856 = vmatpush1.xpose.msra.mxu0 0.0
        %2857 = vmatprep.subr.mxu0 0.0
        %2858 = vmatpush1.xpose.msra.mxu0 0.0
        %2859 = vmatprep.subr.mxu0 0.0
        %2860 = vmatpush1.xpose.msra.mxu0 0.0
        %2861 = vmatprep.subr.mxu0 0.0
        %2862 = vmatpush1.xpose.msra.mxu0 0.0
        %2863 = vmatprep.subr.mxu0 0.0
        %2864 = vmatpush1.xpose.msra.mxu0 0.0
        %2865 = vmatprep.subr.mxu0 0.0
        %2866 = vmatpush1.xpose.msra.mxu0 0.0
        %2867 = vmatprep.subr.mxu0 0.0
        %2868 = vmatpush1.xpose.msra.mxu0 0.0
        %2869 = vmatprep.subr.mxu0 0.0
        %2870 = vmatpush1.xpose.msra.mxu0 0.0
        %2871 = vmatprep.subr.mxu0 0.0
        %2872 = vmatpush1.xpose.msra.mxu0 0.0
        %2873 = vmatprep.subr.mxu0 0.0
        %2874 = vmatpush1.xpose.msra.mxu0 0.0
        %2875 = vmatprep.subr.mxu0 0.0
        %2876 = vmatpush1.xpose.msra.mxu0 0.0
        %2877 = vmatprep.subr.mxu0 0.0
        %2878 = vmatpush1.xpose.msra.mxu0 0.0
        %2879 = vmatprep.subr.mxu0 0.0
        %2880 = vmatpush1.xpose.msra.mxu0 0.0
        %2881 = vmatprep.subr.mxu0 0.0
        %2882 = vmatpush1.xpose.msra.mxu0 0.0
        %2883 = vmatprep.subr.mxu0 0.0
        %2884 = vmatpush1.xpose.msra.mxu0 0.0
        %2885 = vmatprep.subr.mxu0 0.0
        %2886 = vmatpush1.xpose.msra.mxu0 0.0
        %2887 = vmatprep.subr.mxu0 0.0
        %2888 = vmatpush1.xpose.msra.mxu0 0.0
        %2889 = vmatprep.subr.mxu0 0.0
        %2890 = vmatpush1.xpose.msra.mxu0 0.0
        %2891 = vmatprep.subr.mxu0 0.0
        %2892 = vmatpush1.xpose.msra.mxu0 0.0
        %2893 = vmatprep.subr.mxu0 0.0
        %2894 = vmatpush1.xpose.msra.mxu0 0.0
        %2895 = vmatprep.subr.mxu0 0.0
        %2896 = vmatpush1.xpose.msra.mxu0 0.0
        %2897 = vmatprep.mubr.f32.mxu0 %v323
        %2898 = vmatmul.mubr.f32.gmra.mrb[0].mxu0 %v322
        %v2899 = vpop.f32.mrb[0].mxu0
        %v2900 = vadd.f32 %v2830, %v2899
        %v2901 = vpop.f32.mrb[0].mxu0
        %2902 = vdwg.mxu0
        %2903 = vmatprep.subr.mxu0 %v421
        %2904 = vmatpush1.xpose.msra.mxu0 %v420
        %2905 = vmatprep.subr.mxu0 0.0
        %2906 = vmatpush1.xpose.msra.mxu0 0.0
        %2907 = vmatprep.subr.mxu0 0.0
        %2908 = vmatpush1.xpose.msra.mxu0 0.0
        %2909 = vmatprep.subr.mxu0 0.0
        %2910 = vmatpush1.xpose.msra.mxu0 0.0
        %2911 = vmatprep.subr.mxu0 0.0
        %2912 = vmatpush1.xpose.msra.mxu0 0.0
        %2913 = vmatprep.subr.mxu0 0.0
        %2914 = vmatpush1.xpose.msra.mxu0 0.0
        %2915 = vmatprep.subr.mxu0 0.0
        %2916 = vmatpush1.xpose.msra.mxu0 0.0
        %2917 = vmatprep.subr.mxu0 0.0
        %2918 = vmatpush1.xpose.msra.mxu0 0.0
        %2919 = vmatprep.subr.mxu0 0.0
        %2920 = vmatpush1.xpose.msra.mxu0 0.0
        %2921 = vmatprep.subr.mxu0 0.0
        %2922 = vmatpush1.xpose.msra.mxu0 0.0
        %2923 = vmatprep.subr.mxu0 0.0
        %2924 = vmatpush1.xpose.msra.mxu0 0.0
        %2925 = vmatprep.subr.mxu0 0.0
        %2926 = vmatpush1.xpose.msra.mxu0 0.0
        %2927 = vmatprep.subr.mxu0 0.0
        %2928 = vmatpush1.xpose.msra.mxu0 0.0
        %2929 = vmatprep.subr.mxu0 0.0
        %2930 = vmatpush1.xpose.msra.mxu0 0.0
        %2931 = vmatprep.subr.mxu0 0.0
        %2932 = vmatpush1.xpose.msra.mxu0 0.0
        %2933 = vmatprep.subr.mxu0 0.0
        %2934 = vmatpush1.xpose.msra.mxu0 0.0
        %2935 = vmatprep.subr.mxu0 0.0
        %2936 = vmatpush1.xpose.msra.mxu0 0.0
        %2937 = vmatprep.subr.mxu0 0.0
        %2938 = vmatpush1.xpose.msra.mxu0 0.0
        %2939 = vmatprep.subr.mxu0 0.0
        %2940 = vmatpush1.xpose.msra.mxu0 0.0
        %2941 = vmatprep.subr.mxu0 0.0
        %2942 = vmatpush1.xpose.msra.mxu0 0.0
        %2943 = vmatprep.subr.mxu0 0.0
        %2944 = vmatpush1.xpose.msra.mxu0 0.0
        %2945 = vmatprep.subr.mxu0 0.0
        %2946 = vmatpush1.xpose.msra.mxu0 0.0
        %2947 = vmatprep.subr.mxu0 0.0
        %2948 = vmatpush1.xpose.msra.mxu0 0.0
        %2949 = vmatprep.subr.mxu0 0.0
        %2950 = vmatpush1.xpose.msra.mxu0 0.0
        %2951 = vmatprep.subr.mxu0 0.0
        %2952 = vmatpush1.xpose.msra.mxu0 0.0
        %2953 = vmatprep.subr.mxu0 0.0
        %2954 = vmatpush1.xpose.msra.mxu0 0.0
        %2955 = vmatprep.subr.mxu0 0.0
        %2956 = vmatpush1.xpose.msra.mxu0 0.0
        %2957 = vmatprep.subr.mxu0 0.0
        %2958 = vmatpush1.xpose.msra.mxu0 0.0
        %2959 = vmatprep.subr.mxu0 0.0
        %2960 = vmatpush1.xpose.msra.mxu0 0.0
        %2961 = vmatprep.subr.mxu0 0.0
        %2962 = vmatpush1.xpose.msra.mxu0 0.0
        %2963 = vmatprep.subr.mxu0 0.0
        %2964 = vmatpush1.xpose.msra.mxu0 0.0
        %2965 = vmatprep.subr.mxu0 0.0
        %2966 = vmatpush1.xpose.msra.mxu0 0.0
        %2967 = vmatprep.mubr.f32.mxu0 %v325
        %2968 = vmatmul.mubr.f32.gmra.mrb[0].mxu0 %v324
        %v2969 = vpop.f32.mrb[0].mxu0
        %v2970 = vadd.f32 %v2900, %v2969
        %v2971 = vpop.f32.mrb[0].mxu0
        %2972 = vdwg.mxu0
        %2973 = vmatprep.subr.mxu0 %v423
        %2974 = vmatpush1.xpose.msra.mxu0 %v422
        %2975 = vmatprep.subr.mxu0 0.0
        %2976 = vmatpush1.xpose.msra.mxu0 0.0
        %2977 = vmatprep.subr.mxu0 0.0
        %2978 = vmatpush1.xpose.msra.mxu0 0.0
        %2979 = vmatprep.subr.mxu0 0.0
        %2980 = vmatpush1.xpose.msra.mxu0 0.0
        %2981 = vmatprep.subr.mxu0 0.0
        %2982 = vmatpush1.xpose.msra.mxu0 0.0
        %2983 = vmatprep.subr.mxu0 0.0
        %2984 = vmatpush1.xpose.msra.mxu0 0.0
        %2985 = vmatprep.subr.mxu0 0.0
        %2986 = vmatpush1.xpose.msra.mxu0 0.0
        %2987 = vmatprep.subr.mxu0 0.0
        %2988 = vmatpush1.xpose.msra.mxu0 0.0
        %2989 = vmatprep.subr.mxu0 0.0
        %2990 = vmatpush1.xpose.msra.mxu0 0.0
        %2991 = vmatprep.subr.mxu0 0.0
        %2992 = vmatpush1.xpose.msra.mxu0 0.0
        %2993 = vmatprep.subr.mxu0 0.0
        %2994 = vmatpush1.xpose.msra.mxu0 0.0
        %2995 = vmatprep.subr.mxu0 0.0
        %2996 = vmatpush1.xpose.msra.mxu0 0.0
        %2997 = vmatprep.subr.mxu0 0.0
        %2998 = vmatpush1.xpose.msra.mxu0 0.0
        %2999 = vmatprep.subr.mxu0 0.0
        %3000 = vmatpush1.xpose.msra.mxu0 0.0
        %3001 = vmatprep.subr.mxu0 0.0
        %3002 = vmatpush1.xpose.msra.mxu0 0.0
        %3003 = vmatprep.subr.mxu0 0.0
        %3004 = vmatpush1.xpose.msra.mxu0 0.0
        %3005 = vmatprep.subr.mxu0 0.0
        %3006 = vmatpush1.xpose.msra.mxu0 0.0
        %3007 = vmatprep.subr.mxu0 0.0
        %3008 = vmatpush1.xpose.msra.mxu0 0.0
        %3009 = vmatprep.subr.mxu0 0.0
        %3010 = vmatpush1.xpose.msra.mxu0 0.0
        %3011 = vmatprep.subr.mxu0 0.0
        %3012 = vmatpush1.xpose.msra.mxu0 0.0
        %3013 = vmatprep.subr.mxu0 0.0
        %3014 = vmatpush1.xpose.msra.mxu0 0.0
        %3015 = vmatprep.subr.mxu0 0.0
        %3016 = vmatpush1.xpose.msra.mxu0 0.0
        %3017 = vmatprep.subr.mxu0 0.0
        %3018 = vmatpush1.xpose.msra.mxu0 0.0
        %3019 = vmatprep.subr.mxu0 0.0
        %3020 = vmatpush1.xpose.msra.mxu0 0.0
        %3021 = vmatprep.subr.mxu0 0.0
        %3022 = vmatpush1.xpose.msra.mxu0 0.0
        %3023 = vmatprep.subr.mxu0 0.0
        %3024 = vmatpush1.xpose.msra.mxu0 0.0
        %3025 = vmatprep.subr.mxu0 0.0
        %3026 = vmatpush1.xpose.msra.mxu0 0.0
        %3027 = vmatprep.subr.mxu0 0.0
        %3028 = vmatpush1.xpose.msra.mxu0 0.0
        %3029 = vmatprep.subr.mxu0 0.0
        %3030 = vmatpush1.xpose.msra.mxu0 0.0
        %3031 = vmatprep.subr.mxu0 0.0
        %3032 = vmatpush1.xpose.msra.mxu0 0.0
        %3033 = vmatprep.subr.mxu0 0.0
        %3034 = vmatpush1.xpose.msra.mxu0 0.0
        %3035 = vmatprep.subr.mxu0 0.0
        %3036 = vmatpush1.xpose.msra.mxu0 0.0
        %3037 = vmatprep.mubr.f32.mxu0 %v327
        %3038 = vmatmul.mubr.f32.gmra.mrb[0].mxu0 %v326
        %v3039 = vpop.f32.mrb[0].mxu0
        %v3040 = vadd.f32 %v2970, %v3039
        %v3041 = vpop.f32.mrb[0].mxu0
        %3042 = vdwg.mxu0
        %3043 = vmatprep.subr.mxu0 %v425
        %3044 = vmatpush1.xpose.msra.mxu0 %v424
        %3045 = vmatprep.subr.mxu0 0.0
        %3046 = vmatpush1.xpose.msra.mxu0 0.0
        %3047 = vmatprep.subr.mxu0 0.0
        %3048 = vmatpush1.xpose.msra.mxu0 0.0
        %3049 = vmatprep.subr.mxu0 0.0
        %3050 = vmatpush1.xpose.msra.mxu0 0.0
        %3051 = vmatprep.subr.mxu0 0.0
        %3052 = vmatpush1.xpose.msra.mxu0 0.0
        %3053 = vmatprep.subr.mxu0 0.0
        %3054 = vmatpush1.xpose.msra.mxu0 0.0
        %3055 = vmatprep.subr.mxu0 0.0
        %3056 = vmatpush1.xpose.msra.mxu0 0.0
        %3057 = vmatprep.subr.mxu0 0.0
        %3058 = vmatpush1.xpose.msra.mxu0 0.0
        %3059 = vmatprep.subr.mxu0 0.0
        %3060 = vmatpush1.xpose.msra.mxu0 0.0
        %3061 = vmatprep.subr.mxu0 0.0
        %3062 = vmatpush1.xpose.msra.mxu0 0.0
        %3063 = vmatprep.subr.mxu0 0.0
        %3064 = vmatpush1.xpose.msra.mxu0 0.0
        %3065 = vmatprep.subr.mxu0 0.0
        %3066 = vmatpush1.xpose.msra.mxu0 0.0
        %3067 = vmatprep.subr.mxu0 0.0
        %3068 = vmatpush1.xpose.msra.mxu0 0.0
        %3069 = vmatprep.subr.mxu0 0.0
        %3070 = vmatpush1.xpose.msra.mxu0 0.0
        %3071 = vmatprep.subr.mxu0 0.0
        %3072 = vmatpush1.xpose.msra.mxu0 0.0
        %3073 = vmatprep.subr.mxu0 0.0
        %3074 = vmatpush1.xpose.msra.mxu0 0.0
        %3075 = vmatprep.subr.mxu0 0.0
        %3076 = vmatpush1.xpose.msra.mxu0 0.0
        %3077 = vmatprep.subr.mxu0 0.0
        %3078 = vmatpush1.xpose.msra.mxu0 0.0
        %3079 = vmatprep.subr.mxu0 0.0
        %3080 = vmatpush1.xpose.msra.mxu0 0.0
        %3081 = vmatprep.subr.mxu0 0.0
        %3082 = vmatpush1.xpose.msra.mxu0 0.0
        %3083 = vmatprep.subr.mxu0 0.0
        %3084 = vmatpush1.xpose.msra.mxu0 0.0
        %3085 = vmatprep.subr.mxu0 0.0
        %3086 = vmatpush1.xpose.msra.mxu0 0.0
        %3087 = vmatprep.subr.mxu0 0.0
        %3088 = vmatpush1.xpose.msra.mxu0 0.0
        %3089 = vmatprep.subr.mxu0 0.0
        %3090 = vmatpush1.xpose.msra.mxu0 0.0
        %3091 = vmatprep.subr.mxu0 0.0
        %3092 = vmatpush1.xpose.msra.mxu0 0.0
        %3093 = vmatprep.subr.mxu0 0.0
        %3094 = vmatpush1.xpose.msra.mxu0 0.0
        %3095 = vmatprep.subr.mxu0 0.0
        %3096 = vmatpush1.xpose.msra.mxu0 0.0
        %3097 = vmatprep.subr.mxu0 0.0
        %3098 = vmatpush1.xpose.msra.mxu0 0.0
        %3099 = vmatprep.subr.mxu0 0.0
        %3100 = vmatpush1.xpose.msra.mxu0 0.0
        %3101 = vmatprep.subr.mxu0 0.0
        %3102 = vmatpush1.xpose.msra.mxu0 0.0
        %3103 = vmatprep.subr.mxu0 0.0
        %3104 = vmatpush1.xpose.msra.mxu0 0.0
        %3105 = vmatprep.subr.mxu0 0.0
        %3106 = vmatpush1.xpose.msra.mxu0 0.0
        %3107 = vmatprep.mubr.f32.mxu0 %v329
        %3108 = vmatmul.mubr.f32.gmra.mrb[0].mxu0 %v328
        %v3109 = vpop.f32.mrb[0].mxu0
        %v3110 = vadd.f32 %v3040, %v3109
        %v3111 = vpop.f32.mrb[0].mxu0
        %3112 = vdwg.mxu0
        %3113 = vmatprep.subr.mxu0 %v427
        %3114 = vmatpush1.xpose.msra.mxu0 %v426
        %3115 = vmatprep.subr.mxu0 0.0
        %3116 = vmatpush1.xpose.msra.mxu0 0.0
        %3117 = vmatprep.subr.mxu0 0.0
        %3118 = vmatpush1.xpose.msra.mxu0 0.0
        %3119 = vmatprep.subr.mxu0 0.0
        %3120 = vmatpush1.xpose.msra.mxu0 0.0
        %3121 = vmatprep.subr.mxu0 0.0
        %3122 = vmatpush1.xpose.msra.mxu0 0.0
        %3123 = vmatprep.subr.mxu0 0.0
        %3124 = vmatpush1.xpose.msra.mxu0 0.0
        %3125 = vmatprep.subr.mxu0 0.0
        %3126 = vmatpush1.xpose.msra.mxu0 0.0
        %3127 = vmatprep.subr.mxu0 0.0
        %3128 = vmatpush1.xpose.msra.mxu0 0.0
        %3129 = vmatprep.subr.mxu0 0.0
        %3130 = vmatpush1.xpose.msra.mxu0 0.0
        %3131 = vmatprep.subr.mxu0 0.0
        %3132 = vmatpush1.xpose.msra.mxu0 0.0
        %3133 = vmatprep.subr.mxu0 0.0
        %3134 = vmatpush1.xpose.msra.mxu0 0.0
        %3135 = vmatprep.subr.mxu0 0.0
        %3136 = vmatpush1.xpose.msra.mxu0 0.0
        %3137 = vmatprep.subr.mxu0 0.0
        %3138 = vmatpush1.xpose.msra.mxu0 0.0
        %3139 = vmatprep.subr.mxu0 0.0
        %3140 = vmatpush1.xpose.msra.mxu0 0.0
        %3141 = vmatprep.subr.mxu0 0.0
        %3142 = vmatpush1.xpose.msra.mxu0 0.0
        %3143 = vmatprep.subr.mxu0 0.0
        %3144 = vmatpush1.xpose.msra.mxu0 0.0
        %3145 = vmatprep.subr.mxu0 0.0
        %3146 = vmatpush1.xpose.msra.mxu0 0.0
        %3147 = vmatprep.subr.mxu0 0.0
        %3148 = vmatpush1.xpose.msra.mxu0 0.0
        %3149 = vmatprep.subr.mxu0 0.0
        %3150 = vmatpush1.xpose.msra.mxu0 0.0
        %3151 = vmatprep.subr.mxu0 0.0
        %3152 = vmatpush1.xpose.msra.mxu0 0.0
        %3153 = vmatprep.subr.mxu0 0.0
        %3154 = vmatpush1.xpose.msra.mxu0 0.0
        %3155 = vmatprep.subr.mxu0 0.0
        %3156 = vmatpush1.xpose.msra.mxu0 0.0
        %3157 = vmatprep.subr.mxu0 0.0
        %3158 = vmatpush1.xpose.msra.mxu0 0.0
        %3159 = vmatprep.subr.mxu0 0.0
        %3160 = vmatpush1.xpose.msra.mxu0 0.0
        %3161 = vmatprep.subr.mxu0 0.0
        %3162 = vmatpush1.xpose.msra.mxu0 0.0
        %3163 = vmatprep.subr.mxu0 0.0
        %3164 = vmatpush1.xpose.msra.mxu0 0.0
        %3165 = vmatprep.subr.mxu0 0.0
        %3166 = vmatpush1.xpose.msra.mxu0 0.0
        %3167 = vmatprep.subr.mxu0 0.0
        %3168 = vmatpush1.xpose.msra.mxu0 0.0
        %3169 = vmatprep.subr.mxu0 0.0
        %3170 = vmatpush1.xpose.msra.mxu0 0.0
        %3171 = vmatprep.subr.mxu0 0.0
        %3172 = vmatpush1.xpose.msra.mxu0 0.0
        %3173 = vmatprep.subr.mxu0 0.0
        %3174 = vmatpush1.xpose.msra.mxu0 0.0
        %3175 = vmatprep.subr.mxu0 0.0
        %3176 = vmatpush1.xpose.msra.mxu0 0.0
        %3177 = vmatprep.mubr.f32.mxu0 %v331
        %3178 = vmatmul.mubr.f32.gmra.mrb[0].mxu0 %v330
        %v3179 = vpop.f32.mrb[0].mxu0
        %v3180 = vadd.f32 %v3110, %v3179
        %v3181 = vpop.f32.mrb[0].mxu0
        %3182 = vdwg.mxu0
        %3183 = vmatprep.subr.mxu0 %v429
        %3184 = vmatpush1.xpose.msra.mxu0 %v428
        %3185 = vmatprep.subr.mxu0 0.0
        %3186 = vmatpush1.xpose.msra.mxu0 0.0
        %3187 = vmatprep.subr.mxu0 0.0
        %3188 = vmatpush1.xpose.msra.mxu0 0.0
        %3189 = vmatprep.subr.mxu0 0.0
        %3190 = vmatpush1.xpose.msra.mxu0 0.0
        %3191 = vmatprep.subr.mxu0 0.0
        %3192 = vmatpush1.xpose.msra.mxu0 0.0
        %3193 = vmatprep.subr.mxu0 0.0
        %3194 = vmatpush1.xpose.msra.mxu0 0.0
        %3195 = vmatprep.subr.mxu0 0.0
        %3196 = vmatpush1.xpose.msra.mxu0 0.0
        %3197 = vmatprep.subr.mxu0 0.0
        %3198 = vmatpush1.xpose.msra.mxu0 0.0
        %3199 = vmatprep.subr.mxu0 0.0
        %3200 = vmatpush1.xpose.msra.mxu0 0.0
        %3201 = vmatprep.subr.mxu0 0.0
        %3202 = vmatpush1.xpose.msra.mxu0 0.0
        %3203 = vmatprep.subr.mxu0 0.0
        %3204 = vmatpush1.xpose.msra.mxu0 0.0
        %3205 = vmatprep.subr.mxu0 0.0
        %3206 = vmatpush1.xpose.msra.mxu0 0.0
        %3207 = vmatprep.subr.mxu0 0.0
        %3208 = vmatpush1.xpose.msra.mxu0 0.0
        %3209 = vmatprep.subr.mxu0 0.0
        %3210 = vmatpush1.xpose.msra.mxu0 0.0
        %3211 = vmatprep.subr.mxu0 0.0
        %3212 = vmatpush1.xpose.msra.mxu0 0.0
        %3213 = vmatprep.subr.mxu0 0.0
        %3214 = vmatpush1.xpose.msra.mxu0 0.0
        %3215 = vmatprep.subr.mxu0 0.0
        %3216 = vmatpush1.xpose.msra.mxu0 0.0
        %3217 = vmatprep.subr.mxu0 0.0
        %3218 = vmatpush1.xpose.msra.mxu0 0.0
        %3219 = vmatprep.subr.mxu0 0.0
        %3220 = vmatpush1.xpose.msra.mxu0 0.0
        %3221 = vmatprep.subr.mxu0 0.0
        %3222 = vmatpush1.xpose.msra.mxu0 0.0
        %3223 = vmatprep.subr.mxu0 0.0
        %3224 = vmatpush1.xpose.msra.mxu0 0.0
        %3225 = vmatprep.subr.mxu0 0.0
        %3226 = vmatpush1.xpose.msra.mxu0 0.0
        %3227 = vmatprep.subr.mxu0 0.0
        %3228 = vmatpush1.xpose.msra.mxu0 0.0
        %3229 = vmatprep.subr.mxu0 0.0
        %3230 = vmatpush1.xpose.msra.mxu0 0.0
        %3231 = vmatprep.subr.mxu0 0.0
        %3232 = vmatpush1.xpose.msra.mxu0 0.0
        %3233 = vmatprep.subr.mxu0 0.0
        %3234 = vmatpush1.xpose.msra.mxu0 0.0
        %3235 = vmatprep.subr.mxu0 0.0
        %3236 = vmatpush1.xpose.msra.mxu0 0.0
        %3237 = vmatprep.subr.mxu0 0.0
        %3238 = vmatpush1.xpose.msra.mxu0 0.0
        %3239 = vmatprep.subr.mxu0 0.0
        %3240 = vmatpush1.xpose.msra.mxu0 0.0
        %3241 = vmatprep.subr.mxu0 0.0
        %3242 = vmatpush1.xpose.msra.mxu0 0.0
        %3243 = vmatprep.subr.mxu0 0.0
        %3244 = vmatpush1.xpose.msra.mxu0 0.0
        %3245 = vmatprep.subr.mxu0 0.0
        %3246 = vmatpush1.xpose.msra.mxu0 0.0
        %3247 = vmatprep.mubr.f32.mxu0 %v333
        %3248 = vmatmul.mubr.f32.gmra.mrb[0].mxu0 %v332
        %v3249 = vpop.f32.mrb[0].mxu0
        %v3250 = vadd.f32 %v3180, %v3249
        %v3251 = vpop.f32.mrb[0].mxu0
        %3252 = vdwg.mxu0
        %3253 = vmatprep.subr.mxu0 %v431
        %3254 = vmatpush1.xpose.msra.mxu0 %v430
        %3255 = vmatprep.subr.mxu0 0.0
        %3256 = vmatpush1.xpose.msra.mxu0 0.0
        %3257 = vmatprep.subr.mxu0 0.0
        %3258 = vmatpush1.xpose.msra.mxu0 0.0
        %3259 = vmatprep.subr.mxu0 0.0
        %3260 = vmatpush1.xpose.msra.mxu0 0.0
        %3261 = vmatprep.subr.mxu0 0.0
        %3262 = vmatpush1.xpose.msra.mxu0 0.0
        %3263 = vmatprep.subr.mxu0 0.0
        %3264 = vmatpush1.xpose.msra.mxu0 0.0
        %3265 = vmatprep.subr.mxu0 0.0
        %3266 = vmatpush1.xpose.msra.mxu0 0.0
        %3267 = vmatprep.subr.mxu0 0.0
        %3268 = vmatpush1.xpose.msra.mxu0 0.0
        %3269 = vmatprep.subr.mxu0 0.0
        %3270 = vmatpush1.xpose.msra.mxu0 0.0
        %3271 = vmatprep.subr.mxu0 0.0
        %3272 = vmatpush1.xpose.msra.mxu0 0.0
        %3273 = vmatprep.subr.mxu0 0.0
        %3274 = vmatpush1.xpose.msra.mxu0 0.0
        %3275 = vmatprep.subr.mxu0 0.0
        %3276 = vmatpush1.xpose.msra.mxu0 0.0
        %3277 = vmatprep.subr.mxu0 0.0
        %3278 = vmatpush1.xpose.msra.mxu0 0.0
        %3279 = vmatprep.subr.mxu0 0.0
        %3280 = vmatpush1.xpose.msra.mxu0 0.0
        %3281 = vmatprep.subr.mxu0 0.0
        %3282 = vmatpush1.xpose.msra.mxu0 0.0
        %3283 = vmatprep.subr.mxu0 0.0
        %3284 = vmatpush1.xpose.msra.mxu0 0.0
        %3285 = vmatprep.subr.mxu0 0.0
        %3286 = vmatpush1.xpose.msra.mxu0 0.0
        %3287 = vmatprep.subr.mxu0 0.0
        %3288 = vmatpush1.xpose.msra.mxu0 0.0
        %3289 = vmatprep.subr.mxu0 0.0
        %3290 = vmatpush1.xpose.msra.mxu0 0.0
        %3291 = vmatprep.subr.mxu0 0.0
        %3292 = vmatpush1.xpose.msra.mxu0 0.0
        %3293 = vmatprep.subr.mxu0 0.0
        %3294 = vmatpush1.xpose.msra.mxu0 0.0
        %3295 = vmatprep.subr.mxu0 0.0
        %3296 = vmatpush1.xpose.msra.mxu0 0.0
        %3297 = vmatprep.subr.mxu0 0.0
        %3298 = vmatpush1.xpose.msra.mxu0 0.0
        %3299 = vmatprep.subr.mxu0 0.0
        %3300 = vmatpush1.xpose.msra.mxu0 0.0
        %3301 = vmatprep.subr.mxu0 0.0
        %3302 = vmatpush1.xpose.msra.mxu0 0.0
        %3303 = vmatprep.subr.mxu0 0.0
        %3304 = vmatpush1.xpose.msra.mxu0 0.0
        %3305 = vmatprep.subr.mxu0 0.0
        %3306 = vmatpush1.xpose.msra.mxu0 0.0
        %3307 = vmatprep.subr.mxu0 0.0
        %3308 = vmatpush1.xpose.msra.mxu0 0.0
        %3309 = vmatprep.subr.mxu0 0.0
        %3310 = vmatpush1.xpose.msra.mxu0 0.0
        %3311 = vmatprep.subr.mxu0 0.0
        %3312 = vmatpush1.xpose.msra.mxu0 0.0
        %3313 = vmatprep.subr.mxu0 0.0
        %3314 = vmatpush1.xpose.msra.mxu0 0.0
        %3315 = vmatprep.subr.mxu0 0.0
        %3316 = vmatpush1.xpose.msra.mxu0 0.0
        %3317 = vmatprep.mubr.f32.mxu0 %v335
        %3318 = vmatmul.mubr.f32.gmra.mrb[0].mxu0 %v334
        %v3319 = vpop.f32.mrb[0].mxu0
        %v3320 = vadd.f32 %v3250, %v3319
        %v3321 = vpop.f32.mrb[0].mxu0
        %3322 = vdwg.mxu0
        %3323 = vmatprep.subr.mxu0 %v433
        %3324 = vmatpush1.xpose.msra.mxu0 %v432
        %3325 = vmatprep.subr.mxu0 0.0
        %3326 = vmatpush1.xpose.msra.mxu0 0.0
        %3327 = vmatprep.subr.mxu0 0.0
        %3328 = vmatpush1.xpose.msra.mxu0 0.0
        %3329 = vmatprep.subr.mxu0 0.0
        %3330 = vmatpush1.xpose.msra.mxu0 0.0
        %3331 = vmatprep.subr.mxu0 0.0
        %3332 = vmatpush1.xpose.msra.mxu0 0.0
        %3333 = vmatprep.subr.mxu0 0.0
        %3334 = vmatpush1.xpose.msra.mxu0 0.0
        %3335 = vmatprep.subr.mxu0 0.0
        %3336 = vmatpush1.xpose.msra.mxu0 0.0
        %3337 = vmatprep.subr.mxu0 0.0
        %3338 = vmatpush1.xpose.msra.mxu0 0.0
        %3339 = vmatprep.subr.mxu0 0.0
        %3340 = vmatpush1.xpose.msra.mxu0 0.0
        %3341 = vmatprep.subr.mxu0 0.0
        %3342 = vmatpush1.xpose.msra.mxu0 0.0
        %3343 = vmatprep.subr.mxu0 0.0
        %3344 = vmatpush1.xpose.msra.mxu0 0.0
        %3345 = vmatprep.subr.mxu0 0.0
        %3346 = vmatpush1.xpose.msra.mxu0 0.0
        %3347 = vmatprep.subr.mxu0 0.0
        %3348 = vmatpush1.xpose.msra.mxu0 0.0
        %3349 = vmatprep.subr.mxu0 0.0
        %3350 = vmatpush1.xpose.msra.mxu0 0.0
        %3351 = vmatprep.subr.mxu0 0.0
        %3352 = vmatpush1.xpose.msra.mxu0 0.0
        %3353 = vmatprep.subr.mxu0 0.0
        %3354 = vmatpush1.xpose.msra.mxu0 0.0
        %3355 = vmatprep.subr.mxu0 0.0
        %3356 = vmatpush1.xpose.msra.mxu0 0.0
        %3357 = vmatprep.subr.mxu0 0.0
        %3358 = vmatpush1.xpose.msra.mxu0 0.0
        %3359 = vmatprep.subr.mxu0 0.0
        %3360 = vmatpush1.xpose.msra.mxu0 0.0
        %3361 = vmatprep.subr.mxu0 0.0
        %3362 = vmatpush1.xpose.msra.mxu0 0.0
        %3363 = vmatprep.subr.mxu0 0.0
        %3364 = vmatpush1.xpose.msra.mxu0 0.0
        %3365 = vmatprep.subr.mxu0 0.0
        %3366 = vmatpush1.xpose.msra.mxu0 0.0
        %3367 = vmatprep.subr.mxu0 0.0
        %3368 = vmatpush1.xpose.msra.mxu0 0.0
        %3369 = vmatprep.subr.mxu0 0.0
        %3370 = vmatpush1.xpose.msra.mxu0 0.0
        %3371 = vmatprep.subr.mxu0 0.0
        %3372 = vmatpush1.xpose.msra.mxu0 0.0
        %3373 = vmatprep.subr.mxu0 0.0
        %3374 = vmatpush1.xpose.msra.mxu0 0.0
        %3375 = vmatprep.subr.mxu0 0.0
        %3376 = vmatpush1.xpose.msra.mxu0 0.0
        %3377 = vmatprep.subr.mxu0 0.0
        %3378 = vmatpush1.xpose.msra.mxu0 0.0
        %3379 = vmatprep.subr.mxu0 0.0
        %3380 = vmatpush1.xpose.msra.mxu0 0.0
        %3381 = vmatprep.subr.mxu0 0.0
        %3382 = vmatpush1.xpose.msra.mxu0 0.0
        %3383 = vmatprep.subr.mxu0 0.0
        %3384 = vmatpush1.xpose.msra.mxu0 0.0
        %3385 = vmatprep.subr.mxu0 0.0
        %3386 = vmatpush1.xpose.msra.mxu0 0.0
        %3387 = vmatprep.mubr.f32.mxu0 %v337
        %3388 = vmatmul.mubr.f32.gmra.mrb[0].mxu0 %v336
        %v3389 = vpop.f32.mrb[0].mxu0
        %v3390 = vadd.f32 %v3320, %v3389
        %v3391 = vpop.f32.mrb[0].mxu0
        %3392 = vdwg.mxu0
        %3393 = vmatprep.subr.mxu0 %v435
        %3394 = vmatpush1.xpose.msra.mxu0 %v434
        %3395 = vmatprep.subr.mxu0 0.0
        %3396 = vmatpush1.xpose.msra.mxu0 0.0
        %3397 = vmatprep.subr.mxu0 0.0
        %3398 = vmatpush1.xpose.msra.mxu0 0.0
        %3399 = vmatprep.subr.mxu0 0.0
        %3400 = vmatpush1.xpose.msra.mxu0 0.0
        %3401 = vmatprep.subr.mxu0 0.0
        %3402 = vmatpush1.xpose.msra.mxu0 0.0
        %3403 = vmatprep.subr.mxu0 0.0
        %3404 = vmatpush1.xpose.msra.mxu0 0.0
        %3405 = vmatprep.subr.mxu0 0.0
        %3406 = vmatpush1.xpose.msra.mxu0 0.0
        %3407 = vmatprep.subr.mxu0 0.0
        %3408 = vmatpush1.xpose.msra.mxu0 0.0
        %3409 = vmatprep.subr.mxu0 0.0
        %3410 = vmatpush1.xpose.msra.mxu0 0.0
        %3411 = vmatprep.subr.mxu0 0.0
        %3412 = vmatpush1.xpose.msra.mxu0 0.0
        %3413 = vmatprep.subr.mxu0 0.0
        %3414 = vmatpush1.xpose.msra.mxu0 0.0
        %3415 = vmatprep.subr.mxu0 0.0
        %3416 = vmatpush1.xpose.msra.mxu0 0.0
        %3417 = vmatprep.subr.mxu0 0.0
        %3418 = vmatpush1.xpose.msra.mxu0 0.0
        %3419 = vmatprep.subr.mxu0 0.0
        %3420 = vmatpush1.xpose.msra.mxu0 0.0
        %3421 = vmatprep.subr.mxu0 0.0
        %3422 = vmatpush1.xpose.msra.mxu0 0.0
        %3423 = vmatprep.subr.mxu0 0.0
        %3424 = vmatpush1.xpose.msra.mxu0 0.0
        %3425 = vmatprep.subr.mxu0 0.0
        %3426 = vmatpush1.xpose.msra.mxu0 0.0
        %3427 = vmatprep.subr.mxu0 0.0
        %3428 = vmatpush1.xpose.msra.mxu0 0.0
        %3429 = vmatprep.subr.mxu0 0.0
        %3430 = vmatpush1.xpose.msra.mxu0 0.0
        %3431 = vmatprep.subr.mxu0 0.0
        %3432 = vmatpush1.xpose.msra.mxu0 0.0
        %3433 = vmatprep.subr.mxu0 0.0
        %3434 = vmatpush1.xpose.msra.mxu0 0.0
        %3435 = vmatprep.subr.mxu0 0.0
        %3436 = vmatpush1.xpose.msra.mxu0 0.0
        %3437 = vmatprep.subr.mxu0 0.0
        %3438 = vmatpush1.xpose.msra.mxu0 0.0
        %3439 = vmatprep.subr.mxu0 0.0
        %3440 = vmatpush1.xpose.msra.mxu0 0.0
        %3441 = vmatprep.subr.mxu0 0.0
        %3442 = vmatpush1.xpose.msra.mxu0 0.0
        %3443 = vmatprep.subr.mxu0 0.0
        %3444 = vmatpush1.xpose.msra.mxu0 0.0
        %3445 = vmatprep.subr.mxu0 0.0
        %3446 = vmatpush1.xpose.msra.mxu0 0.0
        %3447 = vmatprep.subr.mxu0 0.0
        %3448 = vmatpush1.xpose.msra.mxu0 0.0
        %3449 = vmatprep.subr.mxu0 0.0
        %3450 = vmatpush1.xpose.msra.mxu0 0.0
        %3451 = vmatprep.subr.mxu0 0.0
        %3452 = vmatpush1.xpose.msra.mxu0 0.0
        %3453 = vmatprep.subr.mxu0 0.0
        %3454 = vmatpush1.xpose.msra.mxu0 0.0
        %3455 = vmatprep.subr.mxu0 0.0
        %3456 = vmatpush1.xpose.msra.mxu0 0.0
        %3457 = vmatprep.mubr.f32.mxu0 %v339
        %3458 = vmatmul.mubr.f32.gmra.mrb[0].mxu0 %v338
        %v3459 = vpop.f32.mrb[0].mxu0
        %v3460 = vadd.f32 %v3390, %v3459
        %v3461 = vpop.f32.mrb[0].mxu0
        %3462 = vdwg.mxu0
        %3463 = vmatprep.subr.mxu0 %v437
        %3464 = vmatpush1.xpose.msra.mxu0 %v436
        %3465 = vmatprep.subr.mxu0 0.0
        %3466 = vmatpush1.xpose.msra.mxu0 0.0
        %3467 = vmatprep.subr.mxu0 0.0
        %3468 = vmatpush1.xpose.msra.mxu0 0.0
        %3469 = vmatprep.subr.mxu0 0.0
        %3470 = vmatpush1.xpose.msra.mxu0 0.0
        %3471 = vmatprep.subr.mxu0 0.0
        %3472 = vmatpush1.xpose.msra.mxu0 0.0
        %3473 = vmatprep.subr.mxu0 0.0
        %3474 = vmatpush1.xpose.msra.mxu0 0.0
        %3475 = vmatprep.subr.mxu0 0.0
        %3476 = vmatpush1.xpose.msra.mxu0 0.0
        %3477 = vmatprep.subr.mxu0 0.0
        %3478 = vmatpush1.xpose.msra.mxu0 0.0
        %3479 = vmatprep.subr.mxu0 0.0
        %3480 = vmatpush1.xpose.msra.mxu0 0.0
        %3481 = vmatprep.subr.mxu0 0.0
        %3482 = vmatpush1.xpose.msra.mxu0 0.0
        %3483 = vmatprep.subr.mxu0 0.0
        %3484 = vmatpush1.xpose.msra.mxu0 0.0
        %3485 = vmatprep.subr.mxu0 0.0
        %3486 = vmatpush1.xpose.msra.mxu0 0.0
        %3487 = vmatprep.subr.mxu0 0.0
        %3488 = vmatpush1.xpose.msra.mxu0 0.0
        %3489 = vmatprep.subr.mxu0 0.0
        %3490 = vmatpush1.xpose.msra.mxu0 0.0
        %3491 = vmatprep.subr.mxu0 0.0
        %3492 = vmatpush1.xpose.msra.mxu0 0.0
        %3493 = vmatprep.subr.mxu0 0.0
        %3494 = vmatpush1.xpose.msra.mxu0 0.0
        %3495 = vmatprep.subr.mxu0 0.0
        %3496 = vmatpush1.xpose.msra.mxu0 0.0
        %3497 = vmatprep.subr.mxu0 0.0
        %3498 = vmatpush1.xpose.msra.mxu0 0.0
        %3499 = vmatprep.subr.mxu0 0.0
        %3500 = vmatpush1.xpose.msra.mxu0 0.0
        %3501 = vmatprep.subr.mxu0 0.0
        %3502 = vmatpush1.xpose.msra.mxu0 0.0
        %3503 = vmatprep.subr.mxu0 0.0
        %3504 = vmatpush1.xpose.msra.mxu0 0.0
        %3505 = vmatprep.subr.mxu0 0.0
        %3506 = vmatpush1.xpose.msra.mxu0 0.0
        %3507 = vmatprep.subr.mxu0 0.0
        %3508 = vmatpush1.xpose.msra.mxu0 0.0
        %3509 = vmatprep.subr.mxu0 0.0
        %3510 = vmatpush1.xpose.msra.mxu0 0.0
        %3511 = vmatprep.subr.mxu0 0.0
        %3512 = vmatpush1.xpose.msra.mxu0 0.0
        %3513 = vmatprep.subr.mxu0 0.0
        %3514 = vmatpush1.xpose.msra.mxu0 0.0
        %3515 = vmatprep.subr.mxu0 0.0
        %3516 = vmatpush1.xpose.msra.mxu0 0.0
        %3517 = vmatprep.subr.mxu0 0.0
        %3518 = vmatpush1.xpose.msra.mxu0 0.0
        %3519 = vmatprep.subr.mxu0 0.0
        %3520 = vmatpush1.xpose.msra.mxu0 0.0
        %3521 = vmatprep.subr.mxu0 0.0
        %3522 = vmatpush1.xpose.msra.mxu0 0.0
        %3523 = vmatprep.subr.mxu0 0.0
        %3524 = vmatpush1.xpose.msra.mxu0 0.0
        %3525 = vmatprep.subr.mxu0 0.0
        %3526 = vmatpush1.xpose.msra.mxu0 0.0
        %3527 = vmatprep.mubr.f32.mxu0 %v341
        %3528 = vmatmul.mubr.f32.gmra.mrb[0].mxu0 %v340
        %v3529 = vpop.f32.mrb[0].mxu0
        %v3530 = vadd.f32 %v3460, %v3529
        %v3531 = vpop.f32.mrb[0].mxu0
        %3532 = vdwg.mxu0
        %3533 = vmatprep.subr.mxu0 %v439
        %3534 = vmatpush1.xpose.msra.mxu0 %v438
        %3535 = vmatprep.subr.mxu0 0.0
        %3536 = vmatpush1.xpose.msra.mxu0 0.0
        %3537 = vmatprep.subr.mxu0 0.0
        %3538 = vmatpush1.xpose.msra.mxu0 0.0
        %3539 = vmatprep.subr.mxu0 0.0
        %3540 = vmatpush1.xpose.msra.mxu0 0.0
        %3541 = vmatprep.subr.mxu0 0.0
        %3542 = vmatpush1.xpose.msra.mxu0 0.0
        %3543 = vmatprep.subr.mxu0 0.0
        %3544 = vmatpush1.xpose.msra.mxu0 0.0
        %3545 = vmatprep.subr.mxu0 0.0
        %3546 = vmatpush1.xpose.msra.mxu0 0.0
        %3547 = vmatprep.subr.mxu0 0.0
        %3548 = vmatpush1.xpose.msra.mxu0 0.0
        %3549 = vmatprep.subr.mxu0 0.0
        %3550 = vmatpush1.xpose.msra.mxu0 0.0
        %3551 = vmatprep.subr.mxu0 0.0
        %3552 = vmatpush1.xpose.msra.mxu0 0.0
        %3553 = vmatprep.subr.mxu0 0.0
        %3554 = vmatpush1.xpose.msra.mxu0 0.0
        %3555 = vmatprep.subr.mxu0 0.0
        %3556 = vmatpush1.xpose.msra.mxu0 0.0
        %3557 = vmatprep.subr.mxu0 0.0
        %3558 = vmatpush1.xpose.msra.mxu0 0.0
        %3559 = vmatprep.subr.mxu0 0.0
        %3560 = vmatpush1.xpose.msra.mxu0 0.0
        %3561 = vmatprep.subr.mxu0 0.0
        %3562 = vmatpush1.xpose.msra.mxu0 0.0
        %3563 = vmatprep.subr.mxu0 0.0
        %3564 = vmatpush1.xpose.msra.mxu0 0.0
        %3565 = vmatprep.subr.mxu0 0.0
        %3566 = vmatpush1.xpose.msra.mxu0 0.0
        %3567 = vmatprep.subr.mxu0 0.0
        %3568 = vmatpush1.xpose.msra.mxu0 0.0
        %3569 = vmatprep.subr.mxu0 0.0
        %3570 = vmatpush1.xpose.msra.mxu0 0.0
        %3571 = vmatprep.subr.mxu0 0.0
        %3572 = vmatpush1.xpose.msra.mxu0 0.0
        %3573 = vmatprep.subr.mxu0 0.0
        %3574 = vmatpush1.xpose.msra.mxu0 0.0
        %3575 = vmatprep.subr.mxu0 0.0
        %3576 = vmatpush1.xpose.msra.mxu0 0.0
        %3577 = vmatprep.subr.mxu0 0.0
        %3578 = vmatpush1.xpose.msra.mxu0 0.0
        %3579 = vmatprep.subr.mxu0 0.0
        %3580 = vmatpush1.xpose.msra.mxu0 0.0
        %3581 = vmatprep.subr.mxu0 0.0
        %3582 = vmatpush1.xpose.msra.mxu0 0.0
        %3583 = vmatprep.subr.mxu0 0.0
        %3584 = vmatpush1.xpose.msra.mxu0 0.0
        %3585 = vmatprep.subr.mxu0 0.0
        %3586 = vmatpush1.xpose.msra.mxu0 0.0
        %3587 = vmatprep.subr.mxu0 0.0
        %3588 = vmatpush1.xpose.msra.mxu0 0.0
        %3589 = vmatprep.subr.mxu0 0.0
        %3590 = vmatpush1.xpose.msra.mxu0 0.0
        %3591 = vmatprep.subr.mxu0 0.0
        %3592 = vmatpush1.xpose.msra.mxu0 0.0
        %3593 = vmatprep.subr.mxu0 0.0
        %3594 = vmatpush1.xpose.msra.mxu0 0.0
        %3595 = vmatprep.subr.mxu0 0.0
        %3596 = vmatpush1.xpose.msra.mxu0 0.0
        %3597 = vmatprep.mubr.f32.mxu0 %v343
        %3598 = vmatmul.mubr.f32.gmra.mrb[0].mxu0 %v342
        %v3599 = vpop.f32.mrb[0].mxu0
        %v3600 = vadd.f32 %v3530, %v3599
        %v3601 = vpop.f32.mrb[0].mxu0
        %3602 = vdwg.mxu0
        %3603 = vmatprep.subr.mxu0 %v441
        %3604 = vmatpush1.xpose.msra.mxu0 %v440
        %3605 = vmatprep.subr.mxu0 0.0
        %3606 = vmatpush1.xpose.msra.mxu0 0.0
        %3607 = vmatprep.subr.mxu0 0.0
        %3608 = vmatpush1.xpose.msra.mxu0 0.0
        %3609 = vmatprep.subr.mxu0 0.0
        %3610 = vmatpush1.xpose.msra.mxu0 0.0
        %3611 = vmatprep.subr.mxu0 0.0
        %3612 = vmatpush1.xpose.msra.mxu0 0.0
        %3613 = vmatprep.subr.mxu0 0.0
        %3614 = vmatpush1.xpose.msra.mxu0 0.0
        %3615 = vmatprep.subr.mxu0 0.0
        %3616 = vmatpush1.xpose.msra.mxu0 0.0
        %3617 = vmatprep.subr.mxu0 0.0
        %3618 = vmatpush1.xpose.msra.mxu0 0.0
        %3619 = vmatprep.subr.mxu0 0.0
        %3620 = vmatpush1.xpose.msra.mxu0 0.0
        %3621 = vmatprep.subr.mxu0 0.0
        %3622 = vmatpush1.xpose.msra.mxu0 0.0
        %3623 = vmatprep.subr.mxu0 0.0
        %3624 = vmatpush1.xpose.msra.mxu0 0.0
        %3625 = vmatprep.subr.mxu0 0.0
        %3626 = vmatpush1.xpose.msra.mxu0 0.0
        %3627 = vmatprep.subr.mxu0 0.0
        %3628 = vmatpush1.xpose.msra.mxu0 0.0
        %3629 = vmatprep.subr.mxu0 0.0
        %3630 = vmatpush1.xpose.msra.mxu0 0.0
        %3631 = vmatprep.subr.mxu0 0.0
        %3632 = vmatpush1.xpose.msra.mxu0 0.0
        %3633 = vmatprep.subr.mxu0 0.0
        %3634 = vmatpush1.xpose.msra.mxu0 0.0
        %3635 = vmatprep.subr.mxu0 0.0
        %3636 = vmatpush1.xpose.msra.mxu0 0.0
        %3637 = vmatprep.subr.mxu0 0.0
        %3638 = vmatpush1.xpose.msra.mxu0 0.0
        %3639 = vmatprep.subr.mxu0 0.0
        %3640 = vmatpush1.xpose.msra.mxu0 0.0
        %3641 = vmatprep.subr.mxu0 0.0
        %3642 = vmatpush1.xpose.msra.mxu0 0.0
        %3643 = vmatprep.subr.mxu0 0.0
        %3644 = vmatpush1.xpose.msra.mxu0 0.0
        %3645 = vmatprep.subr.mxu0 0.0
        %3646 = vmatpush1.xpose.msra.mxu0 0.0
        %3647 = vmatprep.subr.mxu0 0.0
        %3648 = vmatpush1.xpose.msra.mxu0 0.0
        %3649 = vmatprep.subr.mxu0 0.0
        %3650 = vmatpush1.xpose.msra.mxu0 0.0
        %3651 = vmatprep.subr.mxu0 0.0
        %3652 = vmatpush1.xpose.msra.mxu0 0.0
        %3653 = vmatprep.subr.mxu0 0.0
        %3654 = vmatpush1.xpose.msra.mxu0 0.0
        %3655 = vmatprep.subr.mxu0 0.0
        %3656 = vmatpush1.xpose.msra.mxu0 0.0
        %3657 = vmatprep.subr.mxu0 0.0
        %3658 = vmatpush1.xpose.msra.mxu0 0.0
        %3659 = vmatprep.subr.mxu0 0.0
        %3660 = vmatpush1.xpose.msra.mxu0 0.0
        %3661 = vmatprep.subr.mxu0 0.0
        %3662 = vmatpush1.xpose.msra.mxu0 0.0
        %3663 = vmatprep.subr.mxu0 0.0
        %3664 = vmatpush1.xpose.msra.mxu0 0.0
        %3665 = vmatprep.subr.mxu0 0.0
        %3666 = vmatpush1.xpose.msra.mxu0 0.0
        %3667 = vmatprep.mubr.f32.mxu0 %v345
        %3668 = vmatmul.mubr.f32.gmra.mrb[0].mxu0 %v344
        %v3669 = vpop.f32.mrb[0].mxu0
        %v3670 = vadd.f32 %v3600, %v3669
        %v3671 = vpop.f32.mrb[0].mxu0
        %3672 = vdwg.mxu0
        %3673 = vmatprep.subr.mxu0 %v443
        %3674 = vmatpush1.xpose.msra.mxu0 %v442
        %3675 = vmatprep.subr.mxu0 0.0
        %3676 = vmatpush1.xpose.msra.mxu0 0.0
        %3677 = vmatprep.subr.mxu0 0.0
        %3678 = vmatpush1.xpose.msra.mxu0 0.0
        %3679 = vmatprep.subr.mxu0 0.0
        %3680 = vmatpush1.xpose.msra.mxu0 0.0
        %3681 = vmatprep.subr.mxu0 0.0
        %3682 = vmatpush1.xpose.msra.mxu0 0.0
        %3683 = vmatprep.subr.mxu0 0.0
        %3684 = vmatpush1.xpose.msra.mxu0 0.0
        %3685 = vmatprep.subr.mxu0 0.0
        %3686 = vmatpush1.xpose.msra.mxu0 0.0
        %3687 = vmatprep.subr.mxu0 0.0
        %3688 = vmatpush1.xpose.msra.mxu0 0.0
        %3689 = vmatprep.subr.mxu0 0.0
        %3690 = vmatpush1.xpose.msra.mxu0 0.0
        %3691 = vmatprep.subr.mxu0 0.0
        %3692 = vmatpush1.xpose.msra.mxu0 0.0
        %3693 = vmatprep.subr.mxu0 0.0
        %3694 = vmatpush1.xpose.msra.mxu0 0.0
        %3695 = vmatprep.subr.mxu0 0.0
        %3696 = vmatpush1.xpose.msra.mxu0 0.0
        %3697 = vmatprep.subr.mxu0 0.0
        %3698 = vmatpush1.xpose.msra.mxu0 0.0
        %3699 = vmatprep.subr.mxu0 0.0
        %3700 = vmatpush1.xpose.msra.mxu0 0.0
        %3701 = vmatprep.subr.mxu0 0.0
        %3702 = vmatpush1.xpose.msra.mxu0 0.0
        %3703 = vmatprep.subr.mxu0 0.0
        %3704 = vmatpush1.xpose.msra.mxu0 0.0
        %3705 = vmatprep.subr.mxu0 0.0
        %3706 = vmatpush1.xpose.msra.mxu0 0.0
        %3707 = vmatprep.subr.mxu0 0.0
        %3708 = vmatpush1.xpose.msra.mxu0 0.0
        %3709 = vmatprep.subr.mxu0 0.0
        %3710 = vmatpush1.xpose.msra.mxu0 0.0
        %3711 = vmatprep.subr.mxu0 0.0
        %3712 = vmatpush1.xpose.msra.mxu0 0.0
        %3713 = vmatprep.subr.mxu0 0.0
        %3714 = vmatpush1.xpose.msra.mxu0 0.0
        %3715 = vmatprep.subr.mxu0 0.0
        %3716 = vmatpush1.xpose.msra.mxu0 0.0
        %3717 = vmatprep.subr.mxu0 0.0
        %3718 = vmatpush1.xpose.msra.mxu0 0.0
        %3719 = vmatprep.subr.mxu0 0.0
        %3720 = vmatpush1.xpose.msra.mxu0 0.0
        %3721 = vmatprep.subr.mxu0 0.0
        %3722 = vmatpush1.xpose.msra.mxu0 0.0
        %3723 = vmatprep.subr.mxu0 0.0
        %3724 = vmatpush1.xpose.msra.mxu0 0.0
        %3725 = vmatprep.subr.mxu0 0.0
        %3726 = vmatpush1.xpose.msra.mxu0 0.0
        %3727 = vmatprep.subr.mxu0 0.0
        %3728 = vmatpush1.xpose.msra.mxu0 0.0
        %3729 = vmatprep.subr.mxu0 0.0
        %3730 = vmatpush1.xpose.msra.mxu0 0.0
        %3731 = vmatprep.subr.mxu0 0.0
        %3732 = vmatpush1.xpose.msra.mxu0 0.0
        %3733 = vmatprep.subr.mxu0 0.0
        %3734 = vmatpush1.xpose.msra.mxu0 0.0
        %3735 = vmatprep.subr.mxu0 0.0
        %3736 = vmatpush1.xpose.msra.mxu0 0.0
        %3737 = vmatprep.mubr.f32.mxu0 %v347
        %3738 = vmatmul.mubr.f32.gmra.mrb[0].mxu0 %v346
        %v3739 = vpop.f32.mrb[0].mxu0
        %v3740 = vadd.f32 %v3670, %v3739
        %v3741 = vpop.f32.mrb[0].mxu0
        %3742 = vdwg.mxu0
        %3743 = vmatprep.subr.mxu0 %v445
        %3744 = vmatpush1.xpose.msra.mxu0 %v444
        %3745 = vmatprep.subr.mxu0 0.0
        %3746 = vmatpush1.xpose.msra.mxu0 0.0
        %3747 = vmatprep.subr.mxu0 0.0
        %3748 = vmatpush1.xpose.msra.mxu0 0.0
        %3749 = vmatprep.subr.mxu0 0.0
        %3750 = vmatpush1.xpose.msra.mxu0 0.0
        %3751 = vmatprep.subr.mxu0 0.0
        %3752 = vmatpush1.xpose.msra.mxu0 0.0
        %3753 = vmatprep.subr.mxu0 0.0
        %3754 = vmatpush1.xpose.msra.mxu0 0.0
        %3755 = vmatprep.subr.mxu0 0.0
        %3756 = vmatpush1.xpose.msra.mxu0 0.0
        %3757 = vmatprep.subr.mxu0 0.0
        %3758 = vmatpush1.xpose.msra.mxu0 0.0
        %3759 = vmatprep.subr.mxu0 0.0
        %3760 = vmatpush1.xpose.msra.mxu0 0.0
        %3761 = vmatprep.subr.mxu0 0.0
        %3762 = vmatpush1.xpose.msra.mxu0 0.0
        %3763 = vmatprep.subr.mxu0 0.0
        %3764 = vmatpush1.xpose.msra.mxu0 0.0
        %3765 = vmatprep.subr.mxu0 0.0
        %3766 = vmatpush1.xpose.msra.mxu0 0.0
        %3767 = vmatprep.subr.mxu0 0.0
        %3768 = vmatpush1.xpose.msra.mxu0 0.0
        %3769 = vmatprep.subr.mxu0 0.0
        %3770 = vmatpush1.xpose.msra.mxu0 0.0
        %3771 = vmatprep.subr.mxu0 0.0
        %3772 = vmatpush1.xpose.msra.mxu0 0.0
        %3773 = vmatprep.subr.mxu0 0.0
        %3774 = vmatpush1.xpose.msra.mxu0 0.0
        %3775 = vmatprep.subr.mxu0 0.0
        %3776 = vmatpush1.xpose.msra.mxu0 0.0
        %3777 = vmatprep.subr.mxu0 0.0
        %3778 = vmatpush1.xpose.msra.mxu0 0.0
        %3779 = vmatprep.subr.mxu0 0.0
        %3780 = vmatpush1.xpose.msra.mxu0 0.0
        %3781 = vmatprep.subr.mxu0 0.0
        %3782 = vmatpush1.xpose.msra.mxu0 0.0
        %3783 = vmatprep.subr.mxu0 0.0
        %3784 = vmatpush1.xpose.msra.mxu0 0.0
        %3785 = vmatprep.subr.mxu0 0.0
        %3786 = vmatpush1.xpose.msra.mxu0 0.0
        %3787 = vmatprep.subr.mxu0 0.0
        %3788 = vmatpush1.xpose.msra.mxu0 0.0
        %3789 = vmatprep.subr.mxu0 0.0
        %3790 = vmatpush1.xpose.msra.mxu0 0.0
        %3791 = vmatprep.subr.mxu0 0.0
        %3792 = vmatpush1.xpose.msra.mxu0 0.0
        %3793 = vmatprep.subr.mxu0 0.0
        %3794 = vmatpush1.xpose.msra.mxu0 0.0
        %3795 = vmatprep.subr.mxu0 0.0
        %3796 = vmatpush1.xpose.msra.mxu0 0.0
        %3797 = vmatprep.subr.mxu0 0.0
        %3798 = vmatpush1.xpose.msra.mxu0 0.0
        %3799 = vmatprep.subr.mxu0 0.0
        %3800 = vmatpush1.xpose.msra.mxu0 0.0
        %3801 = vmatprep.subr.mxu0 0.0
        %3802 = vmatpush1.xpose.msra.mxu0 0.0
        %3803 = vmatprep.subr.mxu0 0.0
        %3804 = vmatpush1.xpose.msra.mxu0 0.0
        %3805 = vmatprep.subr.mxu0 0.0
        %3806 = vmatpush1.xpose.msra.mxu0 0.0
        %3807 = vmatprep.mubr.f32.mxu0 %v349
        %3808 = vmatmul.mubr.f32.gmra.mrb[0].mxu0 %v348
        %v3809 = vpop.f32.mrb[0].mxu0
        %v3810 = vadd.f32 %v3740, %v3809
        %v3811 = vpop.f32.mrb[0].mxu0
        %3812 = vdwg.mxu0
        %v3813 = vmax.f32 %v3810, 0.0
        %v3814 = vld [vmem:[%s3] sm:$0x1f]
        %v3815 = vld [vmem:[%s4] sm:$0x1]
        %v3817 = vlaneseq
        %v3818 = vshrl.u32 %v3817, 7
        %v3819 = vsub.s32 0, %v3818
        %v3820 = vrot.slane %v3815, %v3819
        %vm3822 = vcmask 39936
        %v3824 = vsel %vm3822, %v3813, 0
        %vm3826 = vcmask 1044480
        %v3828 = vsel %vm3826, %v3814, 0
        %3830 = vmatprep.subr.mxu0 0.0
        %3831 = vmatpush1.msra.mxu0 %v3828
        %3832 = vmatprep.subr.mxu0 0.0
        %3833 = vmatpush1.msra.mxu0 0.0
        %3834 = vmatprep.subr.mxu0 0.0
        %3835 = vmatpush1.msra.mxu0 0.0
        %3836 = vmatprep.subr.mxu0 0.0
        %3837 = vmatpush1.msra.mxu0 0.0
        %3838 = vmatprep.subr.mxu0 0.0
        %3839 = vmatpush1.msra.mxu0 0.0
        %3840 = vmatprep.subr.mxu0 0.0
        %3841 = vmatpush1.msra.mxu0 0.0
        %3842 = vmatprep.subr.mxu0 0.0
        %3843 = vmatpush1.msra.mxu0 0.0
        %3844 = vmatprep.subr.mxu0 0.0
        %3845 = vmatpush1.msra.mxu0 0.0
        %3846 = vmatprep.subr.mxu0 0.0
        %3847 = vmatpush1.msra.mxu0 0.0
        %3848 = vmatprep.subr.mxu0 0.0
        %3849 = vmatpush1.msra.mxu0 0.0
        %3850 = vmatprep.subr.mxu0 0.0
        %3851 = vmatpush1.msra.mxu0 0.0
        %3852 = vmatprep.subr.mxu0 0.0
        %3853 = vmatpush1.msra.mxu0 0.0
        %3854 = vmatprep.subr.mxu0 0.0
        %3855 = vmatpush1.msra.mxu0 0.0
        %3856 = vmatprep.subr.mxu0 0.0
        %3857 = vmatpush1.msra.mxu0 0.0
        %3858 = vmatprep.subr.mxu0 0.0
        %3859 = vmatpush1.msra.mxu0 0.0
        %3860 = vmatprep.subr.mxu0 0.0
        %3861 = vmatpush1.msra.mxu0 0.0
        %3862 = vmatprep.subr.mxu0 0.0
        %3863 = vmatpush1.msra.mxu0 0.0
        %3864 = vmatprep.subr.mxu0 0.0
        %3865 = vmatpush1.msra.mxu0 0.0
        %3866 = vmatprep.subr.mxu0 0.0
        %3867 = vmatpush1.msra.mxu0 0.0
        %3868 = vmatprep.subr.mxu0 0.0
        %3869 = vmatpush1.msra.mxu0 0.0
        %3870 = vmatprep.subr.mxu0 0.0
        %3871 = vmatpush1.msra.mxu0 0.0
        %3872 = vmatprep.subr.mxu0 0.0
        %3873 = vmatpush1.msra.mxu0 0.0
        %3874 = vmatprep.subr.mxu0 0.0
        %3875 = vmatpush1.msra.mxu0 0.0
        %3876 = vmatprep.subr.mxu0 0.0
        %3877 = vmatpush1.msra.mxu0 0.0
        %3878 = vmatprep.subr.mxu0 0.0
        %3879 = vmatpush1.msra.mxu0 0.0
        %3880 = vmatprep.subr.mxu0 0.0
        %3881 = vmatpush1.msra.mxu0 0.0
        %3882 = vmatprep.subr.mxu0 0.0
        %3883 = vmatpush1.msra.mxu0 0.0
        %3884 = vmatprep.subr.mxu0 0.0
        %3885 = vmatpush1.msra.mxu0 0.0
        %3886 = vmatprep.subr.mxu0 0.0
        %3887 = vmatpush1.msra.mxu0 0.0
        %3888 = vmatprep.subr.mxu0 0.0
        %3889 = vmatpush1.msra.mxu0 0.0
        %3890 = vmatprep.subr.mxu0 0.0
        %3891 = vmatpush1.msra.mxu0 0.0
        %3892 = vmatprep.subr.mxu0 0.0
        %3893 = vmatpush1.msra.mxu0 0.0
        %3894 = vmatprep.mubr.f32.mxu0 0.0
        %3895 = vmatmul.mubr.f32.gmra.mrb[0].mxu0 %v3824
        %v3896 = vpop.f32.mrb[0].mxu0
        %v3897 = vadd.f32 %v3820, %v3896
        %v3898 = vpop.f32.mrb[0].mxu0
        %3899 = vdwg.mxu0
        %3900 = vst [vmem:[%s253] sm:$0xff] %v3897
        %p3901 = scmp.lt.s32.totalorder %s20, 1
        %s3902 = scalar_select %p3901, %s20, 1
        %s3903 = smul.addr %s3902, 8
        %s3904 = scalar_lea.vmem %s5, %s3903
        // Predicated region
        $region49: #{mlp_forward.1} parent=39 // pred_check
          %p3905 = pneg %p148
        $region50: #{mlp_forward.1} parent=39 // pred_check_branch
          %3907 = sbr.rel (%p3905) target = $region52
        $region51: #{mlp_forward.1} parent=39 // pred_region
          _
        $region52: #{mlp_forward.1} parent=39 // pred_fallthru
          _
      $region40: #{mlp_forward.1} parent=5 // pred_fallthru
        _
      %p3908 = scmp.le.s32.totalorder 2, %s15
      // Predicated region
      $region53: #{mlp_forward.1} parent=5 // pred_check
        %p3909 = pneg %p3908
      $region54: #{mlp_forward.1} parent=5 // pred_check_branch
        %3911 = sbr.rel (%p3909) target = $region56
      $region55: #{mlp_forward.1} parent=5 // pred_region
        %s3912 = ssub.s32 %s15, 2
        // Predicated region
        $region57: #{mlp_forward.1} parent=55 // pred_check
          %p3913 = pneg %p154
        $region58: #{mlp_forward.1} parent=55 // pred_check_branch
          %3915 = sbr.rel (%p3913) target = $region60
        $region59: #{mlp_forward.1} parent=55 // pred_region
          %p3916 = scmp.lt.s32.totalorder %s21, 1
          %s3917 = scalar_select %p3916, %s21, 1
          %s3918 = smul.addr %s3917, 8
          %s3919 = scalar_lea.vmem %s5, %s3918
        $region60: #{mlp_forward.1} parent=55 // pred_fallthru
          _
      $region56: #{mlp_forward.1} parent=5 // pred_fallthru
        _
    $region6: #{mlp_forward.1} parent=1 // loop_footer
      %s19 = sadd.s32 1, %s15
    $region7: #{mlp_forward.1} parent=1 // loop_footer_branch
      %14 = sbr.rel target = $region3
    $region8: #{mlp_forward.1} parent=1 // loop_exit
      _
    %3920 = vsyncpa [#allocation3], 1
    %s3921 = scalar_lea.sflag [#allocation3], 1
    %3922 = vsyncpa %s3921, 1
    %3923 = vsyncpa [#allocation5], 1

</llo_original>
